<compile_context>
chip_gen: v6e
topology: v6e:2x2x1
jax: 0.10.0
libtpu: 0.0.40
codegen_flags: <defaults>
</compile_context>

<pallas_src>
import functools

import jax
import jax.numpy as jnp
import numpy as np
from jax.experimental import pallas as pl
from jax.experimental.pallas import tpu as pltpu


def _round_up(x, m):
    return (x + m - 1) // m * m


def _pick_tk(K, target=2048):
    """Largest multiple of 128 that divides K and is <= target (K-tile size)."""
    tk = K
    for t in range(128, min(K, target) + 1, 128):
        if K % t == 0:
            tk = t
    return tk


# --------------------------- conv1: matmul + bias + ReLU ---------------------------
def _conv1_kernel(a_ref, w_ref, b_ref, o_ref):
    # a_ref: (1, HW, K) bf16 ; w_ref: (K, C) bf16 ; b_ref: (1, C) f32
    # o_ref: (1, HW, C) bf16
    y = jnp.dot(a_ref[0], w_ref[...], preferred_element_type=jnp.float32)
    y = y + b_ref[...]
    o_ref[0] = jnp.maximum(y, 0.0).astype(o_ref.dtype)


def conv1_relu_pallas(a, w, b):
    """a: (N, HW, K) bf16, w: (K, C) bf16, b: (1, C) f32 -> (N, HW, C) bf16."""
    N, HW, K = a.shape
    C = w.shape[1]
    return pl.pallas_call(
        _conv1_kernel,
        out_shape=jax.ShapeDtypeStruct((N, HW, C), jnp.bfloat16),
        grid_spec=pltpu.PrefetchScalarGridSpec(
            num_scalar_prefetch=0,
            grid=(N,),
            in_specs=[
                pl.BlockSpec((1, HW, K), lambda n: (n, 0, 0)),
                pl.BlockSpec((K, C), lambda n: (0, 0)),
                pl.BlockSpec((1, C), lambda n: (0, 0)),
            ],
            out_specs=pl.BlockSpec((1, HW, C), lambda n: (n, 0, 0)),
        ),
        compiler_params=pltpu.CompilerParams(
            dimension_semantics=("parallel",),
        ),
    )(a, w, b)


# ------------------- conv2: matmul + bias + fused 2x2 max-pool ---------------------
def _conv2_pool_kernel(a_ref, w_ref, b_ref, o_ref, m_ref):
    # a_ref: (1, 784, K) bf16, rows ordered (h_i, h_o, w_o, w_i)
    # w_ref: (K, 64) bf16 ; b_ref: (1, 64) f32
    # m_ref: (392, 64) f32 VMEM scratch
    # o_ref: (1, 196, 64) bf16, rows ordered (h_o, w_o)
    hw = a_ref.shape[1]            # 784
    half = hw // 2                 # 392
    quarter = hw // 4              # 196
    y = jnp.dot(a_ref[0], w_ref[...], preferred_element_type=jnp.float32)
    y = y + b_ref[...]
    # pool over h_i: the two contiguous (sublane-aligned) halves of the rows
    m_ref[...] = jnp.maximum(y[:half], y[half:])
    # pool over w_i: adjacent rows -> stride-2 loads from the VMEM scratch
    o_ref[0] = jnp.maximum(
        m_ref[pl.ds(0, quarter, stride=2), :],
        m_ref[pl.ds(1, quarter, stride=2), :],
    ).astype(o_ref.dtype)


def conv2_pool_pallas(a, w, b):
    """a: (N, 784, K) bf16 (rows ordered (h_i, h_o, w_o, w_i)), w: (K, 64) bf16,
    b: (1, 64) f32 -> pooled (N, 196, 64) bf16, rows ordered (h_o, w_o)."""
    N, HW, K = a.shape
    C = w.shape[1]
    return pl.pallas_call(
        _conv2_pool_kernel,
        out_shape=jax.ShapeDtypeStruct((N, HW // 4, C), jnp.bfloat16),
        grid_spec=pltpu.PrefetchScalarGridSpec(
            num_scalar_prefetch=0,
            grid=(N,),
            in_specs=[
                pl.BlockSpec((1, HW, K), lambda n: (n, 0, 0)),
                pl.BlockSpec((K, C), lambda n: (0, 0)),
                pl.BlockSpec((1, C), lambda n: (0, 0)),
            ],
            out_specs=pl.BlockSpec((1, HW // 4, C), lambda n: (n, 0, 0)),
            scratch_shapes=[pltpu.VMEM((HW // 2, C), jnp.float32)],
        ),
        compiler_params=pltpu.CompilerParams(
            dimension_semantics=("parallel",),
        ),
    )(a, w, b)


# ----------------------- fc1: K-tiled matmul + bias + ReLU -------------------------
def _fc1_kernel(a_ref, w_ref, b_ref, o_ref, acc_ref):
    k = pl.program_id(1)

    @pl.when(k == 0)
    def _():
        acc_ref[...] = jnp.zeros_like(acc_ref)

    acc_ref[...] += jnp.dot(a_ref[...], w_ref[...],
                            preferred_element_type=jnp.float32)

    @pl.when(k == pl.num_programs(1) - 1)
    def _():
        o_ref[...] = jnp.maximum(acc_ref[...] + b_ref[...], 0.0).astype(o_ref.dtype)


def fc1_relu_pallas(a, w, b):
    """a: (Mp, K) bf16, w: (K, Nout) bf16, b: (1, Nout) f32 -> relu(a@w+b) bf16."""
    Mp, K = a.shape
    Nout = w.shape[1]
    tk = _pick_tk(K)                      # 1792 for K = 12544
    nk = K // tk
    TM = Mp if Mp <= 512 else 512         # Mp is padded so TM divides it
    return pl.pallas_call(
        _fc1_kernel,
        out_shape=jax.ShapeDtypeStruct((Mp, Nout), jnp.bfloat16),
        grid_spec=pltpu.PrefetchScalarGridSpec(
            num_scalar_prefetch=0,
            grid=(Mp // TM, nk),
            in_specs=[
                pl.BlockSpec((TM, tk), lambda i, k: (i, k)),
                pl.BlockSpec((tk, Nout), lambda i, k: (k, 0)),
                pl.BlockSpec((1, Nout), lambda i, k: (0, 0)),
            ],
            out_specs=pl.BlockSpec((TM, Nout), lambda i, k: (i, 0)),
            scratch_shapes=[pltpu.VMEM((TM, Nout), jnp.float32)],
        ),
        compiler_params=pltpu.CompilerParams(
            dimension_semantics=("parallel", "arbitrary"),
        ),
    )(a, w, b)


# ------------------- fc2: matmul + bias + masked log_softmax -----------------------
def _fc2_logsoftmax_kernel(a_ref, w_ref, b_ref, o_ref, *, n_valid):
    logits = jnp.dot(a_ref[...], w_ref[...], preferred_element_type=jnp.float32)
    logits = logits + b_ref[...]
    lane = jax.lax.broadcasted_iota(jnp.int32, logits.shape, 1)
    logits = jnp.where(lane < n_valid, logits, jnp.float32(-1e30))
    m = jnp.max(logits, axis=-1, keepdims=True)
    s = logits - m
    lse = jnp.log(jnp.sum(jnp.exp(s), axis=-1, keepdims=True))
    o_ref[...] = s - lse


def fc2_logsoftmax_pallas(a, w, b, n_valid):
    """a: (Mp, 128) bf16, w: (128, 128) bf16 (zero-padded), b: (1, 128) f32
    -> log_softmax(a@w+b) over the first n_valid lanes, (Mp, 128) f32."""
    Mp = a.shape[0]
    Nout = w.shape[1]
    return pl.pallas_call(
        functools.partial(_fc2_logsoftmax_kernel, n_valid=n_valid),
        out_shape=jax.ShapeDtypeStruct((Mp, Nout), jnp.float32),
    )(a, w, b)


# --------------------------------- im2col glue -------------------------------------
def _im2col_nhwc(x, kh, kw):
    """x: (N, H, W, C) -> (N, Ho*Wo, kh*kw*C); rows in (h, w) raster order,
    features in (kh, kw, c) order."""
    N, H, W, C = x.shape
    Ho, Wo = H - kh + 1, W - kw + 1
    cols = [x[:, i:i + Ho, j:j + Wo, :] for i in range(kh) for j in range(kw)]
    p = jnp.stack(cols, axis=3)                      # (N, Ho, Wo, kh*kw, C)
    return p.reshape(N, Ho * Wo, kh * kw * C)


def _im2col_pool_order(x, kh, kw):
    """Like _im2col_nhwc, but rows ordered (h_i, h_o, w_o, w_i) with
    h = 2*h_o + h_i, w = 2*w_o + w_i, so the fused 2x2 max-pool reduces the two
    contiguous row halves (h_i) then adjacent stride-2 rows (w_i)."""
    N, H, W, C = x.shape
    Ho, Wo = H - kh + 1, W - kw + 1                  # must both be even
    F = kh * kw * C
    cols = [x[:, i:i + Ho, j:j + Wo, :] for i in range(kh) for j in range(kw)]
    p = jnp.stack(cols, axis=3).reshape(N, Ho, Wo, F)
    p = p.reshape(N, Ho // 2, 2, Wo // 2, 2, F)      # (N, h_o, h_i, w_o, w_i, F)
    p = p.transpose(0, 2, 1, 3, 4, 5)                # (N, h_i, h_o, w_o, w_i, F)
    return p.reshape(N, Ho * Wo, F)


# --------------------------------- parameters --------------------------------------
def init_params(key):
    k = jax.random.split(key, 8)

    def u(kk, shape, fan_in):
        bound = 1.0 / np.sqrt(fan_in)
        return jax.random.uniform(kk, shape, jnp.float32, -bound, bound)

    return {
        "conv1_w": u(k[0], (32, 3, 3, 3), 3 * 9),     # OIHW
        "conv1_b": u(k[1], (32,), 3 * 9),
        "conv2_w": u(k[2], (64, 32, 3, 3), 32 * 9),   # OIHW
        "conv2_b": u(k[3], (64,), 32 * 9),
        "fc1_w": u(k[4], (128, 12544), 12544),        # (out, in) like nn.Linear
        "fc1_b": u(k[5], (128,), 12544),
        "fc2_w": u(k[6], (100, 128), 128),
        "fc2_b": u(k[7], (100,), 128),
    }


def prepare_params(params):
    """One-time weight layout/dtype prep (run once, outside the jitted forward):
    transpose conv/linear weights into matmul-ready (K, N) layouts, permute fc1
    columns to the NHWC (h, w, c) flatten order, pad fc2 to 128 lanes, and cast
    all matmul operands to bf16 (biases stay f32 for the f32 accumulators)."""
    w1 = params["conv1_w"].transpose(2, 3, 1, 0).reshape(27, 32)        # (kh,kw,i,o)
    w2 = params["conv2_w"].transpose(2, 3, 1, 0).reshape(288, 64)
    # fc1: torch flattens NCHW (64, 14, 14) -> (c, h, w); our pooled activations
    # are flattened (h, w, c), so permute the input-feature axis accordingly.
    f1 = params["fc1_w"].reshape(128, 64, 14, 14).transpose(0, 2, 3, 1)
    w3 = f1.reshape(128, 12544).T                                        # (12544, 128)
    w4 = jnp.zeros((128, 128), jnp.float32).at[:, :100].set(params["fc2_w"].T)
    b4 = jnp.zeros((1, 128), jnp.float32).at[0, :100].set(params["fc2_b"])
    return {
        "w1": w1.astype(jnp.bfloat16),
        "b1": params["conv1_b"].reshape(1, 32).astype(jnp.float32),
        "w2": w2.astype(jnp.bfloat16),
        "b2": params["conv2_b"].reshape(1, 64).astype(jnp.float32),
        "w3": w3.astype(jnp.bfloat16),
        "b3": params["fc1_b"].reshape(1, 128).astype(jnp.float32),
        "w4": w4.astype(jnp.bfloat16),
        "b4": b4,
    }


# -------------------------------- forward pass -------------------------------------
def net_forward(pp, x):
    # x: (N, 3, 32, 32) float32, NCHW
    N = x.shape[0]
    x = x.transpose(0, 2, 3, 1)                                   # NHWC (N,32,32,3)

    # conv1 (3 -> 32, k=3, VALID) + ReLU, fused bias/ReLU, bf16 output
    a1 = _im2col_nhwc(x, 3, 3).astype(jnp.bfloat16)               # (N, 900, 27)
    y1 = conv1_relu_pallas(a1, pp["w1"], pp["b1"])                # (N, 900, 32)
    y1 = y1.reshape(N, 30, 30, 32)                                # NHWC

    # conv2 (32 -> 64, k=3, VALID), no ReLU, with the 2x2 max-pool fused
    a2 = _im2col_pool_order(y1, 3, 3)                             # (N, 784, 288) bf16
    p2 = conv2_pool_pallas(a2, pp["w2"], pp["b2"])                # (N, 196, 64) bf16

    # dropout1 / dropout2: identity in eval/inference mode
    # flatten in (h, w, c) order (fc1 weights were permuted to match)
    flat = p2.reshape(N, 14 * 14 * 64)                            # (N, 12544)
    Mp = _round_up(N, 8) if N <= 512 else _round_up(N, 512)
    if Mp != N:
        flat = jnp.zeros((Mp, flat.shape[1]), flat.dtype).at[:N].set(flat)

    # fc1 + ReLU (K-tiled accumulation), then fc2 + log_softmax fused
    h = fc1_relu_pallas(flat, pp["w3"], pp["b3"])                 # (Mp, 128) bf16
    out = fc2_logsoftmax_pallas(h, pp["w4"], pp["b4"], n_valid=100)  # (Mp, 128) f32
    return out[:N, :100]


# ------------------------- pure-JAX reference (check) ------------------------------
def net_forward_ref(params, x):
    dn = ("NCHW", "OIHW", "NCHW")
    y = jax.lax.conv_general_dilated(x, params["conv1_w"], (1, 1), "VALID",
                                     dimension_numbers=dn)
    y = jnp.maximum(y + params["conv1_b"][None, :, None, None], 0.0)
    y = jax.lax.conv_general_dilated(y, params["conv2_w"], (1, 1), "VALID",
                                     dimension_numbers=dn)
    y = y + params["conv2_b"][None, :, None, None]
    N, C, H, W = y.shape
    y = y.reshape(N, C, H // 2, 2, W // 2, 2).max(axis=(3, 5))
    flat = y.reshape(N, -1)
    h = jnp.maximum(flat @ params["fc1_w"].T + params["fc1_b"], 0.0)
    logits = h @ params["fc2_w"].T + params["fc2_b"]
    return jax.nn.log_softmax(logits, axis=1)


if __name__ == "__main__":
    key = jax.random.PRNGKey(0)
    pkey, xkey = jax.random.split(key)
    params = init_params(pkey)
    x = jax.random.normal(xkey, (2, 3, 32, 32), jnp.float32)

    prepped = prepare_params(params)        # one-time weight layout/dtype prep
    fwd = jax.jit(net_forward)
    out = jax.block_until_ready(fwd(prepped, x))

    assert out.shape == (2, 100), out.shape
    assert bool(jnp.all(jnp.isfinite(out)))
    ref = net_forward_ref(params, x)
    max_err = float(jnp.max(jnp.abs(out - ref)))
    # bf16 operands (f32 accumulation) -> slightly looser tolerance than pure f32
    assert bool(jnp.allclose(out, ref, atol=3e-2, rtol=3e-2)), max_err
    print("KERNEL_OK")
</pallas_src>

<mosaic_0001>
module attributes {stable_mosaic.version = 11 : i64} {
  func.func @_conv1_kernel(%arg0: i32, %arg1: memref<1x900x27xbf16, #tpu.memory_space<vmem>>, %arg2: memref<27x32xbf16, #tpu.memory_space<vmem>>, %arg3: memref<1x32xf32, #tpu.memory_space<vmem>>, %arg4: memref<1x900x32xbf16, #tpu.memory_space<vmem>>) attributes {dimension_semantics = [#tpu.dimension_semantics<parallel>], iteration_bounds = array<i64: 2>, scalar_prefetch = 0 : i64, scratch_operands = 0 : i64, tpu.core_type = #tpu.core_type<tc>, window_params = [{transform_indices = @transform_0, window_bounds = array<i64: 1, 900, 27>}, {pipeline_mode = #tpu.pipeline_mode<synchronous>, transform_indices = @transform_1, window_bounds = array<i64: 27, 32>}, {pipeline_mode = #tpu.pipeline_mode<synchronous>, transform_indices = @transform_2, window_bounds = array<i64: 1, 32>}, {transform_indices = @transform_3, window_bounds = array<i64: 1, 900, 32>}]} {
    %c0 = arith.constant 0 : index
    %c0_0 = arith.constant 0 : index
    %c0_1 = arith.constant 0 : index
    %0 = vector.load %arg1[%c0, %c0_0, %c0_1] : memref<1x900x27xbf16, #tpu.memory_space<vmem>>, vector<1x900x27xbf16>
    %1 = vector.shape_cast %0 : vector<1x900x27xbf16> to vector<900x27xbf16>
    %c0_2 = arith.constant 0 : index
    %c0_3 = arith.constant 0 : index
    %2 = vector.load %arg2[%c0_2, %c0_3] : memref<27x32xbf16, #tpu.memory_space<vmem>>, vector<27x32xbf16>
    %cst = arith.constant dense<0.000000e+00> : vector<900x32xf32>
    %3 = tpu.matmul %1, %2, %cst {dimension_numbers = #tpu.dot_dimension_numbers<[1], [0], [0], [1], [0, 0, 1, 1], [], []>} : vector<900x27xbf16>, vector<27x32xbf16>, vector<900x32xf32> -> vector<900x32xf32>
    %c0_4 = arith.constant 0 : index
    %c0_5 = arith.constant 0 : index
    %4 = vector.load %arg3[%c0_4, %c0_5] : memref<1x32xf32, #tpu.memory_space<vmem>>, vector<1x32xf32>
    %5 = vector.broadcast %4 : vector<1x32xf32> to vector<900x32xf32>
    %6 = arith.addf %3, %5 : vector<900x32xf32>
    %cst_6 = arith.constant 0.000000e+00 : f32
    %7 = vector.broadcast %cst_6 : f32 to vector<900x32xf32>
    %8 = arith.maximumf %6, %7 : vector<900x32xf32>
    %9 = arith.truncf %8 : vector<900x32xf32> to vector<900x32xbf16>
    %c0_7 = arith.constant 0 : index
    %c0_8 = arith.constant 0 : index
    %c0_9 = arith.constant 0 : index
    %10 = vector.load %arg4[%c0_7, %c0_8, %c0_9] : memref<1x900x32xbf16, #tpu.memory_space<vmem>>, vector<1x900x32xbf16>
    %11 = vector.shape_cast %10 : vector<1x900x32xbf16> to vector<900x32xbf16>
    %12 = vector.shape_cast %9 : vector<900x32xbf16> to vector<1x900x32xbf16>
    tpu.vector_store %arg4[%c0_7, %c0_8, %c0_9], %12 {strides = array<i32>} : memref<1x900x32xbf16, #tpu.memory_space<vmem>>, vector<1x900x32xbf16>,
    return
  }
  func.func @transform_0(%arg0: i32) -> (i32, i32, i32) {
    %c0_i32 = arith.constant 0 : i32
    %c0_i32_0 = arith.constant 0 : i32
    %c0_i32_1 = arith.constant 0 : i32
    return %arg0, %c0_i32, %c0_i32_0 : i32, i32, i32
  }
  func.func @transform_1(%arg0: i32) -> (i32, i32) {
    %c0_i32 = arith.constant 0 : i32
    %c0_i32_0 = arith.constant 0 : i32
    %c0_i32_1 = arith.constant 0 : i32
    return %c0_i32, %c0_i32_0 : i32, i32
  }
  func.func @transform_2(%arg0: i32) -> (i32, i32) {
    %c0_i32 = arith.constant 0 : i32
    %c0_i32_0 = arith.constant 0 : i32
    %c0_i32_1 = arith.constant 0 : i32
    return %c0_i32, %c0_i32_0 : i32, i32
  }
  func.func @transform_3(%arg0: i32) -> (i32, i32, i32) {
    %c0_i32 = arith.constant 0 : i32
    %c0_i32_0 = arith.constant 0 : i32
    %c0_i32_1 = arith.constant 0 : i32
    return %arg0, %c0_i32, %c0_i32_0 : i32, i32, i32
  }
}

module attributes {stable_mosaic.version = 11 : i64} {
  func.func @_conv2_pool_kernel(%arg0: i32, %arg1: memref<1x784x288xbf16, #tpu.memory_space<vmem>>, %arg2: memref<288x64xbf16, #tpu.memory_space<vmem>>, %arg3: memref<1x64xf32, #tpu.memory_space<vmem>>, %arg4: memref<1x196x64xbf16, #tpu.memory_space<vmem>>, %arg5: memref<392x64xf32, #tpu.memory_space<vmem>>) attributes {dimension_semantics = [#tpu.dimension_semantics<parallel>], iteration_bounds = array<i64: 2>, scalar_prefetch = 0 : i64, scratch_operands = 1 : i64, tpu.core_type = #tpu.core_type<tc>, window_params = [{transform_indices = @transform_0, window_bounds = array<i64: 1, 784, 288>}, {pipeline_mode = #tpu.pipeline_mode<synchronous>, transform_indices = @transform_1, window_bounds = array<i64: 288, 64>}, {pipeline_mode = #tpu.pipeline_mode<synchronous>, transform_indices = @transform_2, window_bounds = array<i64: 1, 64>}, {transform_indices = @transform_3, window_bounds = array<i64: 1, 196, 64>}]} {
    %c0 = arith.constant 0 : index
    %c0_0 = arith.constant 0 : index
    %c0_1 = arith.constant 0 : index
    %0 = vector.load %arg1[%c0, %c0_0, %c0_1] : memref<1x784x288xbf16, #tpu.memory_space<vmem>>, vector<1x784x288xbf16>
    %1 = vector.shape_cast %0 : vector<1x784x288xbf16> to vector<784x288xbf16>
    %c0_2 = arith.constant 0 : index
    %c0_3 = arith.constant 0 : index
    %2 = vector.load %arg2[%c0_2, %c0_3] : memref<288x64xbf16, #tpu.memory_space<vmem>>, vector<288x64xbf16>
    %cst = arith.constant dense<0.000000e+00> : vector<784x64xf32>
    %3 = tpu.matmul %1, %2, %cst {dimension_numbers = #tpu.dot_dimension_numbers<[1], [0], [0], [1], [0, 0, 1, 1], [], []>} : vector<784x288xbf16>, vector<288x64xbf16>, vector<784x64xf32> -> vector<784x64xf32>
    %c0_4 = arith.constant 0 : index
    %c0_5 = arith.constant 0 : index
    %4 = vector.load %arg3[%c0_4, %c0_5] : memref<1x64xf32, #tpu.memory_space<vmem>>, vector<1x64xf32>
    %5 = vector.broadcast %4 : vector<1x64xf32> to vector<784x64xf32>
    %6 = arith.addf %3, %5 : vector<784x64xf32>
    %7 = vector.extract_strided_slice %6 {offsets = [0, 0], sizes = [392, 64], strides = [1, 1]} : vector<784x64xf32> to vector<392x64xf32>
    %8 = vector.extract_strided_slice %6 {offsets = [392, 0], sizes = [392, 64], strides = [1, 1]} : vector<784x64xf32> to vector<392x64xf32>
    %9 = arith.maximumf %7, %8 : vector<392x64xf32>
    %c0_6 = arith.constant 0 : index
    %c0_7 = arith.constant 0 : index
    %10 = vector.load %arg5[%c0_6, %c0_7] : memref<392x64xf32, #tpu.memory_space<vmem>>, vector<392x64xf32>
    tpu.vector_store %arg5[%c0_6, %c0_7], %9 {strides = array<i32>} : memref<392x64xf32, #tpu.memory_space<vmem>>, vector<392x64xf32>,
    %c0_8 = arith.constant 0 : index
    %c0_9 = arith.constant 0 : index
    %11 = tpu.strided_load %arg5[%c0_8, %c0_9] {strides = array<i32: 2, 1>} : memref<392x64xf32, #tpu.memory_space<vmem>>, vector<196x64xf32>
    %c1 = arith.constant 1 : index
    %c0_10 = arith.constant 0 : index
    %12 = tpu.strided_load %arg5[%c1, %c0_10] {strides = array<i32: 2, 1>} : memref<392x64xf32, #tpu.memory_space<vmem>>, vector<196x64xf32>
    %13 = arith.maximumf %11, %12 : vector<196x64xf32>
    %14 = arith.truncf %13 : vector<196x64xf32> to vector<196x64xbf16>
    %c0_11 = arith.constant 0 : index
    %c0_12 = arith.constant 0 : index
    %c0_13 = arith.constant 0 : index
    %15 = vector.load %arg4[%c0_11, %c0_12, %c0_13] : memref<1x196x64xbf16, #tpu.memory_space<vmem>>, vector<1x196x64xbf16>
    %16 = vector.shape_cast %15 : vector<1x196x64xbf16> to vector<196x64xbf16>
    %17 = vector.shape_cast %14 : vector<196x64xbf16> to vector<1x196x64xbf16>
    tpu.vector_store %arg4[%c0_11, %c0_12, %c0_13], %17 {strides = array<i32>} : memref<1x196x64xbf16, #tpu.memory_space<vmem>>, vector<1x196x64xbf16>,
    return
  }
  func.func @transform_0(%arg0: i32) -> (i32, i32, i32) {
    %c0_i32 = arith.constant 0 : i32
    %c0_i32_0 = arith.constant 0 : i32
    %c0_i32_1 = arith.constant 0 : i32
    return %arg0, %c0_i32, %c0_i32_0 : i32, i32, i32
  }
  func.func @transform_1(%arg0: i32) -> (i32, i32) {
    %c0_i32 = arith.constant 0 : i32
    %c0_i32_0 = arith.constant 0 : i32
    %c0_i32_1 = arith.constant 0 : i32
    return %c0_i32, %c0_i32_0 : i32, i32
  }
  func.func @transform_2(%arg0: i32) -> (i32, i32) {
    %c0_i32 = arith.constant 0 : i32
    %c0_i32_0 = arith.constant 0 : i32
    %c0_i32_1 = arith.constant 0 : i32
    return %c0_i32, %c0_i32_0 : i32, i32
  }
  func.func @transform_3(%arg0: i32) -> (i32, i32, i32) {
    %c0_i32 = arith.constant 0 : i32
    %c0_i32_0 = arith.constant 0 : i32
    %c0_i32_1 = arith.constant 0 : i32
    return %arg0, %c0_i32, %c0_i32_0 : i32, i32, i32
  }
}

module attributes {stable_mosaic.version = 11 : i64} {
  func.func @_fc1_kernel(%arg0: i32, %arg1: i32, %arg2: memref<8x1792xbf16, #tpu.memory_space<vmem>>, %arg3: memref<1792x128xbf16, #tpu.memory_space<vmem>>, %arg4: memref<1x128xf32, #tpu.memory_space<vmem>>, %arg5: memref<8x128xbf16, #tpu.memory_space<vmem>>, %arg6: memref<8x128xf32, #tpu.memory_space<vmem>>) attributes {dimension_semantics = [#tpu.dimension_semantics<parallel>, #tpu.dimension_semantics<arbitrary>], iteration_bounds = array<i64: 1, 7>, scalar_prefetch = 0 : i64, scratch_operands = 1 : i64, tpu.core_type = #tpu.core_type<tc>, window_params = [{transform_indices = @transform_0, window_bounds = array<i64: 8, 1792>}, {transform_indices = @transform_1, window_bounds = array<i64: 1792, 128>}, {pipeline_mode = #tpu.pipeline_mode<synchronous>, transform_indices = @transform_2, window_bounds = array<i64: 1, 128>}, {transform_indices = @transform_3, window_bounds = array<i64: 8, 128>}]} {
    %c0_i32 = arith.constant 0 : i32
    %0 = arith.cmpi eq, %arg1, %c0_i32 : i32
    %1 = arith.extui %0 : i1 to i32
    %c0_i32_0 = arith.constant 0 : i32
    %2 = arith.cmpi ne, %1, %c0_i32_0 : i32
    scf.if %2 {
      %cst_9 = arith.constant 0.000000e+00 : f32
      %12 = vector.broadcast %cst_9 : f32 to vector<8x128xf32>
      %c0_10 = arith.constant 0 : index
      %c0_11 = arith.constant 0 : index
      %13 = vector.load %arg6[%c0_10, %c0_11] : memref<8x128xf32, #tpu.memory_space<vmem>>, vector<8x128xf32>
      tpu.vector_store %arg6[%c0_10, %c0_11], %12 {strides = array<i32>} : memref<8x128xf32, #tpu.memory_space<vmem>>, vector<8x128xf32>,
    } else {
    }
    %c0 = arith.constant 0 : index
    %c0_1 = arith.constant 0 : index
    %3 = vector.load %arg6[%c0, %c0_1] : memref<8x128xf32, #tpu.memory_space<vmem>>, vector<8x128xf32>
    %c0_2 = arith.constant 0 : index
    %c0_3 = arith.constant 0 : index
    %4 = vector.load %arg2[%c0_2, %c0_3] : memref<8x1792xbf16, #tpu.memory_space<vmem>>, vector<8x1792xbf16>
    %c0_4 = arith.constant 0 : index
    %c0_5 = arith.constant 0 : index
    %5 = vector.load %arg3[%c0_4, %c0_5] : memref<1792x128xbf16, #tpu.memory_space<vmem>>, vector<1792x128xbf16>
    %cst = arith.constant dense<0.000000e+00> : vector<8x128xf32>
    %6 = tpu.matmul %4, %5, %cst {dimension_numbers = #tpu.dot_dimension_numbers<[1], [0], [0], [1], [0, 0, 1, 1], [], []>} : vector<8x1792xbf16>, vector<1792x128xbf16>, vector<8x128xf32> -> vector<8x128xf32>
    %7 = arith.addf %3, %6 : vector<8x128xf32>
    %c0_6 = arith.constant 0 : index
    %c0_7 = arith.constant 0 : index
    %8 = vector.load %arg6[%c0_6, %c0_7] : memref<8x128xf32, #tpu.memory_space<vmem>>, vector<8x128xf32>
    tpu.vector_store %arg6[%c0_6, %c0_7], %7 {strides = array<i32>} : memref<8x128xf32, #tpu.memory_space<vmem>>, vector<8x128xf32>,
    %c6_i32 = arith.constant 6 : i32
    %9 = arith.cmpi eq, %arg1, %c6_i32 : i32
    %10 = arith.extui %9 : i1 to i32
    %c0_i32_8 = arith.constant 0 : i32
    %11 = arith.cmpi ne, %10, %c0_i32_8 : i32
    scf.if %11 {
      %c0_9 = arith.constant 0 : index
      %c0_10 = arith.constant 0 : index
      %12 = vector.load %arg6[%c0_9, %c0_10] : memref<8x128xf32, #tpu.memory_space<vmem>>, vector<8x128xf32>
      %c0_11 = arith.constant 0 : index
      %c0_12 = arith.constant 0 : index
      %13 = vector.load %arg4[%c0_11, %c0_12] : memref<1x128xf32, #tpu.memory_space<vmem>>, vector<1x128xf32>
      %14 = vector.broadcast %13 : vector<1x128xf32> to vector<8x128xf32>
      %15 = arith.addf %12, %14 : vector<8x128xf32>
      %cst_13 = arith.constant 0.000000e+00 : f32
      %16 = vector.broadcast %cst_13 : f32 to vector<8x128xf32>
      %17 = arith.maximumf %15, %16 : vector<8x128xf32>
      %18 = arith.truncf %17 : vector<8x128xf32> to vector<8x128xbf16>
      %c0_14 = arith.constant 0 : index
      %c0_15 = arith.constant 0 : index
      %19 = vector.load %arg5[%c0_14, %c0_15] : memref<8x128xbf16, #tpu.memory_space<vmem>>, vector<8x128xbf16>
      tpu.vector_store %arg5[%c0_14, %c0_15], %18 {strides = array<i32>} : memref<8x128xbf16, #tpu.memory_space<vmem>>, vector<8x128xbf16>,
    } else {
    }
    return
  }
  func.func @transform_0(%arg0: i32, %arg1: i32) -> (i32, i32) {
    %c0_i32 = arith.constant 0 : i32
    return %arg0, %arg1 : i32, i32
  }
  func.func @transform_1(%arg0: i32, %arg1: i32) -> (i32, i32) {
    %c0_i32 = arith.constant 0 : i32
    %c0_i32_0 = arith.constant 0 : i32
    return %arg1, %c0_i32 : i32, i32
  }
  func.func @transform_2(%arg0: i32, %arg1: i32) -> (i32, i32) {
    %c0_i32 = arith.constant 0 : i32
    %c0_i32_0 = arith.constant 0 : i32
    %c0_i32_1 = arith.constant 0 : i32
    return %c0_i32, %c0_i32_0 : i32, i32
  }
  func.func @transform_3(%arg0: i32, %arg1: i32) -> (i32, i32) {
    %c0_i32 = arith.constant 0 : i32
    %c0_i32_0 = arith.constant 0 : i32
    return %arg0, %c0_i32 : i32, i32
  }
}

module attributes {stable_mosaic.version = 11 : i64} {
  func.func @_fc2_logsoftmax_kernel(%arg0: memref<8x128xbf16, #tpu.memory_space<vmem>>, %arg1: memref<128x128xbf16, #tpu.memory_space<vmem>>, %arg2: memref<1x128xf32, #tpu.memory_space<vmem>>, %arg3: memref<8x128xf32, #tpu.memory_space<vmem>>) attributes {dimension_semantics = [], scalar_prefetch = 0 : i64, scratch_operands = 0 : i64, tpu.core_type = #tpu.core_type<tc>} {
    %c0 = arith.constant 0 : index
    %c0_0 = arith.constant 0 : index
    %0 = vector.load %arg0[%c0, %c0_0] : memref<8x128xbf16, #tpu.memory_space<vmem>>, vector<8x128xbf16>
    %c0_1 = arith.constant 0 : index
    %c0_2 = arith.constant 0 : index
    %1 = vector.load %arg1[%c0_1, %c0_2] : memref<128x128xbf16, #tpu.memory_space<vmem>>, vector<128x128xbf16>
    %cst = arith.constant dense<0.000000e+00> : vector<8x128xf32>
    %2 = tpu.matmul %0, %1, %cst {dimension_numbers = #tpu.dot_dimension_numbers<[1], [0], [0], [1], [0, 0, 1, 1], [], []>} : vector<8x128xbf16>, vector<128x128xbf16>, vector<8x128xf32> -> vector<8x128xf32>
    %c0_3 = arith.constant 0 : index
    %c0_4 = arith.constant 0 : index
    %3 = vector.load %arg2[%c0_3, %c0_4] : memref<1x128xf32, #tpu.memory_space<vmem>>, vector<1x128xf32>
    %4 = vector.broadcast %3 : vector<1x128xf32> to vector<8x128xf32>
    %5 = arith.addf %2, %4 : vector<8x128xf32>
    %6 = tpu.iota {dimensions = array<i32: 1>} : vector<8x128xi32>
    %c100_i32 = arith.constant 100 : i32
    %7 = vector.broadcast %c100_i32 : i32 to vector<8x128xi32>
    %8 = arith.cmpi slt, %6, %7 : vector<8x128xi32>
    %cst_5 = arith.constant -1.000000e+30 : f32
    %9 = vector.broadcast %cst_5 : f32 to vector<8x128xf32>
    %10 = arith.select %8, %5, %9 : vector<8x128xi1>, vector<8x128xf32>
    %cst_6 = arith.constant dense<0xFF800000> : vector<8xf32>
    %11 = vector.multi_reduction <maximumf>, %10, %cst_6 [1] : vector<8x128xf32> to vector<8xf32>
    %12 = vector.shape_cast %11 : vector<8xf32> to vector<8x1xf32>
    %13 = vector.broadcast %12 : vector<8x1xf32> to vector<8x128xf32>
    %14 = arith.subf %10, %13 : vector<8x128xf32>
    %15 = math.exp %14 : vector<8x128xf32>
    %cst_7 = arith.constant dense<0.000000e+00> : vector<8xf32>
    %16 = vector.multi_reduction <add>, %15, %cst_7 [1] : vector<8x128xf32> to vector<8xf32>
    %17 = vector.shape_cast %16 : vector<8xf32> to vector<8x1xf32>
    %18 = math.log %17 : vector<8x1xf32>
    %19 = vector.broadcast %18 : vector<8x1xf32> to vector<8x128xf32>
    %20 = arith.subf %14, %19 : vector<8x128xf32>
    %c0_8 = arith.constant 0 : index
    %c0_9 = arith.constant 0 : index
    %21 = vector.load %arg3[%c0_8, %c0_9] : memref<8x128xf32, #tpu.memory_space<vmem>>, vector<8x128xf32>
    tpu.vector_store %arg3[%c0_8, %c0_9], %20 {strides = array<i32>} : memref<8x128xf32, #tpu.memory_space<vmem>>, vector<8x128xf32>,
    return
  }
}

</mosaic_0001>

<llo_original>
// kernel: net_forward.4
$region0: #{net_forward.4}
  #allocation0 [shape = 'u32[]', space=smem, size = 0x4, offset = 0x4, fixed_abs, tag = 'smem constant byte address 0x4 - core index']
  #allocation1 [shape = 'u32[144,128]{1,0:T(1,128)}', space=vmem, size = 0x12000, scoped, tag = 'internal scratch']
  %s0 = inlined_call_operand.vmem [shape: bf16[2,900,27], index: 0, kind: input, shape index: {}]
  %s1 = inlined_call_operand.hbm [shape: bf16[27,32], index: 1, kind: input, shape index: {}]
  %s2 = inlined_call_operand.hbm [shape: f32[1,32], index: 2, kind: input, shape index: {}]
  %s3 = inlined_call_operand.vmem [shape: bf16[2,900,32], index: 3, kind: output, shape index: {}]
  %s4 = sld [smem:[#allocation0]]
  $region53: #{net_forward.4} parent=0
    _
  %s6 = ssub.s32 1, %s4
  %s7 = scalar_select 0, %s6, %s4
  $region1: #{net_forward.4} parent=0
    #allocation2 [shape = 'u8[8192]{0}', space=vmem, size = 0x2000, scoped, tag = 'input window, operand 1, single buffered']
    #allocation3 [shape = 's32[2]{0}', space=sflag, size = 0x8, scoped, tag = 'scoped memory for net_forward.4']
    #allocation4 [shape = 'u8[512]{0}', space=vmem, size = 0x400, scoped, tag = 'input window, operand 2, single buffered']
    #allocation5 [shape = 's32[1]{0}', space=sflag, size = 0x4, scoped, tag = 'scoped memory for net_forward.4']
    %8 = vsyncpa [#allocation3], 0
    %9 = vsyncpa [#allocation5], 0
    loop: start=0, step=1, limit=4
    $region2: #{net_forward.4} parent=1 // loop_pre_header
      _
    $region3: #{net_forward.4} parent=1 // loop_header
      %s11 = sphi 0, %s15
      %p12 = scmp.ge.s32.totalorder %s11, 4
      %s21 = sphi 0, %s23
      %s24 = sphi 0, %s21
      %s25 = sphi 0, %s24
      %s41 = sphi 0, %s25
      %s45 = sphi 0, %s45
      %s47 = sphi 0, %s45
      %s48 = sphi 0, %s47
      %s62 = sphi 0, %s48
      %s66 = sphi 0, %s66
      %s68 = sphi 0, %s66
      %s69 = sphi 0, %s68
      %s83 = sphi 0, %s69
      %s89 = sphi 0, %s91
      %s92 = sphi 0, %s89
      %s93 = sphi 0, %s92
      %s109 = sphi 0, %s93
    $region4: #{net_forward.4} parent=1 // loop_header_branch
      %14 = sbr.rel (%p12) target = $region8
    $region5: #{net_forward.4} parent=1 // loop_body
      %s16 = ssub.s32 %s11, 1
      %s17 = ssub.s32 %s11, 2
      %s18 = sadd.s32 %s11, 1
      %s19 = ssub.s32 %s11, %s18
      %p20 = scmp.eq.s32.totalorder %s19, 0
      %s22 = sadd.s32 %s21, 1
      %s23 = scalar_select %p20, %s21, %s22
      %p26 = pneg %p20
      %p27 = scmp.eq.s32.totalorder %s11, 1
      %p28 = por %p26, %p27
      %p29 = scmp.ne.s32.totalorder %s21, %s24
      %p30 = scmp.eq.s32.totalorder %s11, 0
      %p31 = por %p29, %p30
      %p32 = scmp.ne.s32.totalorder %s21, %s24
      %p33 = scmp.eq.s32.totalorder %s16, 1
      %p34 = por %p32, %p33
      %p35 = scmp.ne.s32.totalorder %s24, %s25
      %p36 = scmp.eq.s32.totalorder %s16, 0
      %p37 = por %p35, %p36
      %p38 = scmp.ne.s32.totalorder %s24, %s25
      %p39 = scmp.eq.s32.totalorder %s17, 1
      %p40 = por %p38, %p39
      %p42 = scmp.ne.s32.totalorder %s25, %s41
      %p43 = scmp.eq.s32.totalorder %s17, 0
      %p44 = por %p42, %p43
      %s46 = sadd.s32 %s45, 1
      %p49 = scmp.eq.s32.totalorder %s11, 1
      %p50 = scmp.ne.s32.totalorder %s45, %s47
      %p51 = scmp.eq.s32.totalorder %s11, 0
      %p52 = por %p50, %p51
      %p53 = scmp.ne.s32.totalorder %s45, %s47
      %p54 = scmp.eq.s32.totalorder %s16, 1
      %p55 = por %p53, %p54
      %p56 = scmp.ne.s32.totalorder %s47, %s48
      %p57 = scmp.eq.s32.totalorder %s16, 0
      %p58 = por %p56, %p57
      %p59 = scmp.ne.s32.totalorder %s47, %s48
      %p60 = scmp.eq.s32.totalorder %s17, 1
      %p61 = por %p59, %p60
      %p63 = scmp.ne.s32.totalorder %s48, %s62
      %p64 = scmp.eq.s32.totalorder %s17, 0
      %p65 = por %p63, %p64
      %s67 = sadd.s32 %s66, 1
      %p70 = scmp.eq.s32.totalorder %s11, 1
      %p71 = scmp.ne.s32.totalorder %s66, %s68
      %p72 = scmp.eq.s32.totalorder %s11, 0
      %p73 = por %p71, %p72
      %p74 = scmp.ne.s32.totalorder %s66, %s68
      %p75 = scmp.eq.s32.totalorder %s16, 1
      %p76 = por %p74, %p75
      %p77 = scmp.ne.s32.totalorder %s68, %s69
      %p78 = scmp.eq.s32.totalorder %s16, 0
      %p79 = por %p77, %p78
      %p80 = scmp.ne.s32.totalorder %s68, %s69
      %p81 = scmp.eq.s32.totalorder %s17, 1
      %p82 = por %p80, %p81
      %p84 = scmp.ne.s32.totalorder %s69, %s83
      %p85 = scmp.eq.s32.totalorder %s17, 0
      %p86 = por %p84, %p85
      %s87 = ssub.s32 %s11, %s18
      %p88 = scmp.eq.s32.totalorder %s87, 0
      %s90 = sadd.s32 %s89, 1
      %s91 = scalar_select %p88, %s89, %s90
      %p94 = pneg %p88
      %p95 = scmp.eq.s32.totalorder %s11, 1
      %p96 = por %p94, %p95
      %p97 = scmp.ne.s32.totalorder %s89, %s92
      %p98 = scmp.eq.s32.totalorder %s11, 0
      %p99 = por %p97, %p98
      %p100 = scmp.ne.s32.totalorder %s89, %s92
      %p101 = scmp.eq.s32.totalorder %s16, 1
      %p102 = por %p100, %p101
      %p103 = scmp.ne.s32.totalorder %s92, %s93
      %p104 = scmp.eq.s32.totalorder %s16, 0
      %p105 = por %p103, %p104
      %p106 = scmp.ne.s32.totalorder %s92, %s93
      %p107 = scmp.eq.s32.totalorder %s17, 1
      %p108 = por %p106, %p107
      %p110 = scmp.ne.s32.totalorder %s93, %s109
      %p111 = scmp.eq.s32.totalorder %s17, 0
      %p112 = por %p110, %p111
      %p113 = scmp.le.s32.totalorder 1, %s11
      %p114 = scmp.lt.s32.totalorder %s11, 3
      %p115 = pnand %p113, %p114
      %p116 = pneg %p115
      // Predicated region
      $region9: #{net_forward.4} parent=5 // pred_check
        _
      $region10: #{net_forward.4} parent=5 // pred_check_branch
        %118 = sbr.rel (%p115) target = $region12
      $region11: #{net_forward.4} parent=5 // pred_region
        %s119 = ssub.s32 %s11, 1
        // Predicated region
        $region13: #{net_forward.4} parent=11 // pred_check
          %p120 = pneg %p58
        $region14: #{net_forward.4} parent=11 // pred_check_branch
          %122 = sbr.rel (%p120) target = $region16
        $region15: #{net_forward.4} parent=11 // pred_region
          %s124 = ssub.s32 256, 256
          %125 = vsyncadd [#allocation3], %s124
          %s126 = sshll.u32 [#allocation2], 4
          %s127 = int_to_ptr.vmem [resolvable:$true] %s126
          %132 = dma.hbm_to_vmem [thread:$0]  %s1, 256, %s127, [#allocation3], 64, 64, 4
        $region16: #{net_forward.4} parent=11 // pred_fallthru
          _
        // Predicated region
        $region17: #{net_forward.4} parent=11 // pred_check
          %p133 = pneg %p79
        $region18: #{net_forward.4} parent=11 // pred_check_branch
          %135 = sbr.rel (%p133) target = $region20
        $region19: #{net_forward.4} parent=11 // pred_region
          %s137 = ssub.s32 16, 16
          %138 = vsyncadd [#allocation5], %s137
          %s140 = sshll.u32 [#allocation4], 4
          %s141 = int_to_ptr.vmem [resolvable:$true] %s140
          %143 = dma.hbm_to_vmem [thread:$0]  %s2, 16, %s141, [#allocation5]
        $region20: #{net_forward.4} parent=11 // pred_fallthru
          _
      $region12: #{net_forward.4} parent=5 // pred_fallthru
        _
      %p144 = scmp.lt.s32.totalorder %s11, 2
      // Predicated region
      $region21: #{net_forward.4} parent=5 // pred_check
        %p145 = pneg %p144
      $region22: #{net_forward.4} parent=5 // pred_check_branch
        %147 = sbr.rel (%p145) target = $region24
      $region23: #{net_forward.4} parent=5 // pred_region
        // Predicated region
        $region25: #{net_forward.4} parent=23 // pred_check
          %p148 = pneg %p31
        $region26: #{net_forward.4} parent=23 // pred_check_branch
          %150 = sbr.rel (%p148) target = $region28
        $region27: #{net_forward.4} parent=23 // pred_region
          %p151 = scmp.lt.s32.totalorder %s11, 1
          %s152 = scalar_select %p151, %s11, 1
          %s153 = smul.addr %s152, 113
          %s154 = smul.addr %s153, 4
          %s155 = scalar_lea.vmem %s0, %s154
        $region28: #{net_forward.4} parent=23 // pred_fallthru
          _
      $region24: #{net_forward.4} parent=5 // pred_fallthru
        _
      %p156 = scmp.le.s32.totalorder 1, %s11
      %p157 = scmp.lt.s32.totalorder %s11, 3
      %p158 = pnand %p156, %p157
      %p159 = pneg %p158
      // Predicated region
      $region29: #{net_forward.4} parent=5 // pred_check
        _
      $region30: #{net_forward.4} parent=5 // pred_check_branch
        %161 = sbr.rel (%p158) target = $region32
      $region31: #{net_forward.4} parent=5 // pred_region
        %s162 = ssub.s32 %s11, 1
        // Predicated region
        $region33: #{net_forward.4} parent=31 // pred_check
          %p163 = pneg %p58
        $region34: #{net_forward.4} parent=31 // pred_check_branch
          %165 = sbr.rel (%p163) target = $region36
        $region35: #{net_forward.4} parent=31 // pred_region
          %166 = dma.done [#allocation3], 256
        $region36: #{net_forward.4} parent=31 // pred_fallthru
          _
        // Predicated region
        $region37: #{net_forward.4} parent=31 // pred_check
          %p167 = pneg %p79
        $region38: #{net_forward.4} parent=31 // pred_check_branch
          %169 = sbr.rel (%p167) target = $region40
        $region39: #{net_forward.4} parent=31 // pred_region
          %170 = dma.done [#allocation5], 16
        $region40: #{net_forward.4} parent=31 // pred_fallthru
          _
        %p171 = scmp.lt.s32.totalorder %s16, 1
        %s172 = scalar_select %p171, %s16, 1
        %s173 = smul.addr %s172, 113
        %s174 = smul.addr %s173, 4
        %s175 = scalar_lea.vmem %s0, %s174
        %p176 = pneg %p37
        %p177 = pneg %p34
        %p178 = pneg %p58
        %p179 = pneg %p55
        %p180 = pneg %p79
        %p181 = pneg %p76
        %p182 = pneg %p105
        %p183 = pneg %p102
        %p184 = scmp.lt.s32.totalorder %s16, 1
        %s185 = scalar_select %p184, %s16, 1
        %s186 = smul.addr %s185, 113
        %s187 = smul.addr %s186, 4
        %s188 = scalar_lea.vmem %s3, %s187
        %p189 = scmp.lt.s32.totalorder %s16, 1
        %s190 = scalar_select %p189, %s16, 1
        %s191 = smul.addr %s190, 113
        %s192 = smul.addr %s191, 4
        %s193 = scalar_lea.vmem %s0, %s192
        %p194 = scmp.lt.s32.totalorder %s16, 1
        %s195 = scalar_select %p194, %s16, 1
        %s196 = smul.addr %s195, 113
        %s197 = smul.addr %s196, 4
        %s198 = scalar_lea.vmem %s3, %s197
        %v200 = vld [vmem:[%s193] sm:$0xf]
        %v201 = vld [vmem:[%s193 + $0x4] sm:$0xf]
        %v202 = vld [vmem:[%s193 + $0x8] sm:$0xf]
        %v203 = vld [vmem:[%s193 + $0xc] sm:$0xf]
        %v204 = vld [vmem:[%s193 + $0x10] sm:$0xf]
        %v205 = vld [vmem:[%s193 + $0x14] sm:$0xf]
        %v206 = vld [vmem:[%s193 + $0x18] sm:$0xf]
        %v207 = vld [vmem:[%s193 + $0x1c] sm:$0xf]
        %v208 = vld [vmem:[%s193 + $0x20] sm:$0xf]
        %v209 = vld [vmem:[%s193 + $0x24] sm:$0xf]
        %v210 = vld [vmem:[%s193 + $0x28] sm:$0xf]
        %v211 = vld [vmem:[%s193 + $0x2c] sm:$0xf]
        %v212 = vld [vmem:[%s193 + $0x30] sm:$0xf]
        %v213 = vld [vmem:[%s193 + $0x34] sm:$0xf]
        %v214 = vld [vmem:[%s193 + $0x38] sm:$0xf]
        %v215 = vld [vmem:[%s193 + $0x3c] sm:$0xf]
        %v216 = vld [vmem:[%s193 + $0x40] sm:$0xf]
        %v217 = vld [vmem:[%s193 + $0x44] sm:$0xf]
        %v218 = vld [vmem:[%s193 + $0x48] sm:$0xf]
        %v219 = vld [vmem:[%s193 + $0x4c] sm:$0xf]
        %v220 = vld [vmem:[%s193 + $0x50] sm:$0xf]
        %v221 = vld [vmem:[%s193 + $0x54] sm:$0xf]
        %v222 = vld [vmem:[%s193 + $0x58] sm:$0xf]
        %v223 = vld [vmem:[%s193 + $0x5c] sm:$0xf]
        %v224 = vld [vmem:[%s193 + $0x60] sm:$0xf]
        %v225 = vld [vmem:[%s193 + $0x64] sm:$0xf]
        %v226 = vld [vmem:[%s193 + $0x68] sm:$0xf]
        %v227 = vld [vmem:[%s193 + $0x6c] sm:$0xf]
        %v228 = vld [vmem:[%s193 + $0x70] sm:$0xf]
        %v229 = vld [vmem:[%s193 + $0x74] sm:$0xf]
        %v230 = vld [vmem:[%s193 + $0x78] sm:$0xf]
        %v231 = vld [vmem:[%s193 + $0x7c] sm:$0xf]
        %v232 = vld [vmem:[%s193 + $0x80] sm:$0xf]
        %v233 = vld [vmem:[%s193 + $0x84] sm:$0xf]
        %v234 = vld [vmem:[%s193 + $0x88] sm:$0xf]
        %v235 = vld [vmem:[%s193 + $0x8c] sm:$0xf]
        %v236 = vld [vmem:[%s193 + $0x90] sm:$0xf]
        %v237 = vld [vmem:[%s193 + $0x94] sm:$0xf]
        %v238 = vld [vmem:[%s193 + $0x98] sm:$0xf]
        %v239 = vld [vmem:[%s193 + $0x9c] sm:$0xf]
        %v240 = vld [vmem:[%s193 + $0xa0] sm:$0xf]
        %v241 = vld [vmem:[%s193 + $0xa4] sm:$0xf]
        %v242 = vld [vmem:[%s193 + $0xa8] sm:$0xf]
        %v243 = vld [vmem:[%s193 + $0xac] sm:$0xf]
        %v244 = vld [vmem:[%s193 + $0xb0] sm:$0xf]
        %v245 = vld [vmem:[%s193 + $0xb4] sm:$0xf]
        %v246 = vld [vmem:[%s193 + $0xb8] sm:$0xf]
        %v247 = vld [vmem:[%s193 + $0xbc] sm:$0xf]
        %v248 = vld [vmem:[%s193 + $0xc0] sm:$0xf]
        %v249 = vld [vmem:[%s193 + $0xc4] sm:$0xf]
        %v250 = vld [vmem:[%s193 + $0xc8] sm:$0xf]
        %v251 = vld [vmem:[%s193 + $0xcc] sm:$0xf]
        %v252 = vld [vmem:[%s193 + $0xd0] sm:$0xf]
        %v253 = vld [vmem:[%s193 + $0xd4] sm:$0xf]
        %v254 = vld [vmem:[%s193 + $0xd8] sm:$0xf]
        %v255 = vld [vmem:[%s193 + $0xdc] sm:$0xf]
        %v256 = vld [vmem:[%s193 + $0xe0] sm:$0xf]
        %v257 = vld [vmem:[%s193 + $0xe4] sm:$0xf]
        %v258 = vld [vmem:[%s193 + $0xe8] sm:$0xf]
        %v259 = vld [vmem:[%s193 + $0xec] sm:$0xf]
        %v260 = vld [vmem:[%s193 + $0xf0] sm:$0xf]
        %v261 = vld [vmem:[%s193 + $0xf4] sm:$0xf]
        %v262 = vld [vmem:[%s193 + $0xf8] sm:$0xf]
        %v263 = vld [vmem:[%s193 + $0xfc] sm:$0xf]
        %v264 = vld [vmem:[%s193 + $0x100] sm:$0xf]
        %v265 = vld [vmem:[%s193 + $0x104] sm:$0xf]
        %v266 = vld [vmem:[%s193 + $0x108] sm:$0xf]
        %v267 = vld [vmem:[%s193 + $0x10c] sm:$0xf]
        %v268 = vld [vmem:[%s193 + $0x110] sm:$0xf]
        %v269 = vld [vmem:[%s193 + $0x114] sm:$0xf]
        %v270 = vld [vmem:[%s193 + $0x118] sm:$0xf]
        %v271 = vld [vmem:[%s193 + $0x11c] sm:$0xf]
        %v272 = vld [vmem:[%s193 + $0x120] sm:$0xf]
        %v273 = vld [vmem:[%s193 + $0x124] sm:$0xf]
        %v274 = vld [vmem:[%s193 + $0x128] sm:$0xf]
        %v275 = vld [vmem:[%s193 + $0x12c] sm:$0xf]
        %v276 = vld [vmem:[%s193 + $0x130] sm:$0xf]
        %v277 = vld [vmem:[%s193 + $0x134] sm:$0xf]
        %v278 = vld [vmem:[%s193 + $0x138] sm:$0xf]
        %v279 = vld [vmem:[%s193 + $0x13c] sm:$0xf]
        %v280 = vld [vmem:[%s193 + $0x140] sm:$0xf]
        %v281 = vld [vmem:[%s193 + $0x144] sm:$0xf]
        %v282 = vld [vmem:[%s193 + $0x148] sm:$0xf]
        %v283 = vld [vmem:[%s193 + $0x14c] sm:$0xf]
        %v284 = vld [vmem:[%s193 + $0x150] sm:$0xf]
        %v285 = vld [vmem:[%s193 + $0x154] sm:$0xf]
        %v286 = vld [vmem:[%s193 + $0x158] sm:$0xf]
        %v287 = vld [vmem:[%s193 + $0x15c] sm:$0xf]
        %v288 = vld [vmem:[%s193 + $0x160] sm:$0xf]
        %v289 = vld [vmem:[%s193 + $0x164] sm:$0xf]
        %v290 = vld [vmem:[%s193 + $0x168] sm:$0xf]
        %v291 = vld [vmem:[%s193 + $0x16c] sm:$0xf]
        %v292 = vld [vmem:[%s193 + $0x170] sm:$0xf]
        %v293 = vld [vmem:[%s193 + $0x174] sm:$0xf]
        %v294 = vld [vmem:[%s193 + $0x178] sm:$0xf]
        %v295 = vld [vmem:[%s193 + $0x17c] sm:$0xf]
        %v296 = vld [vmem:[%s193 + $0x180] sm:$0xf]
        %v297 = vld [vmem:[%s193 + $0x184] sm:$0xf]
        %v298 = vld [vmem:[%s193 + $0x188] sm:$0xf]
        %v299 = vld [vmem:[%s193 + $0x18c] sm:$0xf]
        %v300 = vld [vmem:[%s193 + $0x190] sm:$0xf]
        %v301 = vld [vmem:[%s193 + $0x194] sm:$0xf]
        %v302 = vld [vmem:[%s193 + $0x198] sm:$0xf]
        %v303 = vld [vmem:[%s193 + $0x19c] sm:$0xf]
        %v304 = vld [vmem:[%s193 + $0x1a0] sm:$0xf]
        %v305 = vld [vmem:[%s193 + $0x1a4] sm:$0xf]
        %v306 = vld [vmem:[%s193 + $0x1a8] sm:$0xf]
        %v307 = vld [vmem:[%s193 + $0x1ac] sm:$0xf]
        %v308 = vld [vmem:[%s193 + $0x1b0] sm:$0xf]
        %v309 = vld [vmem:[%s193 + $0x1b4] sm:$0xf]
        %v310 = vld [vmem:[%s193 + $0x1b8] sm:$0xf]
        %v311 = vld [vmem:[%s193 + $0x1bc] sm:$0xf]
        %v312 = vld [vmem:[%s193 + $0x1c0] sm:$0x3]
        %v313 = vld [vmem:[#allocation2] sm:$0xf]
        %v314 = vld [vmem:[#allocation2 + $0x4] sm:$0xf]
        %v315 = vld [vmem:[#allocation2 + $0x8] sm:$0xf]
        %v316 = vld [vmem:[#allocation2 + $0xc] sm:$0x3]
        %v317 = vld [vmem:[#allocation4] sm:$0x1]
        %v319 = vlaneseq
        %v320 = vshrl.u32 %v319, 7
        %v321 = vsub.s32 0, %v320
        %v322 = vrot.slane %v317, %v321
        %v437 = vunpack.c.l.b16 %v200
        %v438 = vunpack.c.l.b16 %v201
        %v439 = vunpack.c.l.b16 %v202
        %v440 = vunpack.c.l.b16 %v203
        %v441 = vunpack.c.l.b16 %v204
        %v442 = vunpack.c.l.b16 %v205
        %v443 = vunpack.c.l.b16 %v206
        %v444 = vunpack.c.l.b16 %v207
        %v445 = vunpack.c.l.b16 %v208
        %v446 = vunpack.c.l.b16 %v209
        %v447 = vunpack.c.l.b16 %v210
        %v448 = vunpack.c.l.b16 %v211
        %v449 = vunpack.c.l.b16 %v212
        %v450 = vunpack.c.l.b16 %v213
        %v451 = vunpack.c.l.b16 %v214
        %v452 = vunpack.c.l.b16 %v215
        %v453 = vunpack.c.l.b16 %v216
        %v454 = vunpack.c.l.b16 %v217
        %v455 = vunpack.c.l.b16 %v218
        %v456 = vunpack.c.l.b16 %v219
        %v457 = vunpack.c.l.b16 %v220
        %v458 = vunpack.c.l.b16 %v221
        %v459 = vunpack.c.l.b16 %v222
        %v460 = vunpack.c.l.b16 %v223
        %v461 = vunpack.c.l.b16 %v224
        %v462 = vunpack.c.l.b16 %v225
        %v463 = vunpack.c.l.b16 %v226
        %v464 = vunpack.c.l.b16 %v227
        %v465 = vunpack.c.l.b16 %v228
        %v466 = vunpack.c.l.b16 %v229
        %v467 = vunpack.c.l.b16 %v230
        %v468 = vunpack.c.l.b16 %v231
        %v469 = vunpack.c.l.b16 %v232
        %v470 = vunpack.c.l.b16 %v233
        %v471 = vunpack.c.l.b16 %v234
        %v472 = vunpack.c.l.b16 %v235
        %v473 = vunpack.c.l.b16 %v236
        %v474 = vunpack.c.l.b16 %v237
        %v475 = vunpack.c.l.b16 %v238
        %v476 = vunpack.c.l.b16 %v239
        %v477 = vunpack.c.l.b16 %v240
        %v478 = vunpack.c.l.b16 %v241
        %v479 = vunpack.c.l.b16 %v242
        %v480 = vunpack.c.l.b16 %v243
        %v481 = vunpack.c.l.b16 %v244
        %v482 = vunpack.c.l.b16 %v245
        %v483 = vunpack.c.l.b16 %v246
        %v484 = vunpack.c.l.b16 %v247
        %v485 = vunpack.c.l.b16 %v248
        %v486 = vunpack.c.l.b16 %v249
        %v487 = vunpack.c.l.b16 %v250
        %v488 = vunpack.c.l.b16 %v251
        %v489 = vunpack.c.l.b16 %v252
        %v490 = vunpack.c.l.b16 %v253
        %v491 = vunpack.c.l.b16 %v254
        %v492 = vunpack.c.l.b16 %v255
        %v493 = vunpack.c.l.b16 %v256
        %v494 = vunpack.c.l.b16 %v257
        %v495 = vunpack.c.l.b16 %v258
        %v496 = vunpack.c.l.b16 %v259
        %v497 = vunpack.c.l.b16 %v260
        %v498 = vunpack.c.l.b16 %v261
        %v499 = vunpack.c.l.b16 %v262
        %v500 = vunpack.c.l.b16 %v263
        %v501 = vunpack.c.l.b16 %v264
        %v502 = vunpack.c.l.b16 %v265
        %v503 = vunpack.c.l.b16 %v266
        %v504 = vunpack.c.l.b16 %v267
        %v505 = vunpack.c.l.b16 %v268
        %v506 = vunpack.c.l.b16 %v269
        %v507 = vunpack.c.l.b16 %v270
        %v508 = vunpack.c.l.b16 %v271
        %v509 = vunpack.c.l.b16 %v272
        %v510 = vunpack.c.l.b16 %v273
        %v511 = vunpack.c.l.b16 %v274
        %v512 = vunpack.c.l.b16 %v275
        %v513 = vunpack.c.l.b16 %v276
        %v514 = vunpack.c.l.b16 %v277
        %v515 = vunpack.c.l.b16 %v278
        %v516 = vunpack.c.l.b16 %v279
        %v517 = vunpack.c.l.b16 %v280
        %v518 = vunpack.c.l.b16 %v281
        %v519 = vunpack.c.l.b16 %v282
        %v520 = vunpack.c.l.b16 %v283
        %v521 = vunpack.c.l.b16 %v284
        %v522 = vunpack.c.l.b16 %v285
        %v523 = vunpack.c.l.b16 %v286
        %v524 = vunpack.c.l.b16 %v287
        %v525 = vunpack.c.l.b16 %v288
        %v526 = vunpack.c.l.b16 %v289
        %v527 = vunpack.c.l.b16 %v290
        %v528 = vunpack.c.l.b16 %v291
        %v529 = vunpack.c.l.b16 %v292
        %v530 = vunpack.c.l.b16 %v293
        %v531 = vunpack.c.l.b16 %v294
        %v532 = vunpack.c.l.b16 %v295
        %v533 = vunpack.c.l.b16 %v296
        %v534 = vunpack.c.l.b16 %v297
        %v535 = vunpack.c.l.b16 %v298
        %v536 = vunpack.c.l.b16 %v299
        %v537 = vunpack.c.l.b16 %v300
        %v538 = vunpack.c.l.b16 %v301
        %v539 = vunpack.c.l.b16 %v302
        %v540 = vunpack.c.l.b16 %v303
        %v541 = vunpack.c.l.b16 %v304
        %v542 = vunpack.c.l.b16 %v305
        %v543 = vunpack.c.l.b16 %v306
        %v544 = vunpack.c.l.b16 %v307
        %v545 = vunpack.c.l.b16 %v308
        %v546 = vunpack.c.l.b16 %v309
        %v547 = vunpack.c.l.b16 %v310
        %v548 = vunpack.c.l.b16 %v311
        %v549 = vunpack.c.l.b16 %v312
        %v550 = vpack.c.b16 %v438, %v437
        %v551 = vpack.c.b16 %v440, %v439
        %v552 = vpack.c.b16 %v442, %v441
        %v553 = vpack.c.b16 %v444, %v443
        %v554 = vpack.c.b16 %v446, %v445
        %v555 = vpack.c.b16 %v448, %v447
        %v556 = vpack.c.b16 %v450, %v449
        %v557 = vpack.c.b16 %v452, %v451
        %v558 = vpack.c.b16 %v454, %v453
        %v559 = vpack.c.b16 %v456, %v455
        %v560 = vpack.c.b16 %v458, %v457
        %v561 = vpack.c.b16 %v460, %v459
        %v562 = vpack.c.b16 %v462, %v461
        %v563 = vpack.c.b16 %v464, %v463
        %v564 = vpack.c.b16 %v466, %v465
        %v565 = vpack.c.b16 %v468, %v467
        %v566 = vpack.c.b16 %v470, %v469
        %v567 = vpack.c.b16 %v472, %v471
        %v568 = vpack.c.b16 %v474, %v473
        %v569 = vpack.c.b16 %v476, %v475
        %v570 = vpack.c.b16 %v478, %v477
        %v571 = vpack.c.b16 %v480, %v479
        %v572 = vpack.c.b16 %v482, %v481
        %v573 = vpack.c.b16 %v484, %v483
        %v574 = vpack.c.b16 %v486, %v485
        %v575 = vpack.c.b16 %v488, %v487
        %v576 = vpack.c.b16 %v490, %v489
        %v577 = vpack.c.b16 %v492, %v491
        %v578 = vpack.c.b16 %v494, %v493
        %v579 = vpack.c.b16 %v496, %v495
        %v580 = vpack.c.b16 %v498, %v497
        %v581 = vpack.c.b16 %v500, %v499
        %v582 = vpack.c.b16 %v502, %v501
        %v583 = vpack.c.b16 %v504, %v503
        %v584 = vpack.c.b16 %v506, %v505
        %v585 = vpack.c.b16 %v508, %v507
        %v586 = vpack.c.b16 %v510, %v509
        %v587 = vpack.c.b16 %v512, %v511
        %v588 = vpack.c.b16 %v514, %v513
        %v589 = vpack.c.b16 %v516, %v515
        %v590 = vpack.c.b16 %v518, %v517
        %v591 = vpack.c.b16 %v520, %v519
        %v592 = vpack.c.b16 %v522, %v521
        %v593 = vpack.c.b16 %v524, %v523
        %v594 = vpack.c.b16 %v526, %v525
        %v595 = vpack.c.b16 %v528, %v527
        %v596 = vpack.c.b16 %v530, %v529
        %v597 = vpack.c.b16 %v532, %v531
        %v598 = vpack.c.b16 %v534, %v533
        %v599 = vpack.c.b16 %v536, %v535
        %v600 = vpack.c.b16 %v538, %v537
        %v601 = vpack.c.b16 %v540, %v539
        %v602 = vpack.c.b16 %v542, %v541
        %v603 = vpack.c.b16 %v544, %v543
        %v604 = vpack.c.b16 %v546, %v545
        %v605 = vpack.c.b16 %v548, %v547
        %v606 = vpack.c.b16 %v549, %v549
        %v611 = vunpack.c.l.b16 %v313
        %v612 = vunpack.c.l.b16 %v314
        %v613 = vunpack.c.l.b16 %v315
        %v614 = vunpack.c.l.b16 %v316
        %v615 = vpack.c.b16 %v612, %v611
        %v616 = vpack.c.b16 %v614, %v613
        %vm618 = vcmask 220160
        %v620 = vsel %vm618, %v550, 0
        %v623 = vsel %vm618, %v551, 0
        %v626 = vsel %vm618, %v552, 0
        %v629 = vsel %vm618, %v553, 0
        %v632 = vsel %vm618, %v554, 0
        %v635 = vsel %vm618, %v555, 0
        %v638 = vsel %vm618, %v556, 0
        %v641 = vsel %vm618, %v557, 0
        %v644 = vsel %vm618, %v558, 0
        %v647 = vsel %vm618, %v559, 0
        %v650 = vsel %vm618, %v560, 0
        %v653 = vsel %vm618, %v561, 0
        %v656 = vsel %vm618, %v562, 0
        %v659 = vsel %vm618, %v563, 0
        %v662 = vsel %vm618, %v564, 0
        %v665 = vsel %vm618, %v565, 0
        %v668 = vsel %vm618, %v566, 0
        %v671 = vsel %vm618, %v567, 0
        %v674 = vsel %vm618, %v568, 0
        %v677 = vsel %vm618, %v569, 0
        %v680 = vsel %vm618, %v570, 0
        %v683 = vsel %vm618, %v571, 0
        %v686 = vsel %vm618, %v572, 0
        %v689 = vsel %vm618, %v573, 0
        %v692 = vsel %vm618, %v574, 0
        %v695 = vsel %vm618, %v575, 0
        %v698 = vsel %vm618, %v576, 0
        %v701 = vsel %vm618, %v577, 0
        %v704 = vsel %vm618, %v578, 0
        %v707 = vsel %vm618, %v579, 0
        %v710 = vsel %vm618, %v580, 0
        %v713 = vsel %vm618, %v581, 0
        %v716 = vsel %vm618, %v582, 0
        %v719 = vsel %vm618, %v583, 0
        %v722 = vsel %vm618, %v584, 0
        %v725 = vsel %vm618, %v585, 0
        %v728 = vsel %vm618, %v586, 0
        %v731 = vsel %vm618, %v587, 0
        %v734 = vsel %vm618, %v588, 0
        %v737 = vsel %vm618, %v589, 0
        %v740 = vsel %vm618, %v590, 0
        %v743 = vsel %vm618, %v591, 0
        %v746 = vsel %vm618, %v592, 0
        %v749 = vsel %vm618, %v593, 0
        %v752 = vsel %vm618, %v594, 0
        %v755 = vsel %vm618, %v595, 0
        %v758 = vsel %vm618, %v596, 0
        %v761 = vsel %vm618, %v597, 0
        %v764 = vsel %vm618, %v598, 0
        %v767 = vsel %vm618, %v599, 0
        %v770 = vsel %vm618, %v600, 0
        %v773 = vsel %vm618, %v601, 0
        %v776 = vsel %vm618, %v602, 0
        %v779 = vsel %vm618, %v603, 0
        %v782 = vsel %vm618, %v604, 0
        %v785 = vsel %vm618, %v605, 0
        %v788 = vsel %vm618, %v606, 0
        %vm790 = vcmask 1044480
        %vm791 = vcmask 1045504
        %v792 = vsel %vm790, 4294967295, 65535
        %v793 = vsel %vm791, %v792, 0
        %v795 = vand.u32 %v616, %v793
        %797 = vmatprep.subr.bf16.mxu0 0
        %798 = vmatpush1.bf16.msra.mxu0 0
        %799 = vmatprep.subr.bf16.mxu0 0
        %800 = vmatpush1.bf16.msra.mxu0 0
        %801 = vmatprep.subr.bf16.mxu0 0
        %802 = vmatpush1.bf16.msra.mxu0 0
        %803 = vmatprep.subr.bf16.mxu0 0
        %804 = vmatpush1.bf16.msra.mxu0 0
        %805 = vmatprep.subr.bf16.mxu0 0
        %806 = vmatpush1.bf16.msra.mxu0 0
        %807 = vmatprep.subr.bf16.mxu0 0
        %808 = vmatpush1.bf16.msra.mxu0 0
        %809 = vmatprep.subr.bf16.mxu0 0
        %810 = vmatpush1.bf16.msra.mxu0 %v795
        %811 = vmatprep.subr.bf16.mxu0 0
        %812 = vmatpush1.bf16.msra.mxu0 %v615
        %813 = vmatprep.subr.bf16.mxu0 0
        %814 = vmatpush2.bf16.msra.mxu0 0
        %815 = vmatprep.subr.bf16.mxu0 0
        %816 = vmatpush2.bf16.msra.mxu0 0
        %817 = vmatprep.subr.bf16.mxu0 0
        %818 = vmatpush2.bf16.msra.mxu0 0
        %819 = vmatprep.subr.bf16.mxu0 0
        %820 = vmatpush2.bf16.msra.mxu0 0
        %821 = vmatprep.subr.bf16.mxu0 0
        %822 = vmatpush2.bf16.msra.mxu0 0
        %823 = vmatprep.subr.bf16.mxu0 0
        %824 = vmatpush2.bf16.msra.mxu0 0
        %825 = vmatprep.subr.bf16.mxu0 0
        %826 = vmatpush2.bf16.msra.mxu0 0
        %827 = vmatprep.subr.bf16.mxu0 0
        %828 = vmatpush2.bf16.msra.mxu0 0
        %829 = vmatprep.mubr.bf16.mxu0 0
        %830 = vmatmul.mubr.bf16.gmra.mxu0 %v620
        %v831 = vpop.f32.mrf.mxu0
        %v832 = vadd.f32 %v322, %v831
        %v833 = vpop.f32.mrf.mxu0
        %v834 = vpop.f32.mrf.mxu0
        %v835 = vadd.f32 %v322, %v834
        %v836 = vpop.f32.mrf.mxu0
        %837 = vmatprep.mubr.bf16.mxu0 0
        %838 = vmatmul.mubr.bf16.gmra.mxu0 %v623
        %v839 = vpop.f32.mrf.mxu0
        %v840 = vadd.f32 %v322, %v839
        %v841 = vpop.f32.mrf.mxu0
        %v842 = vpop.f32.mrf.mxu0
        %v843 = vadd.f32 %v322, %v842
        %v844 = vpop.f32.mrf.mxu0
        %845 = vmatprep.mubr.bf16.mxu0 0
        %846 = vmatmul.mubr.bf16.gmra.mxu0 %v626
        %v847 = vpop.f32.mrf.mxu0
        %v848 = vadd.f32 %v322, %v847
        %v849 = vpop.f32.mrf.mxu0
        %v850 = vpop.f32.mrf.mxu0
        %v851 = vadd.f32 %v322, %v850
        %v852 = vpop.f32.mrf.mxu0
        %853 = vmatprep.mubr.bf16.mxu0 0
        %854 = vmatmul.mubr.bf16.gmra.mxu0 %v629
        %v855 = vpop.f32.mrf.mxu0
        %v856 = vadd.f32 %v322, %v855
        %v857 = vpop.f32.mrf.mxu0
        %v858 = vpop.f32.mrf.mxu0
        %v859 = vadd.f32 %v322, %v858
        %v860 = vpop.f32.mrf.mxu0
        %861 = vmatprep.mubr.bf16.mxu0 0
        %862 = vmatmul.mubr.bf16.gmra.mxu0 %v632
        %v863 = vpop.f32.mrf.mxu0
        %v864 = vadd.f32 %v322, %v863
        %v865 = vpop.f32.mrf.mxu0
        %v866 = vpop.f32.mrf.mxu0
        %v867 = vadd.f32 %v322, %v866
        %v868 = vpop.f32.mrf.mxu0
        %869 = vmatprep.mubr.bf16.mxu0 0
        %870 = vmatmul.mubr.bf16.gmra.mxu0 %v635
        %v871 = vpop.f32.mrf.mxu0
        %v872 = vadd.f32 %v322, %v871
        %v873 = vpop.f32.mrf.mxu0
        %v874 = vpop.f32.mrf.mxu0
        %v875 = vadd.f32 %v322, %v874
        %v876 = vpop.f32.mrf.mxu0
        %877 = vmatprep.mubr.bf16.mxu0 0
        %878 = vmatmul.mubr.bf16.gmra.mxu0 %v638
        %v879 = vpop.f32.mrf.mxu0
        %v880 = vadd.f32 %v322, %v879
        %v881 = vpop.f32.mrf.mxu0
        %v882 = vpop.f32.mrf.mxu0
        %v883 = vadd.f32 %v322, %v882
        %v884 = vpop.f32.mrf.mxu0
        %885 = vmatprep.mubr.bf16.mxu0 0
        %886 = vmatmul.mubr.bf16.gmra.mxu0 %v641
        %v887 = vpop.f32.mrf.mxu0
        %v888 = vadd.f32 %v322, %v887
        %v889 = vpop.f32.mrf.mxu0
        %v890 = vpop.f32.mrf.mxu0
        %v891 = vadd.f32 %v322, %v890
        %v892 = vpop.f32.mrf.mxu0
        %893 = vmatprep.mubr.bf16.mxu0 0
        %894 = vmatmul.mubr.bf16.gmra.mxu0 %v644
        %v895 = vpop.f32.mrf.mxu0
        %v896 = vadd.f32 %v322, %v895
        %v897 = vpop.f32.mrf.mxu0
        %v898 = vpop.f32.mrf.mxu0
        %v899 = vadd.f32 %v322, %v898
        %v900 = vpop.f32.mrf.mxu0
        %901 = vmatprep.mubr.bf16.mxu0 0
        %902 = vmatmul.mubr.bf16.gmra.mxu0 %v647
        %v903 = vpop.f32.mrf.mxu0
        %v904 = vadd.f32 %v322, %v903
        %v905 = vpop.f32.mrf.mxu0
        %v906 = vpop.f32.mrf.mxu0
        %v907 = vadd.f32 %v322, %v906
        %v908 = vpop.f32.mrf.mxu0
        %909 = vmatprep.mubr.bf16.mxu0 0
        %910 = vmatmul.mubr.bf16.gmra.mxu0 %v650
        %v911 = vpop.f32.mrf.mxu0
        %v912 = vadd.f32 %v322, %v911
        %v913 = vpop.f32.mrf.mxu0
        %v914 = vpop.f32.mrf.mxu0
        %v915 = vadd.f32 %v322, %v914
        %v916 = vpop.f32.mrf.mxu0
        %917 = vmatprep.mubr.bf16.mxu0 0
        %918 = vmatmul.mubr.bf16.gmra.mxu0 %v653
        %v919 = vpop.f32.mrf.mxu0
        %v920 = vadd.f32 %v322, %v919
        %v921 = vpop.f32.mrf.mxu0
        %v922 = vpop.f32.mrf.mxu0
        %v923 = vadd.f32 %v322, %v922
        %v924 = vpop.f32.mrf.mxu0
        %925 = vmatprep.mubr.bf16.mxu0 0
        %926 = vmatmul.mubr.bf16.gmra.mxu0 %v656
        %v927 = vpop.f32.mrf.mxu0
        %v928 = vadd.f32 %v322, %v927
        %v929 = vpop.f32.mrf.mxu0
        %v930 = vpop.f32.mrf.mxu0
        %v931 = vadd.f32 %v322, %v930
        %v932 = vpop.f32.mrf.mxu0
        %933 = vmatprep.mubr.bf16.mxu0 0
        %934 = vmatmul.mubr.bf16.gmra.mxu0 %v659
        %v935 = vpop.f32.mrf.mxu0
        %v936 = vadd.f32 %v322, %v935
        %v937 = vpop.f32.mrf.mxu0
        %v938 = vpop.f32.mrf.mxu0
        %v939 = vadd.f32 %v322, %v938
        %v940 = vpop.f32.mrf.mxu0
        %941 = vmatprep.mubr.bf16.mxu0 0
        %942 = vmatmul.mubr.bf16.gmra.mxu0 %v662
        %v943 = vpop.f32.mrf.mxu0
        %v944 = vadd.f32 %v322, %v943
        %v945 = vpop.f32.mrf.mxu0
        %v946 = vpop.f32.mrf.mxu0
        %v947 = vadd.f32 %v322, %v946
        %v948 = vpop.f32.mrf.mxu0
        %949 = vmatprep.mubr.bf16.mxu0 0
        %950 = vmatmul.mubr.bf16.gmra.mxu0 %v665
        %v951 = vpop.f32.mrf.mxu0
        %v952 = vadd.f32 %v322, %v951
        %v953 = vpop.f32.mrf.mxu0
        %v954 = vpop.f32.mrf.mxu0
        %v955 = vadd.f32 %v322, %v954
        %v956 = vpop.f32.mrf.mxu0
        %957 = vmatprep.mubr.bf16.mxu0 0
        %958 = vmatmul.mubr.bf16.gmra.mxu0 %v668
        %v959 = vpop.f32.mrf.mxu0
        %v960 = vadd.f32 %v322, %v959
        %v961 = vpop.f32.mrf.mxu0
        %v962 = vpop.f32.mrf.mxu0
        %v963 = vadd.f32 %v322, %v962
        %v964 = vpop.f32.mrf.mxu0
        %965 = vmatprep.mubr.bf16.mxu0 0
        %966 = vmatmul.mubr.bf16.gmra.mxu0 %v671
        %v967 = vpop.f32.mrf.mxu0
        %v968 = vadd.f32 %v322, %v967
        %v969 = vpop.f32.mrf.mxu0
        %v970 = vpop.f32.mrf.mxu0
        %v971 = vadd.f32 %v322, %v970
        %v972 = vpop.f32.mrf.mxu0
        %973 = vmatprep.mubr.bf16.mxu0 0
        %974 = vmatmul.mubr.bf16.gmra.mxu0 %v674
        %v975 = vpop.f32.mrf.mxu0
        %v976 = vadd.f32 %v322, %v975
        %v977 = vpop.f32.mrf.mxu0
        %v978 = vpop.f32.mrf.mxu0
        %v979 = vadd.f32 %v322, %v978
        %v980 = vpop.f32.mrf.mxu0
        %981 = vmatprep.mubr.bf16.mxu0 0
        %982 = vmatmul.mubr.bf16.gmra.mxu0 %v677
        %v983 = vpop.f32.mrf.mxu0
        %v984 = vadd.f32 %v322, %v983
        %v985 = vpop.f32.mrf.mxu0
        %v986 = vpop.f32.mrf.mxu0
        %v987 = vadd.f32 %v322, %v986
        %v988 = vpop.f32.mrf.mxu0
        %989 = vmatprep.mubr.bf16.mxu0 0
        %990 = vmatmul.mubr.bf16.gmra.mxu0 %v680
        %v991 = vpop.f32.mrf.mxu0
        %v992 = vadd.f32 %v322, %v991
        %v993 = vpop.f32.mrf.mxu0
        %v994 = vpop.f32.mrf.mxu0
        %v995 = vadd.f32 %v322, %v994
        %v996 = vpop.f32.mrf.mxu0
        %997 = vmatprep.mubr.bf16.mxu0 0
        %998 = vmatmul.mubr.bf16.gmra.mxu0 %v683
        %v999 = vpop.f32.mrf.mxu0
        %v1000 = vadd.f32 %v322, %v999
        %v1001 = vpop.f32.mrf.mxu0
        %v1002 = vpop.f32.mrf.mxu0
        %v1003 = vadd.f32 %v322, %v1002
        %v1004 = vpop.f32.mrf.mxu0
        %1005 = vmatprep.mubr.bf16.mxu0 0
        %1006 = vmatmul.mubr.bf16.gmra.mxu0 %v686
        %v1007 = vpop.f32.mrf.mxu0
        %v1008 = vadd.f32 %v322, %v1007
        %v1009 = vpop.f32.mrf.mxu0
        %v1010 = vpop.f32.mrf.mxu0
        %v1011 = vadd.f32 %v322, %v1010
        %v1012 = vpop.f32.mrf.mxu0
        %1013 = vmatprep.mubr.bf16.mxu0 0
        %1014 = vmatmul.mubr.bf16.gmra.mxu0 %v689
        %v1015 = vpop.f32.mrf.mxu0
        %v1016 = vadd.f32 %v322, %v1015
        %v1017 = vpop.f32.mrf.mxu0
        %v1018 = vpop.f32.mrf.mxu0
        %v1019 = vadd.f32 %v322, %v1018
        %v1020 = vpop.f32.mrf.mxu0
        %1021 = vmatprep.mubr.bf16.mxu0 0
        %1022 = vmatmul.mubr.bf16.gmra.mxu0 %v692
        %v1023 = vpop.f32.mrf.mxu0
        %v1024 = vadd.f32 %v322, %v1023
        %v1025 = vpop.f32.mrf.mxu0
        %v1026 = vpop.f32.mrf.mxu0
        %v1027 = vadd.f32 %v322, %v1026
        %v1028 = vpop.f32.mrf.mxu0
        %1029 = vmatprep.mubr.bf16.mxu0 0
        %1030 = vmatmul.mubr.bf16.gmra.mxu0 %v695
        %v1031 = vpop.f32.mrf.mxu0
        %v1032 = vadd.f32 %v322, %v1031
        %v1033 = vpop.f32.mrf.mxu0
        %v1034 = vpop.f32.mrf.mxu0
        %v1035 = vadd.f32 %v322, %v1034
        %v1036 = vpop.f32.mrf.mxu0
        %1037 = vmatprep.mubr.bf16.mxu0 0
        %1038 = vmatmul.mubr.bf16.gmra.mxu0 %v698
        %v1039 = vpop.f32.mrf.mxu0
        %v1040 = vadd.f32 %v322, %v1039
        %v1041 = vpop.f32.mrf.mxu0
        %v1042 = vpop.f32.mrf.mxu0
        %v1043 = vadd.f32 %v322, %v1042
        %v1044 = vpop.f32.mrf.mxu0
        %1045 = vmatprep.mubr.bf16.mxu0 0
        %1046 = vmatmul.mubr.bf16.gmra.mxu0 %v701
        %v1047 = vpop.f32.mrf.mxu0
        %v1048 = vadd.f32 %v322, %v1047
        %v1049 = vpop.f32.mrf.mxu0
        %v1050 = vpop.f32.mrf.mxu0
        %v1051 = vadd.f32 %v322, %v1050
        %v1052 = vpop.f32.mrf.mxu0
        %1053 = vmatprep.mubr.bf16.mxu0 0
        %1054 = vmatmul.mubr.bf16.gmra.mxu0 %v704
        %v1055 = vpop.f32.mrf.mxu0
        %v1056 = vadd.f32 %v322, %v1055
        %v1057 = vpop.f32.mrf.mxu0
        %v1058 = vpop.f32.mrf.mxu0
        %v1059 = vadd.f32 %v322, %v1058
        %v1060 = vpop.f32.mrf.mxu0
        %1061 = vmatprep.mubr.bf16.mxu0 0
        %1062 = vmatmul.mubr.bf16.gmra.mxu0 %v707
        %v1063 = vpop.f32.mrf.mxu0
        %v1064 = vadd.f32 %v322, %v1063
        %v1065 = vpop.f32.mrf.mxu0
        %v1066 = vpop.f32.mrf.mxu0
        %v1067 = vadd.f32 %v322, %v1066
        %v1068 = vpop.f32.mrf.mxu0
        %1069 = vmatprep.mubr.bf16.mxu0 0
        %1070 = vmatmul.mubr.bf16.gmra.mxu0 %v710
        %v1071 = vpop.f32.mrf.mxu0
        %v1072 = vadd.f32 %v322, %v1071
        %v1073 = vpop.f32.mrf.mxu0
        %v1074 = vpop.f32.mrf.mxu0
        %v1075 = vadd.f32 %v322, %v1074
        %v1076 = vpop.f32.mrf.mxu0
        %1077 = vmatprep.mubr.bf16.mxu0 0
        %1078 = vmatmul.mubr.bf16.gmra.mxu0 %v713
        %v1079 = vpop.f32.mrf.mxu0
        %v1080 = vadd.f32 %v322, %v1079
        %v1081 = vpop.f32.mrf.mxu0
        %v1082 = vpop.f32.mrf.mxu0
        %v1083 = vadd.f32 %v322, %v1082
        %v1084 = vpop.f32.mrf.mxu0
        %1085 = vmatprep.mubr.bf16.mxu0 0
        %1086 = vmatmul.mubr.bf16.gmra.mxu0 %v716
        %v1087 = vpop.f32.mrf.mxu0
        %v1088 = vadd.f32 %v322, %v1087
        %v1089 = vpop.f32.mrf.mxu0
        %v1090 = vpop.f32.mrf.mxu0
        %v1091 = vadd.f32 %v322, %v1090
        %v1092 = vpop.f32.mrf.mxu0
        %1093 = vmatprep.mubr.bf16.mxu0 0
        %1094 = vmatmul.mubr.bf16.gmra.mxu0 %v719
        %v1095 = vpop.f32.mrf.mxu0
        %v1096 = vadd.f32 %v322, %v1095
        %v1097 = vpop.f32.mrf.mxu0
        %v1098 = vpop.f32.mrf.mxu0
        %v1099 = vadd.f32 %v322, %v1098
        %v1100 = vpop.f32.mrf.mxu0
        %1101 = vmatprep.mubr.bf16.mxu0 0
        %1102 = vmatmul.mubr.bf16.gmra.mxu0 %v722
        %v1103 = vpop.f32.mrf.mxu0
        %v1104 = vadd.f32 %v322, %v1103
        %v1105 = vpop.f32.mrf.mxu0
        %v1106 = vpop.f32.mrf.mxu0
        %v1107 = vadd.f32 %v322, %v1106
        %v1108 = vpop.f32.mrf.mxu0
        %1109 = vmatprep.mubr.bf16.mxu0 0
        %1110 = vmatmul.mubr.bf16.gmra.mxu0 %v725
        %v1111 = vpop.f32.mrf.mxu0
        %v1112 = vadd.f32 %v322, %v1111
        %v1113 = vpop.f32.mrf.mxu0
        %v1114 = vpop.f32.mrf.mxu0
        %v1115 = vadd.f32 %v322, %v1114
        %v1116 = vpop.f32.mrf.mxu0
        %1117 = vmatprep.mubr.bf16.mxu0 0
        %1118 = vmatmul.mubr.bf16.gmra.mxu0 %v728
        %v1119 = vpop.f32.mrf.mxu0
        %v1120 = vadd.f32 %v322, %v1119
        %v1121 = vpop.f32.mrf.mxu0
        %v1122 = vpop.f32.mrf.mxu0
        %v1123 = vadd.f32 %v322, %v1122
        %v1124 = vpop.f32.mrf.mxu0
        %1125 = vmatprep.mubr.bf16.mxu0 0
        %1126 = vmatmul.mubr.bf16.gmra.mxu0 %v731
        %v1127 = vpop.f32.mrf.mxu0
        %v1128 = vadd.f32 %v322, %v1127
        %v1129 = vpop.f32.mrf.mxu0
        %v1130 = vpop.f32.mrf.mxu0
        %v1131 = vadd.f32 %v322, %v1130
        %v1132 = vpop.f32.mrf.mxu0
        %1133 = vmatprep.mubr.bf16.mxu0 0
        %1134 = vmatmul.mubr.bf16.gmra.mxu0 %v734
        %v1135 = vpop.f32.mrf.mxu0
        %v1136 = vadd.f32 %v322, %v1135
        %v1137 = vpop.f32.mrf.mxu0
        %v1138 = vpop.f32.mrf.mxu0
        %v1139 = vadd.f32 %v322, %v1138
        %v1140 = vpop.f32.mrf.mxu0
        %1141 = vmatprep.mubr.bf16.mxu0 0
        %1142 = vmatmul.mubr.bf16.gmra.mxu0 %v737
        %v1143 = vpop.f32.mrf.mxu0
        %v1144 = vadd.f32 %v322, %v1143
        %v1145 = vpop.f32.mrf.mxu0
        %v1146 = vpop.f32.mrf.mxu0
        %v1147 = vadd.f32 %v322, %v1146
        %v1148 = vpop.f32.mrf.mxu0
        %1149 = vmatprep.mubr.bf16.mxu0 0
        %1150 = vmatmul.mubr.bf16.gmra.mxu0 %v740
        %v1151 = vpop.f32.mrf.mxu0
        %v1152 = vadd.f32 %v322, %v1151
        %v1153 = vpop.f32.mrf.mxu0
        %v1154 = vpop.f32.mrf.mxu0
        %v1155 = vadd.f32 %v322, %v1154
        %v1156 = vpop.f32.mrf.mxu0
        %1157 = vmatprep.mubr.bf16.mxu0 0
        %1158 = vmatmul.mubr.bf16.gmra.mxu0 %v743
        %v1159 = vpop.f32.mrf.mxu0
        %v1160 = vadd.f32 %v322, %v1159
        %v1161 = vpop.f32.mrf.mxu0
        %v1162 = vpop.f32.mrf.mxu0
        %v1163 = vadd.f32 %v322, %v1162
        %v1164 = vpop.f32.mrf.mxu0
        %1165 = vmatprep.mubr.bf16.mxu0 0
        %1166 = vmatmul.mubr.bf16.gmra.mxu0 %v746
        %v1167 = vpop.f32.mrf.mxu0
        %v1168 = vadd.f32 %v322, %v1167
        %v1169 = vpop.f32.mrf.mxu0
        %v1170 = vpop.f32.mrf.mxu0
        %v1171 = vadd.f32 %v322, %v1170
        %v1172 = vpop.f32.mrf.mxu0
        %1173 = vmatprep.mubr.bf16.mxu0 0
        %1174 = vmatmul.mubr.bf16.gmra.mxu0 %v749
        %v1175 = vpop.f32.mrf.mxu0
        %v1176 = vadd.f32 %v322, %v1175
        %v1177 = vpop.f32.mrf.mxu0
        %v1178 = vpop.f32.mrf.mxu0
        %v1179 = vadd.f32 %v322, %v1178
        %v1180 = vpop.f32.mrf.mxu0
        %1181 = vmatprep.mubr.bf16.mxu0 0
        %1182 = vmatmul.mubr.bf16.gmra.mxu0 %v752
        %v1183 = vpop.f32.mrf.mxu0
        %v1184 = vadd.f32 %v322, %v1183
        %v1185 = vpop.f32.mrf.mxu0
        %v1186 = vpop.f32.mrf.mxu0
        %v1187 = vadd.f32 %v322, %v1186
        %v1188 = vpop.f32.mrf.mxu0
        %1189 = vmatprep.mubr.bf16.mxu0 0
        %1190 = vmatmul.mubr.bf16.gmra.mxu0 %v755
        %v1191 = vpop.f32.mrf.mxu0
        %v1192 = vadd.f32 %v322, %v1191
        %v1193 = vpop.f32.mrf.mxu0
        %v1194 = vpop.f32.mrf.mxu0
        %v1195 = vadd.f32 %v322, %v1194
        %v1196 = vpop.f32.mrf.mxu0
        %1197 = vmatprep.mubr.bf16.mxu0 0
        %1198 = vmatmul.mubr.bf16.gmra.mxu0 %v758
        %v1199 = vpop.f32.mrf.mxu0
        %v1200 = vadd.f32 %v322, %v1199
        %v1201 = vpop.f32.mrf.mxu0
        %v1202 = vpop.f32.mrf.mxu0
        %v1203 = vadd.f32 %v322, %v1202
        %v1204 = vpop.f32.mrf.mxu0
        %1205 = vmatprep.mubr.bf16.mxu0 0
        %1206 = vmatmul.mubr.bf16.gmra.mxu0 %v761
        %v1207 = vpop.f32.mrf.mxu0
        %v1208 = vadd.f32 %v322, %v1207
        %v1209 = vpop.f32.mrf.mxu0
        %v1210 = vpop.f32.mrf.mxu0
        %v1211 = vadd.f32 %v322, %v1210
        %v1212 = vpop.f32.mrf.mxu0
        %1213 = vmatprep.mubr.bf16.mxu0 0
        %1214 = vmatmul.mubr.bf16.gmra.mxu0 %v764
        %v1215 = vpop.f32.mrf.mxu0
        %v1216 = vadd.f32 %v322, %v1215
        %v1217 = vpop.f32.mrf.mxu0
        %v1218 = vpop.f32.mrf.mxu0
        %v1219 = vadd.f32 %v322, %v1218
        %v1220 = vpop.f32.mrf.mxu0
        %1221 = vmatprep.mubr.bf16.mxu0 0
        %1222 = vmatmul.mubr.bf16.gmra.mxu0 %v767
        %v1223 = vpop.f32.mrf.mxu0
        %v1224 = vadd.f32 %v322, %v1223
        %v1225 = vpop.f32.mrf.mxu0
        %v1226 = vpop.f32.mrf.mxu0
        %v1227 = vadd.f32 %v322, %v1226
        %v1228 = vpop.f32.mrf.mxu0
        %1229 = vmatprep.mubr.bf16.mxu0 0
        %1230 = vmatmul.mubr.bf16.gmra.mxu0 %v770
        %v1231 = vpop.f32.mrf.mxu0
        %v1232 = vadd.f32 %v322, %v1231
        %v1233 = vpop.f32.mrf.mxu0
        %v1234 = vpop.f32.mrf.mxu0
        %v1235 = vadd.f32 %v322, %v1234
        %v1236 = vpop.f32.mrf.mxu0
        %1237 = vmatprep.mubr.bf16.mxu0 0
        %1238 = vmatmul.mubr.bf16.gmra.mxu0 %v773
        %v1239 = vpop.f32.mrf.mxu0
        %v1240 = vadd.f32 %v322, %v1239
        %v1241 = vpop.f32.mrf.mxu0
        %v1242 = vpop.f32.mrf.mxu0
        %v1243 = vadd.f32 %v322, %v1242
        %v1244 = vpop.f32.mrf.mxu0
        %1245 = vmatprep.mubr.bf16.mxu0 0
        %1246 = vmatmul.mubr.bf16.gmra.mxu0 %v776
        %v1247 = vpop.f32.mrf.mxu0
        %v1248 = vadd.f32 %v322, %v1247
        %v1249 = vpop.f32.mrf.mxu0
        %v1250 = vpop.f32.mrf.mxu0
        %v1251 = vadd.f32 %v322, %v1250
        %v1252 = vpop.f32.mrf.mxu0
        %1253 = vmatprep.mubr.bf16.mxu0 0
        %1254 = vmatmul.mubr.bf16.gmra.mxu0 %v779
        %v1255 = vpop.f32.mrf.mxu0
        %v1256 = vadd.f32 %v322, %v1255
        %v1257 = vpop.f32.mrf.mxu0
        %v1258 = vpop.f32.mrf.mxu0
        %v1259 = vadd.f32 %v322, %v1258
        %v1260 = vpop.f32.mrf.mxu0
        %1261 = vmatprep.mubr.bf16.mxu0 0
        %1262 = vmatmul.mubr.bf16.gmra.mxu0 %v782
        %v1263 = vpop.f32.mrf.mxu0
        %v1264 = vadd.f32 %v322, %v1263
        %v1265 = vpop.f32.mrf.mxu0
        %v1266 = vpop.f32.mrf.mxu0
        %v1267 = vadd.f32 %v322, %v1266
        %v1268 = vpop.f32.mrf.mxu0
        %1269 = vmatprep.mubr.bf16.mxu0 0
        %1270 = vmatmul.mubr.bf16.gmra.mxu0 %v785
        %v1271 = vpop.f32.mrf.mxu0
        %v1272 = vadd.f32 %v322, %v1271
        %v1273 = vpop.f32.mrf.mxu0
        %v1274 = vpop.f32.mrf.mxu0
        %v1275 = vadd.f32 %v322, %v1274
        %v1276 = vpop.f32.mrf.mxu0
        %1277 = vmatprep.mubr.bf16.mxu0 0
        %1278 = vmatmul.mubr.bf16.gmra.mxu0 %v788
        %v1279 = vpop.f32.mrf.mxu0
        %v1280 = vadd.f32 %v322, %v1279
        %v1281 = vpop.f32.mrf.mxu0
        %v1282 = vpop.f32.mrf.mxu0
        %v1283 = vpop.f32.mrf.mxu0
        %1284 = vdwg.mxu0
        %v1285 = vmax.f32 %v832, 0.0
        %v1286 = vmax.f32 %v835, 0.0
        %v1287 = vmax.f32 %v840, 0.0
        %v1288 = vmax.f32 %v843, 0.0
        %v1289 = vmax.f32 %v848, 0.0
        %v1290 = vmax.f32 %v851, 0.0
        %v1291 = vmax.f32 %v856, 0.0
        %v1292 = vmax.f32 %v859, 0.0
        %v1293 = vmax.f32 %v864, 0.0
        %v1294 = vmax.f32 %v867, 0.0
        %v1295 = vmax.f32 %v872, 0.0
        %v1296 = vmax.f32 %v875, 0.0
        %v1297 = vmax.f32 %v880, 0.0
        %v1298 = vmax.f32 %v883, 0.0
        %v1299 = vmax.f32 %v888, 0.0
        %v1300 = vmax.f32 %v891, 0.0
        %v1301 = vmax.f32 %v896, 0.0
        %v1302 = vmax.f32 %v899, 0.0
        %v1303 = vmax.f32 %v904, 0.0
        %v1304 = vmax.f32 %v907, 0.0
        %v1305 = vmax.f32 %v912, 0.0
        %v1306 = vmax.f32 %v915, 0.0
        %v1307 = vmax.f32 %v920, 0.0
        %v1308 = vmax.f32 %v923, 0.0
        %v1309 = vmax.f32 %v928, 0.0
        %v1310 = vmax.f32 %v931, 0.0
        %v1311 = vmax.f32 %v936, 0.0
        %v1312 = vmax.f32 %v939, 0.0
        %v1313 = vmax.f32 %v944, 0.0
        %v1314 = vmax.f32 %v947, 0.0
        %v1315 = vmax.f32 %v952, 0.0
        %v1316 = vmax.f32 %v955, 0.0
        %v1317 = vmax.f32 %v960, 0.0
        %v1318 = vmax.f32 %v963, 0.0
        %v1319 = vmax.f32 %v968, 0.0
        %v1320 = vmax.f32 %v971, 0.0
        %v1321 = vmax.f32 %v976, 0.0
        %v1322 = vmax.f32 %v979, 0.0
        %v1323 = vmax.f32 %v984, 0.0
        %v1324 = vmax.f32 %v987, 0.0
        %v1325 = vmax.f32 %v992, 0.0
        %v1326 = vmax.f32 %v995, 0.0
        %v1327 = vmax.f32 %v1000, 0.0
        %v1328 = vmax.f32 %v1003, 0.0
        %v1329 = vmax.f32 %v1008, 0.0
        %v1330 = vmax.f32 %v1011, 0.0
        %v1331 = vmax.f32 %v1016, 0.0
        %v1332 = vmax.f32 %v1019, 0.0
        %v1333 = vmax.f32 %v1024, 0.0
        %v1334 = vmax.f32 %v1027, 0.0
        %v1335 = vmax.f32 %v1032, 0.0
        %v1336 = vmax.f32 %v1035, 0.0
        %v1337 = vmax.f32 %v1040, 0.0
        %v1338 = vmax.f32 %v1043, 0.0
        %v1339 = vmax.f32 %v1048, 0.0
        %v1340 = vmax.f32 %v1051, 0.0
        %v1341 = vmax.f32 %v1056, 0.0
        %v1342 = vmax.f32 %v1059, 0.0
        %v1343 = vmax.f32 %v1064, 0.0
        %v1344 = vmax.f32 %v1067, 0.0
        %v1345 = vmax.f32 %v1072, 0.0
        %v1346 = vmax.f32 %v1075, 0.0
        %v1347 = vmax.f32 %v1080, 0.0
        %v1348 = vmax.f32 %v1083, 0.0
        %v1349 = vmax.f32 %v1088, 0.0
        %v1350 = vmax.f32 %v1091, 0.0
        %v1351 = vmax.f32 %v1096, 0.0
        %v1352 = vmax.f32 %v1099, 0.0
        %v1353 = vmax.f32 %v1104, 0.0
        %v1354 = vmax.f32 %v1107, 0.0
        %v1355 = vmax.f32 %v1112, 0.0
        %v1356 = vmax.f32 %v1115, 0.0
        %v1357 = vmax.f32 %v1120, 0.0
        %v1358 = vmax.f32 %v1123, 0.0
        %v1359 = vmax.f32 %v1128, 0.0
        %v1360 = vmax.f32 %v1131, 0.0
        %v1361 = vmax.f32 %v1136, 0.0
        %v1362 = vmax.f32 %v1139, 0.0
        %v1363 = vmax.f32 %v1144, 0.0
        %v1364 = vmax.f32 %v1147, 0.0
        %v1365 = vmax.f32 %v1152, 0.0
        %v1366 = vmax.f32 %v1155, 0.0
        %v1367 = vmax.f32 %v1160, 0.0
        %v1368 = vmax.f32 %v1163, 0.0
        %v1369 = vmax.f32 %v1168, 0.0
        %v1370 = vmax.f32 %v1171, 0.0
        %v1371 = vmax.f32 %v1176, 0.0
        %v1372 = vmax.f32 %v1179, 0.0
        %v1373 = vmax.f32 %v1184, 0.0
        %v1374 = vmax.f32 %v1187, 0.0
        %v1375 = vmax.f32 %v1192, 0.0
        %v1376 = vmax.f32 %v1195, 0.0
        %v1377 = vmax.f32 %v1200, 0.0
        %v1378 = vmax.f32 %v1203, 0.0
        %v1379 = vmax.f32 %v1208, 0.0
        %v1380 = vmax.f32 %v1211, 0.0
        %v1381 = vmax.f32 %v1216, 0.0
        %v1382 = vmax.f32 %v1219, 0.0
        %v1383 = vmax.f32 %v1224, 0.0
        %v1384 = vmax.f32 %v1227, 0.0
        %v1385 = vmax.f32 %v1232, 0.0
        %v1386 = vmax.f32 %v1235, 0.0
        %v1387 = vmax.f32 %v1240, 0.0
        %v1388 = vmax.f32 %v1243, 0.0
        %v1389 = vmax.f32 %v1248, 0.0
        %v1390 = vmax.f32 %v1251, 0.0
        %v1391 = vmax.f32 %v1256, 0.0
        %v1392 = vmax.f32 %v1259, 0.0
        %v1393 = vmax.f32 %v1264, 0.0
        %v1394 = vmax.f32 %v1267, 0.0
        %v1395 = vmax.f32 %v1272, 0.0
        %v1396 = vmax.f32 %v1275, 0.0
        %v1397 = vmax.f32 %v1280, 0.0
        %v1398 = vpack.c.bf16 %v1286, %v1285
        %v1399 = vpack.c.bf16 %v1288, %v1287
        %v1400 = vpack.c.bf16 %v1290, %v1289
        %v1401 = vpack.c.bf16 %v1292, %v1291
        %v1402 = vpack.c.bf16 %v1294, %v1293
        %v1403 = vpack.c.bf16 %v1296, %v1295
        %v1404 = vpack.c.bf16 %v1298, %v1297
        %v1405 = vpack.c.bf16 %v1300, %v1299
        %v1406 = vpack.c.bf16 %v1302, %v1301
        %v1407 = vpack.c.bf16 %v1304, %v1303
        %v1408 = vpack.c.bf16 %v1306, %v1305
        %v1409 = vpack.c.bf16 %v1308, %v1307
        %v1410 = vpack.c.bf16 %v1310, %v1309
        %v1411 = vpack.c.bf16 %v1312, %v1311
        %v1412 = vpack.c.bf16 %v1314, %v1313
        %v1413 = vpack.c.bf16 %v1316, %v1315
        %v1414 = vpack.c.bf16 %v1318, %v1317
        %v1415 = vpack.c.bf16 %v1320, %v1319
        %v1416 = vpack.c.bf16 %v1322, %v1321
        %v1417 = vpack.c.bf16 %v1324, %v1323
        %v1418 = vpack.c.bf16 %v1326, %v1325
        %v1419 = vpack.c.bf16 %v1328, %v1327
        %v1420 = vpack.c.bf16 %v1330, %v1329
        %v1421 = vpack.c.bf16 %v1332, %v1331
        %v1422 = vpack.c.bf16 %v1334, %v1333
        %v1423 = vpack.c.bf16 %v1336, %v1335
        %v1424 = vpack.c.bf16 %v1338, %v1337
        %v1425 = vpack.c.bf16 %v1340, %v1339
        %v1426 = vpack.c.bf16 %v1342, %v1341
        %v1427 = vpack.c.bf16 %v1344, %v1343
        %v1428 = vpack.c.bf16 %v1346, %v1345
        %v1429 = vpack.c.bf16 %v1348, %v1347
        %v1430 = vpack.c.bf16 %v1350, %v1349
        %v1431 = vpack.c.bf16 %v1352, %v1351
        %v1432 = vpack.c.bf16 %v1354, %v1353
        %v1433 = vpack.c.bf16 %v1356, %v1355
        %v1434 = vpack.c.bf16 %v1358, %v1357
        %v1435 = vpack.c.bf16 %v1360, %v1359
        %v1436 = vpack.c.bf16 %v1362, %v1361
        %v1437 = vpack.c.bf16 %v1364, %v1363
        %v1438 = vpack.c.bf16 %v1366, %v1365
        %v1439 = vpack.c.bf16 %v1368, %v1367
        %v1440 = vpack.c.bf16 %v1370, %v1369
        %v1441 = vpack.c.bf16 %v1372, %v1371
        %v1442 = vpack.c.bf16 %v1374, %v1373
        %v1443 = vpack.c.bf16 %v1376, %v1375
        %v1444 = vpack.c.bf16 %v1378, %v1377
        %v1445 = vpack.c.bf16 %v1380, %v1379
        %v1446 = vpack.c.bf16 %v1382, %v1381
        %v1447 = vpack.c.bf16 %v1384, %v1383
        %v1448 = vpack.c.bf16 %v1386, %v1385
        %v1449 = vpack.c.bf16 %v1388, %v1387
        %v1450 = vpack.c.bf16 %v1390, %v1389
        %v1451 = vpack.c.bf16 %v1392, %v1391
        %v1452 = vpack.c.bf16 %v1394, %v1393
        %v1453 = vpack.c.bf16 %v1396, %v1395
        %v1454 = vpack.c.bf16 %v1397, %v1397
        %v1512 = vunpack.c.l.b16 %v1398
        %v1513 = vunpack.c.h.b16 %v1398
        %v1514 = vunpack.c.l.b16 %v1399
        %v1515 = vunpack.c.h.b16 %v1399
        %v1516 = vunpack.c.l.b16 %v1400
        %v1517 = vunpack.c.h.b16 %v1400
        %v1518 = vunpack.c.l.b16 %v1401
        %v1519 = vunpack.c.h.b16 %v1401
        %v1520 = vunpack.c.l.b16 %v1402
        %v1521 = vunpack.c.h.b16 %v1402
        %v1522 = vunpack.c.l.b16 %v1403
        %v1523 = vunpack.c.h.b16 %v1403
        %v1524 = vunpack.c.l.b16 %v1404
        %v1525 = vunpack.c.h.b16 %v1404
        %v1526 = vunpack.c.l.b16 %v1405
        %v1527 = vunpack.c.h.b16 %v1405
        %v1528 = vunpack.c.l.b16 %v1406
        %v1529 = vunpack.c.h.b16 %v1406
        %v1530 = vunpack.c.l.b16 %v1407
        %v1531 = vunpack.c.h.b16 %v1407
        %v1532 = vunpack.c.l.b16 %v1408
        %v1533 = vunpack.c.h.b16 %v1408
        %v1534 = vunpack.c.l.b16 %v1409
        %v1535 = vunpack.c.h.b16 %v1409
        %v1536 = vunpack.c.l.b16 %v1410
        %v1537 = vunpack.c.h.b16 %v1410
        %v1538 = vunpack.c.l.b16 %v1411
        %v1539 = vunpack.c.h.b16 %v1411
        %v1540 = vunpack.c.l.b16 %v1412
        %v1541 = vunpack.c.h.b16 %v1412
        %v1542 = vunpack.c.l.b16 %v1413
        %v1543 = vunpack.c.h.b16 %v1413
        %v1544 = vunpack.c.l.b16 %v1414
        %v1545 = vunpack.c.h.b16 %v1414
        %v1546 = vunpack.c.l.b16 %v1415
        %v1547 = vunpack.c.h.b16 %v1415
        %v1548 = vunpack.c.l.b16 %v1416
        %v1549 = vunpack.c.h.b16 %v1416
        %v1550 = vunpack.c.l.b16 %v1417
        %v1551 = vunpack.c.h.b16 %v1417
        %v1552 = vunpack.c.l.b16 %v1418
        %v1553 = vunpack.c.h.b16 %v1418
        %v1554 = vunpack.c.l.b16 %v1419
        %v1555 = vunpack.c.h.b16 %v1419
        %v1556 = vunpack.c.l.b16 %v1420
        %v1557 = vunpack.c.h.b16 %v1420
        %v1558 = vunpack.c.l.b16 %v1421
        %v1559 = vunpack.c.h.b16 %v1421
        %v1560 = vunpack.c.l.b16 %v1422
        %v1561 = vunpack.c.h.b16 %v1422
        %v1562 = vunpack.c.l.b16 %v1423
        %v1563 = vunpack.c.h.b16 %v1423
        %v1564 = vunpack.c.l.b16 %v1424
        %v1565 = vunpack.c.h.b16 %v1424
        %v1566 = vunpack.c.l.b16 %v1425
        %v1567 = vunpack.c.h.b16 %v1425
        %v1568 = vunpack.c.l.b16 %v1426
        %v1569 = vunpack.c.h.b16 %v1426
        %v1570 = vunpack.c.l.b16 %v1427
        %v1571 = vunpack.c.h.b16 %v1427
        %v1572 = vunpack.c.l.b16 %v1428
        %v1573 = vunpack.c.h.b16 %v1428
        %v1574 = vunpack.c.l.b16 %v1429
        %v1575 = vunpack.c.h.b16 %v1429
        %v1576 = vunpack.c.l.b16 %v1430
        %v1577 = vunpack.c.h.b16 %v1430
        %v1578 = vunpack.c.l.b16 %v1431
        %v1579 = vunpack.c.h.b16 %v1431
        %v1580 = vunpack.c.l.b16 %v1432
        %v1581 = vunpack.c.h.b16 %v1432
        %v1582 = vunpack.c.l.b16 %v1433
        %v1583 = vunpack.c.h.b16 %v1433
        %v1584 = vunpack.c.l.b16 %v1434
        %v1585 = vunpack.c.h.b16 %v1434
        %v1586 = vunpack.c.l.b16 %v1435
        %v1587 = vunpack.c.h.b16 %v1435
        %v1588 = vunpack.c.l.b16 %v1436
        %v1589 = vunpack.c.h.b16 %v1436
        %v1590 = vunpack.c.l.b16 %v1437
        %v1591 = vunpack.c.h.b16 %v1437
        %v1592 = vunpack.c.l.b16 %v1438
        %v1593 = vunpack.c.h.b16 %v1438
        %v1594 = vunpack.c.l.b16 %v1439
        %v1595 = vunpack.c.h.b16 %v1439
        %v1596 = vunpack.c.l.b16 %v1440
        %v1597 = vunpack.c.h.b16 %v1440
        %v1598 = vunpack.c.l.b16 %v1441
        %v1599 = vunpack.c.h.b16 %v1441
        %v1600 = vunpack.c.l.b16 %v1442
        %v1601 = vunpack.c.h.b16 %v1442
        %v1602 = vunpack.c.l.b16 %v1443
        %v1603 = vunpack.c.h.b16 %v1443
        %v1604 = vunpack.c.l.b16 %v1444
        %v1605 = vunpack.c.h.b16 %v1444
        %v1606 = vunpack.c.l.b16 %v1445
        %v1607 = vunpack.c.h.b16 %v1445
        %v1608 = vunpack.c.l.b16 %v1446
        %v1609 = vunpack.c.h.b16 %v1446
        %v1610 = vunpack.c.l.b16 %v1447
        %v1611 = vunpack.c.h.b16 %v1447
        %v1612 = vunpack.c.l.b16 %v1448
        %v1613 = vunpack.c.h.b16 %v1448
        %v1614 = vunpack.c.l.b16 %v1449
        %v1615 = vunpack.c.h.b16 %v1449
        %v1616 = vunpack.c.l.b16 %v1450
        %v1617 = vunpack.c.h.b16 %v1450
        %v1618 = vunpack.c.l.b16 %v1451
        %v1619 = vunpack.c.h.b16 %v1451
        %v1620 = vunpack.c.l.b16 %v1452
        %v1621 = vunpack.c.h.b16 %v1452
        %v1622 = vunpack.c.l.b16 %v1453
        %v1623 = vunpack.c.h.b16 %v1453
        %v1624 = vunpack.c.l.b16 %v1454
        %v1625 = vpack.c.b16 %v1512, %v1512
        %v1626 = vpack.c.b16 %v1513, %v1513
        %v1627 = vpack.c.b16 %v1514, %v1514
        %v1628 = vpack.c.b16 %v1515, %v1515
        %v1629 = vpack.c.b16 %v1516, %v1516
        %v1630 = vpack.c.b16 %v1517, %v1517
        %v1631 = vpack.c.b16 %v1518, %v1518
        %v1632 = vpack.c.b16 %v1519, %v1519
        %v1633 = vpack.c.b16 %v1520, %v1520
        %v1634 = vpack.c.b16 %v1521, %v1521
        %v1635 = vpack.c.b16 %v1522, %v1522
        %v1636 = vpack.c.b16 %v1523, %v1523
        %v1637 = vpack.c.b16 %v1524, %v1524
        %v1638 = vpack.c.b16 %v1525, %v1525
        %v1639 = vpack.c.b16 %v1526, %v1526
        %v1640 = vpack.c.b16 %v1527, %v1527
        %v1641 = vpack.c.b16 %v1528, %v1528
        %v1642 = vpack.c.b16 %v1529, %v1529
        %v1643 = vpack.c.b16 %v1530, %v1530
        %v1644 = vpack.c.b16 %v1531, %v1531
        %v1645 = vpack.c.b16 %v1532, %v1532
        %v1646 = vpack.c.b16 %v1533, %v1533
        %v1647 = vpack.c.b16 %v1534, %v1534
        %v1648 = vpack.c.b16 %v1535, %v1535
        %v1649 = vpack.c.b16 %v1536, %v1536
        %v1650 = vpack.c.b16 %v1537, %v1537
        %v1651 = vpack.c.b16 %v1538, %v1538
        %v1652 = vpack.c.b16 %v1539, %v1539
        %v1653 = vpack.c.b16 %v1540, %v1540
        %v1654 = vpack.c.b16 %v1541, %v1541
        %v1655 = vpack.c.b16 %v1542, %v1542
        %v1656 = vpack.c.b16 %v1543, %v1543
        %v1657 = vpack.c.b16 %v1544, %v1544
        %v1658 = vpack.c.b16 %v1545, %v1545
        %v1659 = vpack.c.b16 %v1546, %v1546
        %v1660 = vpack.c.b16 %v1547, %v1547
        %v1661 = vpack.c.b16 %v1548, %v1548
        %v1662 = vpack.c.b16 %v1549, %v1549
        %v1663 = vpack.c.b16 %v1550, %v1550
        %v1664 = vpack.c.b16 %v1551, %v1551
        %v1665 = vpack.c.b16 %v1552, %v1552
        %v1666 = vpack.c.b16 %v1553, %v1553
        %v1667 = vpack.c.b16 %v1554, %v1554
        %v1668 = vpack.c.b16 %v1555, %v1555
        %v1669 = vpack.c.b16 %v1556, %v1556
        %v1670 = vpack.c.b16 %v1557, %v1557
        %v1671 = vpack.c.b16 %v1558, %v1558
        %v1672 = vpack.c.b16 %v1559, %v1559
        %v1673 = vpack.c.b16 %v1560, %v1560
        %v1674 = vpack.c.b16 %v1561, %v1561
        %v1675 = vpack.c.b16 %v1562, %v1562
        %v1676 = vpack.c.b16 %v1563, %v1563
        %v1677 = vpack.c.b16 %v1564, %v1564
        %v1678 = vpack.c.b16 %v1565, %v1565
        %v1679 = vpack.c.b16 %v1566, %v1566
        %v1680 = vpack.c.b16 %v1567, %v1567
        %v1681 = vpack.c.b16 %v1568, %v1568
        %v1682 = vpack.c.b16 %v1569, %v1569
        %v1683 = vpack.c.b16 %v1570, %v1570
        %v1684 = vpack.c.b16 %v1571, %v1571
        %v1685 = vpack.c.b16 %v1572, %v1572
        %v1686 = vpack.c.b16 %v1573, %v1573
        %v1687 = vpack.c.b16 %v1574, %v1574
        %v1688 = vpack.c.b16 %v1575, %v1575
        %v1689 = vpack.c.b16 %v1576, %v1576
        %v1690 = vpack.c.b16 %v1577, %v1577
        %v1691 = vpack.c.b16 %v1578, %v1578
        %v1692 = vpack.c.b16 %v1579, %v1579
        %v1693 = vpack.c.b16 %v1580, %v1580
        %v1694 = vpack.c.b16 %v1581, %v1581
        %v1695 = vpack.c.b16 %v1582, %v1582
        %v1696 = vpack.c.b16 %v1583, %v1583
        %v1697 = vpack.c.b16 %v1584, %v1584
        %v1698 = vpack.c.b16 %v1585, %v1585
        %v1699 = vpack.c.b16 %v1586, %v1586
        %v1700 = vpack.c.b16 %v1587, %v1587
        %v1701 = vpack.c.b16 %v1588, %v1588
        %v1702 = vpack.c.b16 %v1589, %v1589
        %v1703 = vpack.c.b16 %v1590, %v1590
        %v1704 = vpack.c.b16 %v1591, %v1591
        %v1705 = vpack.c.b16 %v1592, %v1592
        %v1706 = vpack.c.b16 %v1593, %v1593
        %v1707 = vpack.c.b16 %v1594, %v1594
        %v1708 = vpack.c.b16 %v1595, %v1595
        %v1709 = vpack.c.b16 %v1596, %v1596
        %v1710 = vpack.c.b16 %v1597, %v1597
        %v1711 = vpack.c.b16 %v1598, %v1598
        %v1712 = vpack.c.b16 %v1599, %v1599
        %v1713 = vpack.c.b16 %v1600, %v1600
        %v1714 = vpack.c.b16 %v1601, %v1601
        %v1715 = vpack.c.b16 %v1602, %v1602
        %v1716 = vpack.c.b16 %v1603, %v1603
        %v1717 = vpack.c.b16 %v1604, %v1604
        %v1718 = vpack.c.b16 %v1605, %v1605
        %v1719 = vpack.c.b16 %v1606, %v1606
        %v1720 = vpack.c.b16 %v1607, %v1607
        %v1721 = vpack.c.b16 %v1608, %v1608
        %v1722 = vpack.c.b16 %v1609, %v1609
        %v1723 = vpack.c.b16 %v1610, %v1610
        %v1724 = vpack.c.b16 %v1611, %v1611
        %v1725 = vpack.c.b16 %v1612, %v1612
        %v1726 = vpack.c.b16 %v1613, %v1613
        %v1727 = vpack.c.b16 %v1614, %v1614
        %v1728 = vpack.c.b16 %v1615, %v1615
        %v1729 = vpack.c.b16 %v1616, %v1616
        %v1730 = vpack.c.b16 %v1617, %v1617
        %v1731 = vpack.c.b16 %v1618, %v1618
        %v1732 = vpack.c.b16 %v1619, %v1619
        %v1733 = vpack.c.b16 %v1620, %v1620
        %v1734 = vpack.c.b16 %v1621, %v1621
        %v1735 = vpack.c.b16 %v1622, %v1622
        %v1736 = vpack.c.b16 %v1623, %v1623
        %v1737 = vpack.c.b16 %v1624, %v1624
        %vm1851 = vcmask 257024
        %1852 = vst.msk [vmem:[%s198] sm:$0xf] %vm1851, %v1625
        %1853 = vst.msk [vmem:[%s198 + $0x4] sm:$0xf] %vm1851, %v1626
        %1854 = vst.msk [vmem:[%s198 + $0x8] sm:$0xf] %vm1851, %v1627
        %1855 = vst.msk [vmem:[%s198 + $0xc] sm:$0xf] %vm1851, %v1628
        %1856 = vst.msk [vmem:[%s198 + $0x10] sm:$0xf] %vm1851, %v1629
        %1857 = vst.msk [vmem:[%s198 + $0x14] sm:$0xf] %vm1851, %v1630
        %1858 = vst.msk [vmem:[%s198 + $0x18] sm:$0xf] %vm1851, %v1631
        %1859 = vst.msk [vmem:[%s198 + $0x1c] sm:$0xf] %vm1851, %v1632
        %1860 = vst.msk [vmem:[%s198 + $0x20] sm:$0xf] %vm1851, %v1633
        %1861 = vst.msk [vmem:[%s198 + $0x24] sm:$0xf] %vm1851, %v1634
        %1862 = vst.msk [vmem:[%s198 + $0x28] sm:$0xf] %vm1851, %v1635
        %1863 = vst.msk [vmem:[%s198 + $0x2c] sm:$0xf] %vm1851, %v1636
        %1864 = vst.msk [vmem:[%s198 + $0x30] sm:$0xf] %vm1851, %v1637
        %1865 = vst.msk [vmem:[%s198 + $0x34] sm:$0xf] %vm1851, %v1638
        %1866 = vst.msk [vmem:[%s198 + $0x38] sm:$0xf] %vm1851, %v1639
        %1867 = vst.msk [vmem:[%s198 + $0x3c] sm:$0xf] %vm1851, %v1640
        %1868 = vst.msk [vmem:[%s198 + $0x40] sm:$0xf] %vm1851, %v1641
        %1869 = vst.msk [vmem:[%s198 + $0x44] sm:$0xf] %vm1851, %v1642
        %1870 = vst.msk [vmem:[%s198 + $0x48] sm:$0xf] %vm1851, %v1643
        %1871 = vst.msk [vmem:[%s198 + $0x4c] sm:$0xf] %vm1851, %v1644
        %1872 = vst.msk [vmem:[%s198 + $0x50] sm:$0xf] %vm1851, %v1645
        %1873 = vst.msk [vmem:[%s198 + $0x54] sm:$0xf] %vm1851, %v1646
        %1874 = vst.msk [vmem:[%s198 + $0x58] sm:$0xf] %vm1851, %v1647
        %1875 = vst.msk [vmem:[%s198 + $0x5c] sm:$0xf] %vm1851, %v1648
        %1876 = vst.msk [vmem:[%s198 + $0x60] sm:$0xf] %vm1851, %v1649
        %1877 = vst.msk [vmem:[%s198 + $0x64] sm:$0xf] %vm1851, %v1650
        %1878 = vst.msk [vmem:[%s198 + $0x68] sm:$0xf] %vm1851, %v1651
        %1879 = vst.msk [vmem:[%s198 + $0x6c] sm:$0xf] %vm1851, %v1652
        %1880 = vst.msk [vmem:[%s198 + $0x70] sm:$0xf] %vm1851, %v1653
        %1881 = vst.msk [vmem:[%s198 + $0x74] sm:$0xf] %vm1851, %v1654
        %1882 = vst.msk [vmem:[%s198 + $0x78] sm:$0xf] %vm1851, %v1655
        %1883 = vst.msk [vmem:[%s198 + $0x7c] sm:$0xf] %vm1851, %v1656
        %1884 = vst.msk [vmem:[%s198 + $0x80] sm:$0xf] %vm1851, %v1657
        %1885 = vst.msk [vmem:[%s198 + $0x84] sm:$0xf] %vm1851, %v1658
        %1886 = vst.msk [vmem:[%s198 + $0x88] sm:$0xf] %vm1851, %v1659
        %1887 = vst.msk [vmem:[%s198 + $0x8c] sm:$0xf] %vm1851, %v1660
        %1888 = vst.msk [vmem:[%s198 + $0x90] sm:$0xf] %vm1851, %v1661
        %1889 = vst.msk [vmem:[%s198 + $0x94] sm:$0xf] %vm1851, %v1662
        %1890 = vst.msk [vmem:[%s198 + $0x98] sm:$0xf] %vm1851, %v1663
        %1891 = vst.msk [vmem:[%s198 + $0x9c] sm:$0xf] %vm1851, %v1664
        %1892 = vst.msk [vmem:[%s198 + $0xa0] sm:$0xf] %vm1851, %v1665
        %1893 = vst.msk [vmem:[%s198 + $0xa4] sm:$0xf] %vm1851, %v1666
        %1894 = vst.msk [vmem:[%s198 + $0xa8] sm:$0xf] %vm1851, %v1667
        %1895 = vst.msk [vmem:[%s198 + $0xac] sm:$0xf] %vm1851, %v1668
        %1896 = vst.msk [vmem:[%s198 + $0xb0] sm:$0xf] %vm1851, %v1669
        %1897 = vst.msk [vmem:[%s198 + $0xb4] sm:$0xf] %vm1851, %v1670
        %1898 = vst.msk [vmem:[%s198 + $0xb8] sm:$0xf] %vm1851, %v1671
        %1899 = vst.msk [vmem:[%s198 + $0xbc] sm:$0xf] %vm1851, %v1672
        %1900 = vst.msk [vmem:[%s198 + $0xc0] sm:$0xf] %vm1851, %v1673
        %1901 = vst.msk [vmem:[%s198 + $0xc4] sm:$0xf] %vm1851, %v1674
        %1902 = vst.msk [vmem:[%s198 + $0xc8] sm:$0xf] %vm1851, %v1675
        %1903 = vst.msk [vmem:[%s198 + $0xcc] sm:$0xf] %vm1851, %v1676
        %1904 = vst.msk [vmem:[%s198 + $0xd0] sm:$0xf] %vm1851, %v1677
        %1905 = vst.msk [vmem:[%s198 + $0xd4] sm:$0xf] %vm1851, %v1678
        %1906 = vst.msk [vmem:[%s198 + $0xd8] sm:$0xf] %vm1851, %v1679
        %1907 = vst.msk [vmem:[%s198 + $0xdc] sm:$0xf] %vm1851, %v1680
        %1908 = vst.msk [vmem:[%s198 + $0xe0] sm:$0xf] %vm1851, %v1681
        %1909 = vst.msk [vmem:[%s198 + $0xe4] sm:$0xf] %vm1851, %v1682
        %1910 = vst.msk [vmem:[%s198 + $0xe8] sm:$0xf] %vm1851, %v1683
        %1911 = vst.msk [vmem:[%s198 + $0xec] sm:$0xf] %vm1851, %v1684
        %1912 = vst.msk [vmem:[%s198 + $0xf0] sm:$0xf] %vm1851, %v1685
        %1913 = vst.msk [vmem:[%s198 + $0xf4] sm:$0xf] %vm1851, %v1686
        %1914 = vst.msk [vmem:[%s198 + $0xf8] sm:$0xf] %vm1851, %v1687
        %1915 = vst.msk [vmem:[%s198 + $0xfc] sm:$0xf] %vm1851, %v1688
        %1916 = vst.msk [vmem:[%s198 + $0x100] sm:$0xf] %vm1851, %v1689
        %1917 = vst.msk [vmem:[%s198 + $0x104] sm:$0xf] %vm1851, %v1690
        %1918 = vst.msk [vmem:[%s198 + $0x108] sm:$0xf] %vm1851, %v1691
        %1919 = vst.msk [vmem:[%s198 + $0x10c] sm:$0xf] %vm1851, %v1692
        %1920 = vst.msk [vmem:[%s198 + $0x110] sm:$0xf] %vm1851, %v1693
        %1921 = vst.msk [vmem:[%s198 + $0x114] sm:$0xf] %vm1851, %v1694
        %1922 = vst.msk [vmem:[%s198 + $0x118] sm:$0xf] %vm1851, %v1695
        %1923 = vst.msk [vmem:[%s198 + $0x11c] sm:$0xf] %vm1851, %v1696
        %1924 = vst.msk [vmem:[%s198 + $0x120] sm:$0xf] %vm1851, %v1697
        %1925 = vst.msk [vmem:[%s198 + $0x124] sm:$0xf] %vm1851, %v1698
        %1926 = vst.msk [vmem:[%s198 + $0x128] sm:$0xf] %vm1851, %v1699
        %1927 = vst.msk [vmem:[%s198 + $0x12c] sm:$0xf] %vm1851, %v1700
        %1928 = vst.msk [vmem:[%s198 + $0x130] sm:$0xf] %vm1851, %v1701
        %1929 = vst.msk [vmem:[%s198 + $0x134] sm:$0xf] %vm1851, %v1702
        %1930 = vst.msk [vmem:[%s198 + $0x138] sm:$0xf] %vm1851, %v1703
        %1931 = vst.msk [vmem:[%s198 + $0x13c] sm:$0xf] %vm1851, %v1704
        %1932 = vst.msk [vmem:[%s198 + $0x140] sm:$0xf] %vm1851, %v1705
        %1933 = vst.msk [vmem:[%s198 + $0x144] sm:$0xf] %vm1851, %v1706
        %1934 = vst.msk [vmem:[%s198 + $0x148] sm:$0xf] %vm1851, %v1707
        %1935 = vst.msk [vmem:[%s198 + $0x14c] sm:$0xf] %vm1851, %v1708
        %1936 = vst.msk [vmem:[%s198 + $0x150] sm:$0xf] %vm1851, %v1709
        %1937 = vst.msk [vmem:[%s198 + $0x154] sm:$0xf] %vm1851, %v1710
        %1938 = vst.msk [vmem:[%s198 + $0x158] sm:$0xf] %vm1851, %v1711
        %1939 = vst.msk [vmem:[%s198 + $0x15c] sm:$0xf] %vm1851, %v1712
        %1940 = vst.msk [vmem:[%s198 + $0x160] sm:$0xf] %vm1851, %v1713
        %1941 = vst.msk [vmem:[%s198 + $0x164] sm:$0xf] %vm1851, %v1714
        %1942 = vst.msk [vmem:[%s198 + $0x168] sm:$0xf] %vm1851, %v1715
        %1943 = vst.msk [vmem:[%s198 + $0x16c] sm:$0xf] %vm1851, %v1716
        %1944 = vst.msk [vmem:[%s198 + $0x170] sm:$0xf] %vm1851, %v1717
        %1945 = vst.msk [vmem:[%s198 + $0x174] sm:$0xf] %vm1851, %v1718
        %1946 = vst.msk [vmem:[%s198 + $0x178] sm:$0xf] %vm1851, %v1719
        %1947 = vst.msk [vmem:[%s198 + $0x17c] sm:$0xf] %vm1851, %v1720
        %1948 = vst.msk [vmem:[%s198 + $0x180] sm:$0xf] %vm1851, %v1721
        %1949 = vst.msk [vmem:[%s198 + $0x184] sm:$0xf] %vm1851, %v1722
        %1950 = vst.msk [vmem:[%s198 + $0x188] sm:$0xf] %vm1851, %v1723
        %1951 = vst.msk [vmem:[%s198 + $0x18c] sm:$0xf] %vm1851, %v1724
        %1952 = vst.msk [vmem:[%s198 + $0x190] sm:$0xf] %vm1851, %v1725
        %1953 = vst.msk [vmem:[%s198 + $0x194] sm:$0xf] %vm1851, %v1726
        %1954 = vst.msk [vmem:[%s198 + $0x198] sm:$0xf] %vm1851, %v1727
        %1955 = vst.msk [vmem:[%s198 + $0x19c] sm:$0xf] %vm1851, %v1728
        %1956 = vst.msk [vmem:[%s198 + $0x1a0] sm:$0xf] %vm1851, %v1729
        %1957 = vst.msk [vmem:[%s198 + $0x1a4] sm:$0xf] %vm1851, %v1730
        %1958 = vst.msk [vmem:[%s198 + $0x1a8] sm:$0xf] %vm1851, %v1731
        %1959 = vst.msk [vmem:[%s198 + $0x1ac] sm:$0xf] %vm1851, %v1732
        %1960 = vst.msk [vmem:[%s198 + $0x1b0] sm:$0xf] %vm1851, %v1733
        %1961 = vst.msk [vmem:[%s198 + $0x1b4] sm:$0xf] %vm1851, %v1734
        %1962 = vst.msk [vmem:[%s198 + $0x1b8] sm:$0xf] %vm1851, %v1735
        %1963 = vst.msk [vmem:[%s198 + $0x1bc] sm:$0xf] %vm1851, %v1736
        %vm1964 = vcmask 254976
        %1965 = vst.msk [vmem:[%s198 + $0x1c0] sm:$0x3] %vm1964, %v1737
        %p1966 = scmp.lt.s32.totalorder %s16, 1
        %s1967 = scalar_select %p1966, %s16, 1
        %s1968 = smul.addr %s1967, 113
        %s1969 = smul.addr %s1968, 4
        %s1970 = scalar_lea.vmem %s3, %s1969
        // Predicated region
        $region41: #{net_forward.4} parent=31 // pred_check
          %p1971 = pneg %p102
        $region42: #{net_forward.4} parent=31 // pred_check_branch
          %1973 = sbr.rel (%p1971) target = $region44
        $region43: #{net_forward.4} parent=31 // pred_region
          _
        $region44: #{net_forward.4} parent=31 // pred_fallthru
          _
      $region32: #{net_forward.4} parent=5 // pred_fallthru
        _
      %p1974 = scmp.le.s32.totalorder 2, %s11
      // Predicated region
      $region45: #{net_forward.4} parent=5 // pred_check
        %p1975 = pneg %p1974
      $region46: #{net_forward.4} parent=5 // pred_check_branch
        %1977 = sbr.rel (%p1975) target = $region48
      $region47: #{net_forward.4} parent=5 // pred_region
        %s1978 = ssub.s32 %s11, 2
        // Predicated region
        $region49: #{net_forward.4} parent=47 // pred_check
          %p1979 = pneg %p108
        $region50: #{net_forward.4} parent=47 // pred_check_branch
          %1981 = sbr.rel (%p1979) target = $region52
        $region51: #{net_forward.4} parent=47 // pred_region
          %p1982 = scmp.lt.s32.totalorder %s17, 1
          %s1983 = scalar_select %p1982, %s17, 1
          %s1984 = smul.addr %s1983, 113
          %s1985 = smul.addr %s1984, 4
          %s1986 = scalar_lea.vmem %s3, %s1985
        $region52: #{net_forward.4} parent=47 // pred_fallthru
          _
      $region48: #{net_forward.4} parent=5 // pred_fallthru
        _
    $region6: #{net_forward.4} parent=1 // loop_footer
      %s15 = sadd.s32 1, %s11
    $region7: #{net_forward.4} parent=1 // loop_footer_branch
      %10 = sbr.rel target = $region3
    $region8: #{net_forward.4} parent=1 // loop_exit
      _
    %1987 = vsyncpa [#allocation3], 1
    %s1988 = scalar_lea.sflag [#allocation3], 1
    %1989 = vsyncpa %s1988, 1
    %1990 = vsyncpa [#allocation5], 1

// kernel: net_forward.5
$region0: #{net_forward.5}
  #allocation0 [shape = 'u32[]', space=smem, size = 0x4, offset = 0x4, fixed_abs, tag = 'smem constant byte address 0x4 - core index']
  #allocation1 [shape = 'u32[144,128]{1,0:T(1,128)}', space=vmem, size = 0x12000, scoped, tag = 'internal scratch']
  #allocation2 [shape = 'f32[392,64]{1,0:T(8,128)}', space=vmem, size = 0x31000, scoped, tag = 'scratch operand']
  %s0 = inlined_call_operand.vmem [shape: bf16[2,784,288], index: 0, kind: input, shape index: {}]
  %s1 = inlined_call_operand.vmem [shape: bf16[288,64], index: 1, kind: input, shape index: {}]
  %s2 = inlined_call_operand.vmem [shape: f32[1,64], index: 2, kind: input, shape index: {}]
  %s3 = inlined_call_operand.vmem [shape: bf16[2,196,64], index: 3, kind: output, shape index: {}]
  %s4 = sld [smem:[#allocation0]]
  $region45: #{net_forward.5} parent=0
    _
  %s6 = ssub.s32 1, %s4
  %s7 = scalar_select 0, %s6, %s4
  loop: start=0, step=1, limit=4
  $region2: #{net_forward.5} parent=0 // loop_pre_header
    _
  $region3: #{net_forward.5} parent=0 // loop_header
    %s9 = sphi 0, %s13
    %p10 = scmp.ge.s32.totalorder %s9, 4
    %s19 = sphi 0, %s21
    %s22 = sphi 0, %s19
    %s23 = sphi 0, %s22
    %s39 = sphi 0, %s23
    %s43 = sphi 0, %s43
    %s45 = sphi 0, %s43
    %s46 = sphi 0, %s45
    %s60 = sphi 0, %s46
    %s64 = sphi 0, %s64
    %s66 = sphi 0, %s64
    %s67 = sphi 0, %s66
    %s81 = sphi 0, %s67
    %s87 = sphi 0, %s89
    %s90 = sphi 0, %s87
    %s91 = sphi 0, %s90
    %s107 = sphi 0, %s91
  $region4: #{net_forward.5} parent=0 // loop_header_branch
    %12 = sbr.rel (%p10) target = $region8
  $region5: #{net_forward.5} parent=0 // loop_body
    %s14 = ssub.s32 %s9, 1
    %s15 = ssub.s32 %s9, 2
    %s16 = sadd.s32 %s9, 1
    %s17 = ssub.s32 %s9, %s16
    %p18 = scmp.eq.s32.totalorder %s17, 0
    %s20 = sadd.s32 %s19, 1
    %s21 = scalar_select %p18, %s19, %s20
    %p24 = pneg %p18
    %p25 = scmp.eq.s32.totalorder %s9, 1
    %p26 = por %p24, %p25
    %p27 = scmp.ne.s32.totalorder %s19, %s22
    %p28 = scmp.eq.s32.totalorder %s9, 0
    %p29 = por %p27, %p28
    %p30 = scmp.ne.s32.totalorder %s19, %s22
    %p31 = scmp.eq.s32.totalorder %s14, 1
    %p32 = por %p30, %p31
    %p33 = scmp.ne.s32.totalorder %s22, %s23
    %p34 = scmp.eq.s32.totalorder %s14, 0
    %p35 = por %p33, %p34
    %p36 = scmp.ne.s32.totalorder %s22, %s23
    %p37 = scmp.eq.s32.totalorder %s15, 1
    %p38 = por %p36, %p37
    %p40 = scmp.ne.s32.totalorder %s23, %s39
    %p41 = scmp.eq.s32.totalorder %s15, 0
    %p42 = por %p40, %p41
    %s44 = sadd.s32 %s43, 1
    %p47 = scmp.eq.s32.totalorder %s9, 1
    %p48 = scmp.ne.s32.totalorder %s43, %s45
    %p49 = scmp.eq.s32.totalorder %s9, 0
    %p50 = por %p48, %p49
    %p51 = scmp.ne.s32.totalorder %s43, %s45
    %p52 = scmp.eq.s32.totalorder %s14, 1
    %p53 = por %p51, %p52
    %p54 = scmp.ne.s32.totalorder %s45, %s46
    %p55 = scmp.eq.s32.totalorder %s14, 0
    %p56 = por %p54, %p55
    %p57 = scmp.ne.s32.totalorder %s45, %s46
    %p58 = scmp.eq.s32.totalorder %s15, 1
    %p59 = por %p57, %p58
    %p61 = scmp.ne.s32.totalorder %s46, %s60
    %p62 = scmp.eq.s32.totalorder %s15, 0
    %p63 = por %p61, %p62
    %s65 = sadd.s32 %s64, 1
    %p68 = scmp.eq.s32.totalorder %s9, 1
    %p69 = scmp.ne.s32.totalorder %s64, %s66
    %p70 = scmp.eq.s32.totalorder %s9, 0
    %p71 = por %p69, %p70
    %p72 = scmp.ne.s32.totalorder %s64, %s66
    %p73 = scmp.eq.s32.totalorder %s14, 1
    %p74 = por %p72, %p73
    %p75 = scmp.ne.s32.totalorder %s66, %s67
    %p76 = scmp.eq.s32.totalorder %s14, 0
    %p77 = por %p75, %p76
    %p78 = scmp.ne.s32.totalorder %s66, %s67
    %p79 = scmp.eq.s32.totalorder %s15, 1
    %p80 = por %p78, %p79
    %p82 = scmp.ne.s32.totalorder %s67, %s81
    %p83 = scmp.eq.s32.totalorder %s15, 0
    %p84 = por %p82, %p83
    %s85 = ssub.s32 %s9, %s16
    %p86 = scmp.eq.s32.totalorder %s85, 0
    %s88 = sadd.s32 %s87, 1
    %s89 = scalar_select %p86, %s87, %s88
    %p92 = pneg %p86
    %p93 = scmp.eq.s32.totalorder %s9, 1
    %p94 = por %p92, %p93
    %p95 = scmp.ne.s32.totalorder %s87, %s90
    %p96 = scmp.eq.s32.totalorder %s9, 0
    %p97 = por %p95, %p96
    %p98 = scmp.ne.s32.totalorder %s87, %s90
    %p99 = scmp.eq.s32.totalorder %s14, 1
    %p100 = por %p98, %p99
    %p101 = scmp.ne.s32.totalorder %s90, %s91
    %p102 = scmp.eq.s32.totalorder %s14, 0
    %p103 = por %p101, %p102
    %p104 = scmp.ne.s32.totalorder %s90, %s91
    %p105 = scmp.eq.s32.totalorder %s15, 1
    %p106 = por %p104, %p105
    %p108 = scmp.ne.s32.totalorder %s91, %s107
    %p109 = scmp.eq.s32.totalorder %s15, 0
    %p110 = por %p108, %p109
    %p111 = scmp.le.s32.totalorder 1, %s9
    %p112 = scmp.lt.s32.totalorder %s9, 3
    %p113 = pnand %p111, %p112
    %p114 = pneg %p113
    // Predicated region
    $region9: #{net_forward.5} parent=5 // pred_check
      _
    $region10: #{net_forward.5} parent=5 // pred_check_branch
      %116 = sbr.rel (%p113) target = $region12
    $region11: #{net_forward.5} parent=5 // pred_region
      %s117 = ssub.s32 %s9, 1
      // Predicated region
      $region13: #{net_forward.5} parent=11 // pred_check
        %p118 = pneg %p56
      $region14: #{net_forward.5} parent=11 // pred_check_branch
        %120 = sbr.rel (%p118) target = $region16
      $region15: #{net_forward.5} parent=11 // pred_region
        _
      $region16: #{net_forward.5} parent=11 // pred_fallthru
        _
      // Predicated region
      $region17: #{net_forward.5} parent=11 // pred_check
        %p121 = pneg %p77
      $region18: #{net_forward.5} parent=11 // pred_check_branch
        %123 = sbr.rel (%p121) target = $region20
      $region19: #{net_forward.5} parent=11 // pred_region
        _
      $region20: #{net_forward.5} parent=11 // pred_fallthru
        _
    $region12: #{net_forward.5} parent=5 // pred_fallthru
      _
    %p124 = scmp.lt.s32.totalorder %s9, 2
    // Predicated region
    $region21: #{net_forward.5} parent=5 // pred_check
      %p125 = pneg %p124
    $region22: #{net_forward.5} parent=5 // pred_check_branch
      %127 = sbr.rel (%p125) target = $region24
    $region23: #{net_forward.5} parent=5 // pred_region
      // Predicated region
      $region25: #{net_forward.5} parent=23 // pred_check
        %p128 = pneg %p29
      $region26: #{net_forward.5} parent=23 // pred_check_branch
        %130 = sbr.rel (%p128) target = $region28
      $region27: #{net_forward.5} parent=23 // pred_region
        %p131 = scmp.lt.s32.totalorder %s9, 1
        %s132 = scalar_select %p131, %s9, 1
        %s133 = smul.addr %s132, 294
        %s134 = smul.addr %s133, 4
        %s135 = scalar_lea.vmem %s0, %s134
      $region28: #{net_forward.5} parent=23 // pred_fallthru
        _
    $region24: #{net_forward.5} parent=5 // pred_fallthru
      _
    %p136 = scmp.le.s32.totalorder 1, %s9
    %p137 = scmp.lt.s32.totalorder %s9, 3
    %p138 = pnand %p136, %p137
    %p139 = pneg %p138
    // Predicated region
    $region29: #{net_forward.5} parent=5 // pred_check
      _
    $region30: #{net_forward.5} parent=5 // pred_check_branch
      %141 = sbr.rel (%p138) target = $region32
    $region31: #{net_forward.5} parent=5 // pred_region
      %s142 = ssub.s32 %s9, 1
      %p143 = scmp.lt.s32.totalorder %s14, 1
      %s144 = scalar_select %p143, %s14, 1
      %s145 = smul.addr %s144, 294
      %s146 = smul.addr %s145, 4
      %s147 = scalar_lea.vmem %s0, %s146
      %p148 = pneg %p35
      %p149 = pneg %p32
      %p150 = pneg %p56
      %p151 = pneg %p53
      %p152 = pneg %p77
      %p153 = pneg %p74
      %p154 = pneg %p103
      %p155 = pneg %p100
      %p156 = scmp.lt.s32.totalorder %s14, 1
      %s157 = scalar_select %p156, %s14, 1
      %s158 = smul.addr %s157, 25
      %s159 = smul.addr %s158, 4
      %s160 = scalar_lea.vmem %s3, %s159
      %p161 = scmp.lt.s32.totalorder %s14, 1
      %s162 = scalar_select %p161, %s14, 1
      %s163 = smul.addr %s162, 294
      %s164 = smul.addr %s163, 4
      %s165 = scalar_lea.vmem %s0, %s164
      %p166 = scmp.lt.s32.totalorder %s14, 1
      %s167 = scalar_select %p166, %s14, 1
      %s168 = smul.addr %s167, 25
      %s169 = smul.addr %s168, 4
      %s170 = scalar_lea.vmem %s3, %s169
      %v172 = vld [vmem:[%s165] sm:$0xff]
      %v173 = vld [vmem:[%s165 + $0x8] sm:$0xf]
      %v174 = vld [vmem:[%s165 + $0xc] sm:$0xff]
      %v175 = vld [vmem:[%s165 + $0x14] sm:$0xf]
      %v176 = vld [vmem:[%s165 + $0x18] sm:$0xff]
      %v177 = vld [vmem:[%s165 + $0x20] sm:$0xf]
      %v178 = vld [vmem:[%s165 + $0x24] sm:$0xff]
      %v179 = vld [vmem:[%s165 + $0x2c] sm:$0xf]
      %v180 = vld [vmem:[%s165 + $0x30] sm:$0xff]
      %v181 = vld [vmem:[%s165 + $0x38] sm:$0xf]
      %v182 = vld [vmem:[%s165 + $0x3c] sm:$0xff]
      %v183 = vld [vmem:[%s165 + $0x44] sm:$0xf]
      %v184 = vld [vmem:[%s165 + $0x48] sm:$0xff]
      %v185 = vld [vmem:[%s165 + $0x50] sm:$0xf]
      %v186 = vld [vmem:[%s165 + $0x54] sm:$0xff]
      %v187 = vld [vmem:[%s165 + $0x5c] sm:$0xf]
      %v188 = vld [vmem:[%s165 + $0x60] sm:$0xff]
      %v189 = vld [vmem:[%s165 + $0x68] sm:$0xf]
      %v190 = vld [vmem:[%s165 + $0x6c] sm:$0xff]
      %v191 = vld [vmem:[%s165 + $0x74] sm:$0xf]
      %v192 = vld [vmem:[%s165 + $0x78] sm:$0xff]
      %v193 = vld [vmem:[%s165 + $0x80] sm:$0xf]
      %v194 = vld [vmem:[%s165 + $0x84] sm:$0xff]
      %v195 = vld [vmem:[%s165 + $0x8c] sm:$0xf]
      %v196 = vld [vmem:[%s165 + $0x90] sm:$0xff]
      %v197 = vld [vmem:[%s165 + $0x98] sm:$0xf]
      %v198 = vld [vmem:[%s165 + $0x9c] sm:$0xff]
      %v199 = vld [vmem:[%s165 + $0xa4] sm:$0xf]
      %v200 = vld [vmem:[%s165 + $0xa8] sm:$0xff]
      %v201 = vld [vmem:[%s165 + $0xb0] sm:$0xf]
      %v202 = vld [vmem:[%s165 + $0xb4] sm:$0xff]
      %v203 = vld [vmem:[%s165 + $0xbc] sm:$0xf]
      %v204 = vld [vmem:[%s165 + $0xc0] sm:$0xff]
      %v205 = vld [vmem:[%s165 + $0xc8] sm:$0xf]
      %v206 = vld [vmem:[%s165 + $0xcc] sm:$0xff]
      %v207 = vld [vmem:[%s165 + $0xd4] sm:$0xf]
      %v208 = vld [vmem:[%s165 + $0xd8] sm:$0xff]
      %v209 = vld [vmem:[%s165 + $0xe0] sm:$0xf]
      %v210 = vld [vmem:[%s165 + $0xe4] sm:$0xff]
      %v211 = vld [vmem:[%s165 + $0xec] sm:$0xf]
      %v212 = vld [vmem:[%s165 + $0xf0] sm:$0xff]
      %v213 = vld [vmem:[%s165 + $0xf8] sm:$0xf]
      %v214 = vld [vmem:[%s165 + $0xfc] sm:$0xff]
      %v215 = vld [vmem:[%s165 + $0x104] sm:$0xf]
      %v216 = vld [vmem:[%s165 + $0x108] sm:$0xff]
      %v217 = vld [vmem:[%s165 + $0x110] sm:$0xf]
      %v218 = vld [vmem:[%s165 + $0x114] sm:$0xff]
      %v219 = vld [vmem:[%s165 + $0x11c] sm:$0xf]
      %v220 = vld [vmem:[%s165 + $0x120] sm:$0xff]
      %v221 = vld [vmem:[%s165 + $0x128] sm:$0xf]
      %v222 = vld [vmem:[%s165 + $0x12c] sm:$0xff]
      %v223 = vld [vmem:[%s165 + $0x134] sm:$0xf]
      %v224 = vld [vmem:[%s165 + $0x138] sm:$0xff]
      %v225 = vld [vmem:[%s165 + $0x140] sm:$0xf]
      %v226 = vld [vmem:[%s165 + $0x144] sm:$0xff]
      %v227 = vld [vmem:[%s165 + $0x14c] sm:$0xf]
      %v228 = vld [vmem:[%s165 + $0x150] sm:$0xff]
      %v229 = vld [vmem:[%s165 + $0x158] sm:$0xf]
      %v230 = vld [vmem:[%s165 + $0x15c] sm:$0xff]
      %v231 = vld [vmem:[%s165 + $0x164] sm:$0xf]
      %v232 = vld [vmem:[%s165 + $0x168] sm:$0xff]
      %v233 = vld [vmem:[%s165 + $0x170] sm:$0xf]
      %v234 = vld [vmem:[%s165 + $0x174] sm:$0xff]
      %v235 = vld [vmem:[%s165 + $0x17c] sm:$0xf]
      %v236 = vld [vmem:[%s165 + $0x180] sm:$0xff]
      %v237 = vld [vmem:[%s165 + $0x188] sm:$0xf]
      %v238 = vld [vmem:[%s165 + $0x18c] sm:$0xff]
      %v239 = vld [vmem:[%s165 + $0x194] sm:$0xf]
      %v240 = vld [vmem:[%s165 + $0x198] sm:$0xff]
      %v241 = vld [vmem:[%s165 + $0x1a0] sm:$0xf]
      %v242 = vld [vmem:[%s165 + $0x1a4] sm:$0xff]
      %v243 = vld [vmem:[%s165 + $0x1ac] sm:$0xf]
      %v244 = vld [vmem:[%s165 + $0x1b0] sm:$0xff]
      %v245 = vld [vmem:[%s165 + $0x1b8] sm:$0xf]
      %v246 = vld [vmem:[%s165 + $0x1bc] sm:$0xff]
      %v247 = vld [vmem:[%s165 + $0x1c4] sm:$0xf]
      %v248 = vld [vmem:[%s165 + $0x1c8] sm:$0xff]
      %v249 = vld [vmem:[%s165 + $0x1d0] sm:$0xf]
      %v250 = vld [vmem:[%s165 + $0x1d4] sm:$0xff]
      %v251 = vld [vmem:[%s165 + $0x1dc] sm:$0xf]
      %v252 = vld [vmem:[%s165 + $0x1e0] sm:$0xff]
      %v253 = vld [vmem:[%s165 + $0x1e8] sm:$0xf]
      %v254 = vld [vmem:[%s165 + $0x1ec] sm:$0xff]
      %v255 = vld [vmem:[%s165 + $0x1f4] sm:$0xf]
      %v256 = vld [vmem:[%s165 + $0x1f8] sm:$0xff]
      %v257 = vld [vmem:[%s165 + $0x200] sm:$0xf]
      %v258 = vld [vmem:[%s165 + $0x204] sm:$0xff]
      %v259 = vld [vmem:[%s165 + $0x20c] sm:$0xf]
      %v260 = vld [vmem:[%s165 + $0x210] sm:$0xff]
      %v261 = vld [vmem:[%s165 + $0x218] sm:$0xf]
      %v262 = vld [vmem:[%s165 + $0x21c] sm:$0xff]
      %v263 = vld [vmem:[%s165 + $0x224] sm:$0xf]
      %v264 = vld [vmem:[%s165 + $0x228] sm:$0xff]
      %v265 = vld [vmem:[%s165 + $0x230] sm:$0xf]
      %v266 = vld [vmem:[%s165 + $0x234] sm:$0xff]
      %v267 = vld [vmem:[%s165 + $0x23c] sm:$0xf]
      %v268 = vld [vmem:[%s165 + $0x240] sm:$0xff]
      %v269 = vld [vmem:[%s165 + $0x248] sm:$0xf]
      %v270 = vld [vmem:[%s165 + $0x24c] sm:$0xff]
      %v271 = vld [vmem:[%s165 + $0x254] sm:$0xf]
      %v272 = vld [vmem:[%s165 + $0x258] sm:$0xff]
      %v273 = vld [vmem:[%s165 + $0x260] sm:$0xf]
      %v274 = vld [vmem:[%s165 + $0x264] sm:$0xff]
      %v275 = vld [vmem:[%s165 + $0x26c] sm:$0xf]
      %v276 = vld [vmem:[%s165 + $0x270] sm:$0xff]
      %v277 = vld [vmem:[%s165 + $0x278] sm:$0xf]
      %v278 = vld [vmem:[%s165 + $0x27c] sm:$0xff]
      %v279 = vld [vmem:[%s165 + $0x284] sm:$0xf]
      %v280 = vld [vmem:[%s165 + $0x288] sm:$0xff]
      %v281 = vld [vmem:[%s165 + $0x290] sm:$0xf]
      %v282 = vld [vmem:[%s165 + $0x294] sm:$0xff]
      %v283 = vld [vmem:[%s165 + $0x29c] sm:$0xf]
      %v284 = vld [vmem:[%s165 + $0x2a0] sm:$0xff]
      %v285 = vld [vmem:[%s165 + $0x2a8] sm:$0xf]
      %v286 = vld [vmem:[%s165 + $0x2ac] sm:$0xff]
      %v287 = vld [vmem:[%s165 + $0x2b4] sm:$0xf]
      %v288 = vld [vmem:[%s165 + $0x2b8] sm:$0xff]
      %v289 = vld [vmem:[%s165 + $0x2c0] sm:$0xf]
      %v290 = vld [vmem:[%s165 + $0x2c4] sm:$0xff]
      %v291 = vld [vmem:[%s165 + $0x2cc] sm:$0xf]
      %v292 = vld [vmem:[%s165 + $0x2d0] sm:$0xff]
      %v293 = vld [vmem:[%s165 + $0x2d8] sm:$0xf]
      %v294 = vld [vmem:[%s165 + $0x2dc] sm:$0xff]
      %v295 = vld [vmem:[%s165 + $0x2e4] sm:$0xf]
      %v296 = vld [vmem:[%s165 + $0x2e8] sm:$0xff]
      %v297 = vld [vmem:[%s165 + $0x2f0] sm:$0xf]
      %v298 = vld [vmem:[%s165 + $0x2f4] sm:$0xff]
      %v299 = vld [vmem:[%s165 + $0x2fc] sm:$0xf]
      %v300 = vld [vmem:[%s165 + $0x300] sm:$0xff]
      %v301 = vld [vmem:[%s165 + $0x308] sm:$0xf]
      %v302 = vld [vmem:[%s165 + $0x30c] sm:$0xff]
      %v303 = vld [vmem:[%s165 + $0x314] sm:$0xf]
      %v304 = vld [vmem:[%s165 + $0x318] sm:$0xff]
      %v305 = vld [vmem:[%s165 + $0x320] sm:$0xf]
      %v306 = vld [vmem:[%s165 + $0x324] sm:$0xff]
      %v307 = vld [vmem:[%s165 + $0x32c] sm:$0xf]
      %v308 = vld [vmem:[%s165 + $0x330] sm:$0xff]
      %v309 = vld [vmem:[%s165 + $0x338] sm:$0xf]
      %v310 = vld [vmem:[%s165 + $0x33c] sm:$0xff]
      %v311 = vld [vmem:[%s165 + $0x344] sm:$0xf]
      %v312 = vld [vmem:[%s165 + $0x348] sm:$0xff]
      %v313 = vld [vmem:[%s165 + $0x350] sm:$0xf]
      %v314 = vld [vmem:[%s165 + $0x354] sm:$0xff]
      %v315 = vld [vmem:[%s165 + $0x35c] sm:$0xf]
      %v316 = vld [vmem:[%s165 + $0x360] sm:$0xff]
      %v317 = vld [vmem:[%s165 + $0x368] sm:$0xf]
      %v318 = vld [vmem:[%s165 + $0x36c] sm:$0xff]
      %v319 = vld [vmem:[%s165 + $0x374] sm:$0xf]
      %v320 = vld [vmem:[%s165 + $0x378] sm:$0xff]
      %v321 = vld [vmem:[%s165 + $0x380] sm:$0xf]
      %v322 = vld [vmem:[%s165 + $0x384] sm:$0xff]
      %v323 = vld [vmem:[%s165 + $0x38c] sm:$0xf]
      %v324 = vld [vmem:[%s165 + $0x390] sm:$0xff]
      %v325 = vld [vmem:[%s165 + $0x398] sm:$0xf]
      %v326 = vld [vmem:[%s165 + $0x39c] sm:$0xff]
      %v327 = vld [vmem:[%s165 + $0x3a4] sm:$0xf]
      %v328 = vld [vmem:[%s165 + $0x3a8] sm:$0xff]
      %v329 = vld [vmem:[%s165 + $0x3b0] sm:$0xf]
      %v330 = vld [vmem:[%s165 + $0x3b4] sm:$0xff]
      %v331 = vld [vmem:[%s165 + $0x3bc] sm:$0xf]
      %v332 = vld [vmem:[%s165 + $0x3c0] sm:$0xff]
      %v333 = vld [vmem:[%s165 + $0x3c8] sm:$0xf]
      %v334 = vld [vmem:[%s165 + $0x3cc] sm:$0xff]
      %v335 = vld [vmem:[%s165 + $0x3d4] sm:$0xf]
      %v336 = vld [vmem:[%s165 + $0x3d8] sm:$0xff]
      %v337 = vld [vmem:[%s165 + $0x3e0] sm:$0xf]
      %v338 = vld [vmem:[%s165 + $0x3e4] sm:$0xff]
      %v339 = vld [vmem:[%s165 + $0x3ec] sm:$0xf]
      %v340 = vld [vmem:[%s165 + $0x3f0] sm:$0xff]
      %v341 = vld [vmem:[%s165 + $0x3f8] sm:$0xf]
      %v342 = vld [vmem:[%s165 + $0x3fc] sm:$0xff]
      %v343 = vld [vmem:[%s165 + $0x404] sm:$0xf]
      %v344 = vld [vmem:[%s165 + $0x408] sm:$0xff]
      %v345 = vld [vmem:[%s165 + $0x410] sm:$0xf]
      %v346 = vld [vmem:[%s165 + $0x414] sm:$0xff]
      %v347 = vld [vmem:[%s165 + $0x41c] sm:$0xf]
      %v348 = vld [vmem:[%s165 + $0x420] sm:$0xff]
      %v349 = vld [vmem:[%s165 + $0x428] sm:$0xf]
      %v350 = vld [vmem:[%s165 + $0x42c] sm:$0xff]
      %v351 = vld [vmem:[%s165 + $0x434] sm:$0xf]
      %v352 = vld [vmem:[%s165 + $0x438] sm:$0xff]
      %v353 = vld [vmem:[%s165 + $0x440] sm:$0xf]
      %v354 = vld [vmem:[%s165 + $0x444] sm:$0xff]
      %v355 = vld [vmem:[%s165 + $0x44c] sm:$0xf]
      %v356 = vld [vmem:[%s165 + $0x450] sm:$0xff]
      %v357 = vld [vmem:[%s165 + $0x458] sm:$0xf]
      %v358 = vld [vmem:[%s165 + $0x45c] sm:$0xff]
      %v359 = vld [vmem:[%s165 + $0x464] sm:$0xf]
      %v360 = vld [vmem:[%s165 + $0x468] sm:$0xff]
      %v361 = vld [vmem:[%s165 + $0x470] sm:$0xf]
      %v362 = vld [vmem:[%s165 + $0x474] sm:$0xff]
      %v363 = vld [vmem:[%s165 + $0x47c] sm:$0xf]
      %v364 = vld [vmem:[%s165 + $0x480] sm:$0xff]
      %v365 = vld [vmem:[%s165 + $0x488] sm:$0xf]
      %v366 = vld [vmem:[%s165 + $0x48c] sm:$0xff]
      %v367 = vld [vmem:[%s165 + $0x494] sm:$0xf]
      %v368 = vld [vmem:[%s1] sm:$0xf]
      %v369 = vld [vmem:[%s1 + $0x4] sm:$0xf]
      %v370 = vld [vmem:[%s1 + $0x8] sm:$0xf]
      %v371 = vld [vmem:[%s1 + $0xc] sm:$0xf]
      %v372 = vld [vmem:[%s1 + $0x10] sm:$0xf]
      %v373 = vld [vmem:[%s1 + $0x14] sm:$0xf]
      %v374 = vld [vmem:[%s1 + $0x18] sm:$0xf]
      %v375 = vld [vmem:[%s1 + $0x1c] sm:$0xf]
      %v376 = vld [vmem:[%s1 + $0x20] sm:$0xf]
      %v377 = vld [vmem:[%s1 + $0x24] sm:$0xf]
      %v378 = vld [vmem:[%s1 + $0x28] sm:$0xf]
      %v379 = vld [vmem:[%s1 + $0x2c] sm:$0xf]
      %v380 = vld [vmem:[%s1 + $0x30] sm:$0xf]
      %v381 = vld [vmem:[%s1 + $0x34] sm:$0xf]
      %v382 = vld [vmem:[%s1 + $0x38] sm:$0xf]
      %v383 = vld [vmem:[%s1 + $0x3c] sm:$0xf]
      %v384 = vld [vmem:[%s1 + $0x40] sm:$0xf]
      %v385 = vld [vmem:[%s1 + $0x44] sm:$0xf]
      %v386 = vld [vmem:[%s1 + $0x48] sm:$0xf]
      %v387 = vld [vmem:[%s1 + $0x4c] sm:$0xf]
      %v388 = vld [vmem:[%s1 + $0x50] sm:$0xf]
      %v389 = vld [vmem:[%s1 + $0x54] sm:$0xf]
      %v390 = vld [vmem:[%s1 + $0x58] sm:$0xf]
      %v391 = vld [vmem:[%s1 + $0x5c] sm:$0xf]
      %v392 = vld [vmem:[%s1 + $0x60] sm:$0xf]
      %v393 = vld [vmem:[%s1 + $0x64] sm:$0xf]
      %v394 = vld [vmem:[%s1 + $0x68] sm:$0xf]
      %v395 = vld [vmem:[%s1 + $0x6c] sm:$0xf]
      %v396 = vld [vmem:[%s1 + $0x70] sm:$0xf]
      %v397 = vld [vmem:[%s1 + $0x74] sm:$0xf]
      %v398 = vld [vmem:[%s1 + $0x78] sm:$0xf]
      %v399 = vld [vmem:[%s1 + $0x7c] sm:$0xf]
      %v400 = vld [vmem:[%s1 + $0x80] sm:$0xf]
      %v401 = vld [vmem:[%s1 + $0x84] sm:$0xf]
      %v402 = vld [vmem:[%s1 + $0x88] sm:$0xf]
      %v403 = vld [vmem:[%s1 + $0x8c] sm:$0xf]
      %v404 = vld [vmem:[%s2] sm:$0x1]
      %v406 = vlaneseq
      %v407 = vshrl.u32 %v406, 7
      %v408 = vsub.s32 0, %v407
      %v409 = vrot.slane %v404, %v408
      %v607 = vunpack.c.l.b16 %v172
      %v608 = vunpack.c.h.b16 %v172
      %v609 = vunpack.c.l.b16 %v173
      %v610 = vunpack.c.l.b16 %v174
      %v611 = vunpack.c.h.b16 %v174
      %v612 = vunpack.c.l.b16 %v175
      %v613 = vunpack.c.l.b16 %v176
      %v614 = vunpack.c.h.b16 %v176
      %v615 = vunpack.c.l.b16 %v177
      %v616 = vunpack.c.l.b16 %v178
      %v617 = vunpack.c.h.b16 %v178
      %v618 = vunpack.c.l.b16 %v179
      %v619 = vunpack.c.l.b16 %v180
      %v620 = vunpack.c.h.b16 %v180
      %v621 = vunpack.c.l.b16 %v181
      %v622 = vunpack.c.l.b16 %v182
      %v623 = vunpack.c.h.b16 %v182
      %v624 = vunpack.c.l.b16 %v183
      %v625 = vunpack.c.l.b16 %v184
      %v626 = vunpack.c.h.b16 %v184
      %v627 = vunpack.c.l.b16 %v185
      %v628 = vunpack.c.l.b16 %v186
      %v629 = vunpack.c.h.b16 %v186
      %v630 = vunpack.c.l.b16 %v187
      %v631 = vunpack.c.l.b16 %v188
      %v632 = vunpack.c.h.b16 %v188
      %v633 = vunpack.c.l.b16 %v189
      %v634 = vunpack.c.l.b16 %v190
      %v635 = vunpack.c.h.b16 %v190
      %v636 = vunpack.c.l.b16 %v191
      %v637 = vunpack.c.l.b16 %v192
      %v638 = vunpack.c.h.b16 %v192
      %v639 = vunpack.c.l.b16 %v193
      %v640 = vunpack.c.l.b16 %v194
      %v641 = vunpack.c.h.b16 %v194
      %v642 = vunpack.c.l.b16 %v195
      %v643 = vunpack.c.l.b16 %v196
      %v644 = vunpack.c.h.b16 %v196
      %v645 = vunpack.c.l.b16 %v197
      %v646 = vunpack.c.l.b16 %v198
      %v647 = vunpack.c.h.b16 %v198
      %v648 = vunpack.c.l.b16 %v199
      %v649 = vunpack.c.l.b16 %v200
      %v650 = vunpack.c.h.b16 %v200
      %v651 = vunpack.c.l.b16 %v201
      %v652 = vunpack.c.l.b16 %v202
      %v653 = vunpack.c.h.b16 %v202
      %v654 = vunpack.c.l.b16 %v203
      %v655 = vunpack.c.l.b16 %v204
      %v656 = vunpack.c.h.b16 %v204
      %v657 = vunpack.c.l.b16 %v205
      %v658 = vunpack.c.l.b16 %v206
      %v659 = vunpack.c.h.b16 %v206
      %v660 = vunpack.c.l.b16 %v207
      %v661 = vunpack.c.l.b16 %v208
      %v662 = vunpack.c.h.b16 %v208
      %v663 = vunpack.c.l.b16 %v209
      %v664 = vunpack.c.l.b16 %v210
      %v665 = vunpack.c.h.b16 %v210
      %v666 = vunpack.c.l.b16 %v211
      %v667 = vunpack.c.l.b16 %v212
      %v668 = vunpack.c.h.b16 %v212
      %v669 = vunpack.c.l.b16 %v213
      %v670 = vunpack.c.l.b16 %v214
      %v671 = vunpack.c.h.b16 %v214
      %v672 = vunpack.c.l.b16 %v215
      %v673 = vunpack.c.l.b16 %v216
      %v674 = vunpack.c.h.b16 %v216
      %v675 = vunpack.c.l.b16 %v217
      %v676 = vunpack.c.l.b16 %v218
      %v677 = vunpack.c.h.b16 %v218
      %v678 = vunpack.c.l.b16 %v219
      %v679 = vunpack.c.l.b16 %v220
      %v680 = vunpack.c.h.b16 %v220
      %v681 = vunpack.c.l.b16 %v221
      %v682 = vunpack.c.l.b16 %v222
      %v683 = vunpack.c.h.b16 %v222
      %v684 = vunpack.c.l.b16 %v223
      %v685 = vunpack.c.l.b16 %v224
      %v686 = vunpack.c.h.b16 %v224
      %v687 = vunpack.c.l.b16 %v225
      %v688 = vunpack.c.l.b16 %v226
      %v689 = vunpack.c.h.b16 %v226
      %v690 = vunpack.c.l.b16 %v227
      %v691 = vunpack.c.l.b16 %v228
      %v692 = vunpack.c.h.b16 %v228
      %v693 = vunpack.c.l.b16 %v229
      %v694 = vunpack.c.l.b16 %v230
      %v695 = vunpack.c.h.b16 %v230
      %v696 = vunpack.c.l.b16 %v231
      %v697 = vunpack.c.l.b16 %v232
      %v698 = vunpack.c.h.b16 %v232
      %v699 = vunpack.c.l.b16 %v233
      %v700 = vunpack.c.l.b16 %v234
      %v701 = vunpack.c.h.b16 %v234
      %v702 = vunpack.c.l.b16 %v235
      %v703 = vunpack.c.l.b16 %v236
      %v704 = vunpack.c.h.b16 %v236
      %v705 = vunpack.c.l.b16 %v237
      %v706 = vunpack.c.l.b16 %v238
      %v707 = vunpack.c.h.b16 %v238
      %v708 = vunpack.c.l.b16 %v239
      %v709 = vunpack.c.l.b16 %v240
      %v710 = vunpack.c.h.b16 %v240
      %v711 = vunpack.c.l.b16 %v241
      %v712 = vunpack.c.l.b16 %v242
      %v713 = vunpack.c.h.b16 %v242
      %v714 = vunpack.c.l.b16 %v243
      %v715 = vunpack.c.l.b16 %v244
      %v716 = vunpack.c.h.b16 %v244
      %v717 = vunpack.c.l.b16 %v245
      %v718 = vunpack.c.l.b16 %v246
      %v719 = vunpack.c.h.b16 %v246
      %v720 = vunpack.c.l.b16 %v247
      %v721 = vunpack.c.l.b16 %v248
      %v722 = vunpack.c.h.b16 %v248
      %v723 = vunpack.c.l.b16 %v249
      %v724 = vunpack.c.l.b16 %v250
      %v725 = vunpack.c.h.b16 %v250
      %v726 = vunpack.c.l.b16 %v251
      %v727 = vunpack.c.l.b16 %v252
      %v728 = vunpack.c.h.b16 %v252
      %v729 = vunpack.c.l.b16 %v253
      %v730 = vunpack.c.l.b16 %v254
      %v731 = vunpack.c.h.b16 %v254
      %v732 = vunpack.c.l.b16 %v255
      %v733 = vunpack.c.l.b16 %v256
      %v734 = vunpack.c.h.b16 %v256
      %v735 = vunpack.c.l.b16 %v257
      %v736 = vunpack.c.l.b16 %v258
      %v737 = vunpack.c.h.b16 %v258
      %v738 = vunpack.c.l.b16 %v259
      %v739 = vunpack.c.l.b16 %v260
      %v740 = vunpack.c.h.b16 %v260
      %v741 = vunpack.c.l.b16 %v261
      %v742 = vunpack.c.l.b16 %v262
      %v743 = vunpack.c.h.b16 %v262
      %v744 = vunpack.c.l.b16 %v263
      %v745 = vunpack.c.l.b16 %v264
      %v746 = vunpack.c.h.b16 %v264
      %v747 = vunpack.c.l.b16 %v265
      %v748 = vunpack.c.l.b16 %v266
      %v749 = vunpack.c.h.b16 %v266
      %v750 = vunpack.c.l.b16 %v267
      %v751 = vunpack.c.l.b16 %v268
      %v752 = vunpack.c.h.b16 %v268
      %v753 = vunpack.c.l.b16 %v269
      %v754 = vunpack.c.l.b16 %v270
      %v755 = vunpack.c.h.b16 %v270
      %v756 = vunpack.c.l.b16 %v271
      %v757 = vunpack.c.l.b16 %v272
      %v758 = vunpack.c.h.b16 %v272
      %v759 = vunpack.c.l.b16 %v273
      %v760 = vunpack.c.l.b16 %v274
      %v761 = vunpack.c.h.b16 %v274
      %v762 = vunpack.c.l.b16 %v275
      %v763 = vunpack.c.l.b16 %v276
      %v764 = vunpack.c.h.b16 %v276
      %v765 = vunpack.c.l.b16 %v277
      %v766 = vunpack.c.l.b16 %v278
      %v767 = vunpack.c.h.b16 %v278
      %v768 = vunpack.c.l.b16 %v279
      %v769 = vunpack.c.l.b16 %v280
      %v770 = vunpack.c.h.b16 %v280
      %v771 = vunpack.c.l.b16 %v281
      %v772 = vunpack.c.l.b16 %v282
      %v773 = vunpack.c.h.b16 %v282
      %v774 = vunpack.c.l.b16 %v283
      %v775 = vunpack.c.l.b16 %v284
      %v776 = vunpack.c.h.b16 %v284
      %v777 = vunpack.c.l.b16 %v285
      %v778 = vunpack.c.l.b16 %v286
      %v779 = vunpack.c.h.b16 %v286
      %v780 = vunpack.c.l.b16 %v287
      %v781 = vunpack.c.l.b16 %v288
      %v782 = vunpack.c.h.b16 %v288
      %v783 = vunpack.c.l.b16 %v289
      %v784 = vunpack.c.l.b16 %v290
      %v785 = vunpack.c.h.b16 %v290
      %v786 = vunpack.c.l.b16 %v291
      %v787 = vunpack.c.l.b16 %v292
      %v788 = vunpack.c.h.b16 %v292
      %v789 = vunpack.c.l.b16 %v293
      %v790 = vunpack.c.l.b16 %v294
      %v791 = vunpack.c.h.b16 %v294
      %v792 = vunpack.c.l.b16 %v295
      %v793 = vunpack.c.l.b16 %v296
      %v794 = vunpack.c.h.b16 %v296
      %v795 = vunpack.c.l.b16 %v297
      %v796 = vunpack.c.l.b16 %v298
      %v797 = vunpack.c.h.b16 %v298
      %v798 = vunpack.c.l.b16 %v299
      %v799 = vunpack.c.l.b16 %v300
      %v800 = vunpack.c.h.b16 %v300
      %v801 = vunpack.c.l.b16 %v301
      %v802 = vunpack.c.l.b16 %v302
      %v803 = vunpack.c.h.b16 %v302
      %v804 = vunpack.c.l.b16 %v303
      %v805 = vunpack.c.l.b16 %v304
      %v806 = vunpack.c.h.b16 %v304
      %v807 = vunpack.c.l.b16 %v305
      %v808 = vunpack.c.l.b16 %v306
      %v809 = vunpack.c.h.b16 %v306
      %v810 = vunpack.c.l.b16 %v307
      %v811 = vunpack.c.l.b16 %v308
      %v812 = vunpack.c.h.b16 %v308
      %v813 = vunpack.c.l.b16 %v309
      %v814 = vunpack.c.l.b16 %v310
      %v815 = vunpack.c.h.b16 %v310
      %v816 = vunpack.c.l.b16 %v311
      %v817 = vunpack.c.l.b16 %v312
      %v818 = vunpack.c.h.b16 %v312
      %v819 = vunpack.c.l.b16 %v313
      %v820 = vunpack.c.l.b16 %v314
      %v821 = vunpack.c.h.b16 %v314
      %v822 = vunpack.c.l.b16 %v315
      %v823 = vunpack.c.l.b16 %v316
      %v824 = vunpack.c.h.b16 %v316
      %v825 = vunpack.c.l.b16 %v317
      %v826 = vunpack.c.l.b16 %v318
      %v827 = vunpack.c.h.b16 %v318
      %v828 = vunpack.c.l.b16 %v319
      %v829 = vunpack.c.l.b16 %v320
      %v830 = vunpack.c.h.b16 %v320
      %v831 = vunpack.c.l.b16 %v321
      %v832 = vunpack.c.l.b16 %v322
      %v833 = vunpack.c.h.b16 %v322
      %v834 = vunpack.c.l.b16 %v323
      %v835 = vunpack.c.l.b16 %v324
      %v836 = vunpack.c.h.b16 %v324
      %v837 = vunpack.c.l.b16 %v325
      %v838 = vunpack.c.l.b16 %v326
      %v839 = vunpack.c.h.b16 %v326
      %v840 = vunpack.c.l.b16 %v327
      %v841 = vunpack.c.l.b16 %v328
      %v842 = vunpack.c.h.b16 %v328
      %v843 = vunpack.c.l.b16 %v329
      %v844 = vunpack.c.l.b16 %v330
      %v845 = vunpack.c.h.b16 %v330
      %v846 = vunpack.c.l.b16 %v331
      %v847 = vunpack.c.l.b16 %v332
      %v848 = vunpack.c.h.b16 %v332
      %v849 = vunpack.c.l.b16 %v333
      %v850 = vunpack.c.l.b16 %v334
      %v851 = vunpack.c.h.b16 %v334
      %v852 = vunpack.c.l.b16 %v335
      %v853 = vunpack.c.l.b16 %v336
      %v854 = vunpack.c.h.b16 %v336
      %v855 = vunpack.c.l.b16 %v337
      %v856 = vunpack.c.l.b16 %v338
      %v857 = vunpack.c.h.b16 %v338
      %v858 = vunpack.c.l.b16 %v339
      %v859 = vunpack.c.l.b16 %v340
      %v860 = vunpack.c.h.b16 %v340
      %v861 = vunpack.c.l.b16 %v341
      %v862 = vunpack.c.l.b16 %v342
      %v863 = vunpack.c.h.b16 %v342
      %v864 = vunpack.c.l.b16 %v343
      %v865 = vunpack.c.l.b16 %v344
      %v866 = vunpack.c.h.b16 %v344
      %v867 = vunpack.c.l.b16 %v345
      %v868 = vunpack.c.l.b16 %v346
      %v869 = vunpack.c.h.b16 %v346
      %v870 = vunpack.c.l.b16 %v347
      %v871 = vunpack.c.l.b16 %v348
      %v872 = vunpack.c.h.b16 %v348
      %v873 = vunpack.c.l.b16 %v349
      %v874 = vunpack.c.l.b16 %v350
      %v875 = vunpack.c.h.b16 %v350
      %v876 = vunpack.c.l.b16 %v351
      %v877 = vunpack.c.l.b16 %v352
      %v878 = vunpack.c.h.b16 %v352
      %v879 = vunpack.c.l.b16 %v353
      %v880 = vunpack.c.l.b16 %v354
      %v881 = vunpack.c.h.b16 %v354
      %v882 = vunpack.c.l.b16 %v355
      %v883 = vunpack.c.l.b16 %v356
      %v884 = vunpack.c.h.b16 %v356
      %v885 = vunpack.c.l.b16 %v357
      %v886 = vunpack.c.l.b16 %v358
      %v887 = vunpack.c.h.b16 %v358
      %v888 = vunpack.c.l.b16 %v359
      %v889 = vunpack.c.l.b16 %v360
      %v890 = vunpack.c.h.b16 %v360
      %v891 = vunpack.c.l.b16 %v361
      %v892 = vunpack.c.l.b16 %v362
      %v893 = vunpack.c.h.b16 %v362
      %v894 = vunpack.c.l.b16 %v363
      %v895 = vunpack.c.l.b16 %v364
      %v896 = vunpack.c.h.b16 %v364
      %v897 = vunpack.c.l.b16 %v365
      %v898 = vunpack.c.l.b16 %v366
      %v899 = vunpack.c.h.b16 %v366
      %v900 = vunpack.c.l.b16 %v367
      %v901 = vpack.c.b16 %v610, %v607
      %v902 = vpack.c.b16 %v611, %v608
      %v903 = vpack.c.b16 %v612, %v609
      %v904 = vpack.c.b16 %v616, %v613
      %v905 = vpack.c.b16 %v617, %v614
      %v906 = vpack.c.b16 %v618, %v615
      %v907 = vpack.c.b16 %v622, %v619
      %v908 = vpack.c.b16 %v623, %v620
      %v909 = vpack.c.b16 %v624, %v621
      %v910 = vpack.c.b16 %v628, %v625
      %v911 = vpack.c.b16 %v629, %v626
      %v912 = vpack.c.b16 %v630, %v627
      %v913 = vpack.c.b16 %v634, %v631
      %v914 = vpack.c.b16 %v635, %v632
      %v915 = vpack.c.b16 %v636, %v633
      %v916 = vpack.c.b16 %v640, %v637
      %v917 = vpack.c.b16 %v641, %v638
      %v918 = vpack.c.b16 %v642, %v639
      %v919 = vpack.c.b16 %v646, %v643
      %v920 = vpack.c.b16 %v647, %v644
      %v921 = vpack.c.b16 %v648, %v645
      %v922 = vpack.c.b16 %v652, %v649
      %v923 = vpack.c.b16 %v653, %v650
      %v924 = vpack.c.b16 %v654, %v651
      %v925 = vpack.c.b16 %v658, %v655
      %v926 = vpack.c.b16 %v659, %v656
      %v927 = vpack.c.b16 %v660, %v657
      %v928 = vpack.c.b16 %v664, %v661
      %v929 = vpack.c.b16 %v665, %v662
      %v930 = vpack.c.b16 %v666, %v663
      %v931 = vpack.c.b16 %v670, %v667
      %v932 = vpack.c.b16 %v671, %v668
      %v933 = vpack.c.b16 %v672, %v669
      %v934 = vpack.c.b16 %v676, %v673
      %v935 = vpack.c.b16 %v677, %v674
      %v936 = vpack.c.b16 %v678, %v675
      %v937 = vpack.c.b16 %v682, %v679
      %v938 = vpack.c.b16 %v683, %v680
      %v939 = vpack.c.b16 %v684, %v681
      %v940 = vpack.c.b16 %v688, %v685
      %v941 = vpack.c.b16 %v689, %v686
      %v942 = vpack.c.b16 %v690, %v687
      %v943 = vpack.c.b16 %v694, %v691
      %v944 = vpack.c.b16 %v695, %v692
      %v945 = vpack.c.b16 %v696, %v693
      %v946 = vpack.c.b16 %v700, %v697
      %v947 = vpack.c.b16 %v701, %v698
      %v948 = vpack.c.b16 %v702, %v699
      %v949 = vpack.c.b16 %v706, %v703
      %v950 = vpack.c.b16 %v707, %v704
      %v951 = vpack.c.b16 %v708, %v705
      %v952 = vpack.c.b16 %v712, %v709
      %v953 = vpack.c.b16 %v713, %v710
      %v954 = vpack.c.b16 %v714, %v711
      %v955 = vpack.c.b16 %v718, %v715
      %v956 = vpack.c.b16 %v719, %v716
      %v957 = vpack.c.b16 %v720, %v717
      %v958 = vpack.c.b16 %v724, %v721
      %v959 = vpack.c.b16 %v725, %v722
      %v960 = vpack.c.b16 %v726, %v723
      %v961 = vpack.c.b16 %v730, %v727
      %v962 = vpack.c.b16 %v731, %v728
      %v963 = vpack.c.b16 %v732, %v729
      %v964 = vpack.c.b16 %v736, %v733
      %v965 = vpack.c.b16 %v737, %v734
      %v966 = vpack.c.b16 %v738, %v735
      %v967 = vpack.c.b16 %v742, %v739
      %v968 = vpack.c.b16 %v743, %v740
      %v969 = vpack.c.b16 %v744, %v741
      %v970 = vpack.c.b16 %v748, %v745
      %v971 = vpack.c.b16 %v749, %v746
      %v972 = vpack.c.b16 %v750, %v747
      %v973 = vpack.c.b16 %v754, %v751
      %v974 = vpack.c.b16 %v755, %v752
      %v975 = vpack.c.b16 %v756, %v753
      %v976 = vpack.c.b16 %v760, %v757
      %v977 = vpack.c.b16 %v761, %v758
      %v978 = vpack.c.b16 %v762, %v759
      %v979 = vpack.c.b16 %v766, %v763
      %v980 = vpack.c.b16 %v767, %v764
      %v981 = vpack.c.b16 %v768, %v765
      %v982 = vpack.c.b16 %v772, %v769
      %v983 = vpack.c.b16 %v773, %v770
      %v984 = vpack.c.b16 %v774, %v771
      %v985 = vpack.c.b16 %v778, %v775
      %v986 = vpack.c.b16 %v779, %v776
      %v987 = vpack.c.b16 %v780, %v777
      %v988 = vpack.c.b16 %v784, %v781
      %v989 = vpack.c.b16 %v785, %v782
      %v990 = vpack.c.b16 %v786, %v783
      %v991 = vpack.c.b16 %v790, %v787
      %v992 = vpack.c.b16 %v791, %v788
      %v993 = vpack.c.b16 %v792, %v789
      %v994 = vpack.c.b16 %v796, %v793
      %v995 = vpack.c.b16 %v797, %v794
      %v996 = vpack.c.b16 %v798, %v795
      %v997 = vpack.c.b16 %v802, %v799
      %v998 = vpack.c.b16 %v803, %v800
      %v999 = vpack.c.b16 %v804, %v801
      %v1000 = vpack.c.b16 %v808, %v805
      %v1001 = vpack.c.b16 %v809, %v806
      %v1002 = vpack.c.b16 %v810, %v807
      %v1003 = vpack.c.b16 %v814, %v811
      %v1004 = vpack.c.b16 %v815, %v812
      %v1005 = vpack.c.b16 %v816, %v813
      %v1006 = vpack.c.b16 %v820, %v817
      %v1007 = vpack.c.b16 %v821, %v818
      %v1008 = vpack.c.b16 %v822, %v819
      %v1009 = vpack.c.b16 %v826, %v823
      %v1010 = vpack.c.b16 %v827, %v824
      %v1011 = vpack.c.b16 %v828, %v825
      %v1012 = vpack.c.b16 %v832, %v829
      %v1013 = vpack.c.b16 %v833, %v830
      %v1014 = vpack.c.b16 %v834, %v831
      %v1015 = vpack.c.b16 %v838, %v835
      %v1016 = vpack.c.b16 %v839, %v836
      %v1017 = vpack.c.b16 %v840, %v837
      %v1018 = vpack.c.b16 %v844, %v841
      %v1019 = vpack.c.b16 %v845, %v842
      %v1020 = vpack.c.b16 %v846, %v843
      %v1021 = vpack.c.b16 %v850, %v847
      %v1022 = vpack.c.b16 %v851, %v848
      %v1023 = vpack.c.b16 %v852, %v849
      %v1024 = vpack.c.b16 %v856, %v853
      %v1025 = vpack.c.b16 %v857, %v854
      %v1026 = vpack.c.b16 %v858, %v855
      %v1027 = vpack.c.b16 %v862, %v859
      %v1028 = vpack.c.b16 %v863, %v860
      %v1029 = vpack.c.b16 %v864, %v861
      %v1030 = vpack.c.b16 %v868, %v865
      %v1031 = vpack.c.b16 %v869, %v866
      %v1032 = vpack.c.b16 %v870, %v867
      %v1033 = vpack.c.b16 %v874, %v871
      %v1034 = vpack.c.b16 %v875, %v872
      %v1035 = vpack.c.b16 %v876, %v873
      %v1036 = vpack.c.b16 %v880, %v877
      %v1037 = vpack.c.b16 %v881, %v878
      %v1038 = vpack.c.b16 %v882, %v879
      %v1039 = vpack.c.b16 %v886, %v883
      %v1040 = vpack.c.b16 %v887, %v884
      %v1041 = vpack.c.b16 %v888, %v885
      %v1042 = vpack.c.b16 %v892, %v889
      %v1043 = vpack.c.b16 %v893, %v890
      %v1044 = vpack.c.b16 %v894, %v891
      %v1045 = vpack.c.b16 %v898, %v895
      %v1046 = vpack.c.b16 %v899, %v896
      %v1047 = vpack.c.b16 %v900, %v897
      %v1182 = vunpack.c.l.b16 %v368
      %v1183 = vunpack.c.l.b16 %v369
      %v1184 = vunpack.c.l.b16 %v370
      %v1185 = vunpack.c.l.b16 %v371
      %v1186 = vunpack.c.l.b16 %v372
      %v1187 = vunpack.c.l.b16 %v373
      %v1188 = vunpack.c.l.b16 %v374
      %v1189 = vunpack.c.l.b16 %v375
      %v1190 = vunpack.c.l.b16 %v376
      %v1191 = vunpack.c.l.b16 %v377
      %v1192 = vunpack.c.l.b16 %v378
      %v1193 = vunpack.c.l.b16 %v379
      %v1194 = vunpack.c.l.b16 %v380
      %v1195 = vunpack.c.l.b16 %v381
      %v1196 = vunpack.c.l.b16 %v382
      %v1197 = vunpack.c.l.b16 %v383
      %v1198 = vunpack.c.l.b16 %v384
      %v1199 = vunpack.c.l.b16 %v385
      %v1200 = vunpack.c.l.b16 %v386
      %v1201 = vunpack.c.l.b16 %v387
      %v1202 = vunpack.c.l.b16 %v388
      %v1203 = vunpack.c.l.b16 %v389
      %v1204 = vunpack.c.l.b16 %v390
      %v1205 = vunpack.c.l.b16 %v391
      %v1206 = vunpack.c.l.b16 %v392
      %v1207 = vunpack.c.l.b16 %v393
      %v1208 = vunpack.c.l.b16 %v394
      %v1209 = vunpack.c.l.b16 %v395
      %v1210 = vunpack.c.l.b16 %v396
      %v1211 = vunpack.c.l.b16 %v397
      %v1212 = vunpack.c.l.b16 %v398
      %v1213 = vunpack.c.l.b16 %v399
      %v1214 = vunpack.c.l.b16 %v400
      %v1215 = vunpack.c.l.b16 %v401
      %v1216 = vunpack.c.l.b16 %v402
      %v1217 = vunpack.c.l.b16 %v403
      %v1218 = vpack.c.b16 %v1183, %v1182
      %v1219 = vpack.c.b16 %v1185, %v1184
      %v1220 = vpack.c.b16 %v1187, %v1186
      %v1221 = vpack.c.b16 %v1189, %v1188
      %v1222 = vpack.c.b16 %v1191, %v1190
      %v1223 = vpack.c.b16 %v1193, %v1192
      %v1224 = vpack.c.b16 %v1195, %v1194
      %v1225 = vpack.c.b16 %v1197, %v1196
      %v1226 = vpack.c.b16 %v1199, %v1198
      %v1227 = vpack.c.b16 %v1201, %v1200
      %v1228 = vpack.c.b16 %v1203, %v1202
      %v1229 = vpack.c.b16 %v1205, %v1204
      %v1230 = vpack.c.b16 %v1207, %v1206
      %v1231 = vpack.c.b16 %v1209, %v1208
      %v1232 = vpack.c.b16 %v1211, %v1210
      %v1233 = vpack.c.b16 %v1213, %v1212
      %v1234 = vpack.c.b16 %v1215, %v1214
      %v1235 = vpack.c.b16 %v1217, %v1216
      %vm1254 = vcmask 261120
      %v1256 = vsel %vm1254, %v903, 0
      %v1259 = vsel %vm1254, %v906, 0
      %v1262 = vsel %vm1254, %v909, 0
      %v1265 = vsel %vm1254, %v912, 0
      %v1268 = vsel %vm1254, %v915, 0
      %v1271 = vsel %vm1254, %v918, 0
      %v1274 = vsel %vm1254, %v921, 0
      %v1277 = vsel %vm1254, %v924, 0
      %v1280 = vsel %vm1254, %v927, 0
      %v1283 = vsel %vm1254, %v930, 0
      %v1286 = vsel %vm1254, %v933, 0
      %v1289 = vsel %vm1254, %v936, 0
      %v1292 = vsel %vm1254, %v939, 0
      %v1295 = vsel %vm1254, %v942, 0
      %v1298 = vsel %vm1254, %v945, 0
      %v1301 = vsel %vm1254, %v948, 0
      %v1304 = vsel %vm1254, %v951, 0
      %v1307 = vsel %vm1254, %v954, 0
      %v1310 = vsel %vm1254, %v957, 0
      %v1313 = vsel %vm1254, %v960, 0
      %v1316 = vsel %vm1254, %v963, 0
      %v1319 = vsel %vm1254, %v966, 0
      %v1322 = vsel %vm1254, %v969, 0
      %v1325 = vsel %vm1254, %v972, 0
      %v1328 = vsel %vm1254, %v975, 0
      %v1331 = vsel %vm1254, %v978, 0
      %v1334 = vsel %vm1254, %v981, 0
      %v1337 = vsel %vm1254, %v984, 0
      %v1340 = vsel %vm1254, %v987, 0
      %v1343 = vsel %vm1254, %v990, 0
      %v1346 = vsel %vm1254, %v993, 0
      %v1349 = vsel %vm1254, %v996, 0
      %v1352 = vsel %vm1254, %v999, 0
      %v1355 = vsel %vm1254, %v1002, 0
      %v1358 = vsel %vm1254, %v1005, 0
      %v1361 = vsel %vm1254, %v1008, 0
      %v1364 = vsel %vm1254, %v1011, 0
      %v1367 = vsel %vm1254, %v1014, 0
      %v1370 = vsel %vm1254, %v1017, 0
      %v1373 = vsel %vm1254, %v1020, 0
      %v1376 = vsel %vm1254, %v1023, 0
      %v1379 = vsel %vm1254, %v1026, 0
      %v1382 = vsel %vm1254, %v1029, 0
      %v1385 = vsel %vm1254, %v1032, 0
      %v1388 = vsel %vm1254, %v1035, 0
      %v1391 = vsel %vm1254, %v1038, 0
      %v1394 = vsel %vm1254, %v1041, 0
      %v1397 = vsel %vm1254, %v1044, 0
      %v1400 = vsel %vm1254, %v1047, 0
      %1402 = vmatprep.subr.bf16.mxu0 0
      %1403 = vmatpush1.bf16.msra.mxu0 %v1225
      %1404 = vmatprep.subr.bf16.mxu0 0
      %1405 = vmatpush1.bf16.msra.mxu0 %v1224
      %1406 = vmatprep.subr.bf16.mxu0 0
      %1407 = vmatpush1.bf16.msra.mxu0 %v1223
      %1408 = vmatprep.subr.bf16.mxu0 0
      %1409 = vmatpush1.bf16.msra.mxu0 %v1222
      %1410 = vmatprep.subr.bf16.mxu0 0
      %1411 = vmatpush1.bf16.msra.mxu0 %v1221
      %1412 = vmatprep.subr.bf16.mxu0 0
      %1413 = vmatpush1.bf16.msra.mxu0 %v1220
      %1414 = vmatprep.subr.bf16.mxu0 0
      %1415 = vmatpush1.bf16.msra.mxu0 %v1219
      %1416 = vmatprep.subr.bf16.mxu0 0
      %1417 = vmatpush1.bf16.msra.mxu0 %v1218
      %1418 = vmatprep.subr.bf16.mxu0 0
      %1419 = vmatpush2.bf16.msra.mxu0 %v1233
      %1420 = vmatprep.subr.bf16.mxu0 0
      %1421 = vmatpush2.bf16.msra.mxu0 %v1232
      %1422 = vmatprep.subr.bf16.mxu0 0
      %1423 = vmatpush2.bf16.msra.mxu0 %v1231
      %1424 = vmatprep.subr.bf16.mxu0 0
      %1425 = vmatpush2.bf16.msra.mxu0 %v1230
      %1426 = vmatprep.subr.bf16.mxu0 0
      %1427 = vmatpush2.bf16.msra.mxu0 %v1229
      %1428 = vmatprep.subr.bf16.mxu0 0
      %1429 = vmatpush2.bf16.msra.mxu0 %v1228
      %1430 = vmatprep.subr.bf16.mxu0 0
      %1431 = vmatpush2.bf16.msra.mxu0 %v1227
      %1432 = vmatprep.subr.bf16.mxu0 0
      %1433 = vmatpush2.bf16.msra.mxu0 %v1226
      %1434 = vmatprep.mubr.bf16.mxu0 %v902
      %1435 = vmatmul.mubr.bf16.gmra.mxu0 %v901
      %v1436 = vpop.f32.mrf.mxu0
      %v1437 = vadd.f32 %v409, %v1436
      %v1438 = vpop.f32.mrf.mxu0
      %v1439 = vpop.f32.mrf.mxu0
      %v1440 = vadd.f32 %v409, %v1439
      %v1441 = vpop.f32.mrf.mxu0
      %1442 = vmatprep.mubr.bf16.mxu0 %v905
      %1443 = vmatmul.mubr.bf16.gmra.mxu0 %v904
      %v1444 = vpop.f32.mrf.mxu0
      %v1445 = vadd.f32 %v409, %v1444
      %v1446 = vpop.f32.mrf.mxu0
      %v1447 = vpop.f32.mrf.mxu0
      %v1448 = vadd.f32 %v409, %v1447
      %v1449 = vpop.f32.mrf.mxu0
      %1450 = vmatprep.mubr.bf16.mxu0 %v908
      %1451 = vmatmul.mubr.bf16.gmra.mxu0 %v907
      %v1452 = vpop.f32.mrf.mxu0
      %v1453 = vadd.f32 %v409, %v1452
      %v1454 = vpop.f32.mrf.mxu0
      %v1455 = vpop.f32.mrf.mxu0
      %v1456 = vadd.f32 %v409, %v1455
      %v1457 = vpop.f32.mrf.mxu0
      %1458 = vmatprep.mubr.bf16.mxu0 %v911
      %1459 = vmatmul.mubr.bf16.gmra.mxu0 %v910
      %v1460 = vpop.f32.mrf.mxu0
      %v1461 = vadd.f32 %v409, %v1460
      %v1462 = vpop.f32.mrf.mxu0
      %v1463 = vpop.f32.mrf.mxu0
      %v1464 = vadd.f32 %v409, %v1463
      %v1465 = vpop.f32.mrf.mxu0
      %1466 = vmatprep.mubr.bf16.mxu0 %v914
      %1467 = vmatmul.mubr.bf16.gmra.mxu0 %v913
      %v1468 = vpop.f32.mrf.mxu0
      %v1469 = vadd.f32 %v409, %v1468
      %v1470 = vpop.f32.mrf.mxu0
      %v1471 = vpop.f32.mrf.mxu0
      %v1472 = vadd.f32 %v409, %v1471
      %v1473 = vpop.f32.mrf.mxu0
      %1474 = vmatprep.mubr.bf16.mxu0 %v917
      %1475 = vmatmul.mubr.bf16.gmra.mxu0 %v916
      %v1476 = vpop.f32.mrf.mxu0
      %v1477 = vadd.f32 %v409, %v1476
      %v1478 = vpop.f32.mrf.mxu0
      %v1479 = vpop.f32.mrf.mxu0
      %v1480 = vadd.f32 %v409, %v1479
      %v1481 = vpop.f32.mrf.mxu0
      %1482 = vmatprep.mubr.bf16.mxu0 %v920
      %1483 = vmatmul.mubr.bf16.gmra.mxu0 %v919
      %v1484 = vpop.f32.mrf.mxu0
      %v1485 = vadd.f32 %v409, %v1484
      %v1486 = vpop.f32.mrf.mxu0
      %v1487 = vpop.f32.mrf.mxu0
      %v1488 = vadd.f32 %v409, %v1487
      %v1489 = vpop.f32.mrf.mxu0
      %1490 = vmatprep.mubr.bf16.mxu0 %v923
      %1491 = vmatmul.mubr.bf16.gmra.mxu0 %v922
      %v1492 = vpop.f32.mrf.mxu0
      %v1493 = vadd.f32 %v409, %v1492
      %v1494 = vpop.f32.mrf.mxu0
      %v1495 = vpop.f32.mrf.mxu0
      %v1496 = vadd.f32 %v409, %v1495
      %v1497 = vpop.f32.mrf.mxu0
      %1498 = vmatprep.mubr.bf16.mxu0 %v926
      %1499 = vmatmul.mubr.bf16.gmra.mxu0 %v925
      %v1500 = vpop.f32.mrf.mxu0
      %v1501 = vadd.f32 %v409, %v1500
      %v1502 = vpop.f32.mrf.mxu0
      %v1503 = vpop.f32.mrf.mxu0
      %v1504 = vadd.f32 %v409, %v1503
      %v1505 = vpop.f32.mrf.mxu0
      %1506 = vmatprep.mubr.bf16.mxu0 %v929
      %1507 = vmatmul.mubr.bf16.gmra.mxu0 %v928
      %v1508 = vpop.f32.mrf.mxu0
      %v1509 = vadd.f32 %v409, %v1508
      %v1510 = vpop.f32.mrf.mxu0
      %v1511 = vpop.f32.mrf.mxu0
      %v1512 = vadd.f32 %v409, %v1511
      %v1513 = vpop.f32.mrf.mxu0
      %1514 = vmatprep.mubr.bf16.mxu0 %v932
      %1515 = vmatmul.mubr.bf16.gmra.mxu0 %v931
      %v1516 = vpop.f32.mrf.mxu0
      %v1517 = vadd.f32 %v409, %v1516
      %v1518 = vpop.f32.mrf.mxu0
      %v1519 = vpop.f32.mrf.mxu0
      %v1520 = vadd.f32 %v409, %v1519
      %v1521 = vpop.f32.mrf.mxu0
      %1522 = vmatprep.mubr.bf16.mxu0 %v935
      %1523 = vmatmul.mubr.bf16.gmra.mxu0 %v934
      %v1524 = vpop.f32.mrf.mxu0
      %v1525 = vadd.f32 %v409, %v1524
      %v1526 = vpop.f32.mrf.mxu0
      %v1527 = vpop.f32.mrf.mxu0
      %v1528 = vadd.f32 %v409, %v1527
      %v1529 = vpop.f32.mrf.mxu0
      %1530 = vmatprep.mubr.bf16.mxu0 %v938
      %1531 = vmatmul.mubr.bf16.gmra.mxu0 %v937
      %v1532 = vpop.f32.mrf.mxu0
      %v1533 = vadd.f32 %v409, %v1532
      %v1534 = vpop.f32.mrf.mxu0
      %v1535 = vpop.f32.mrf.mxu0
      %v1536 = vadd.f32 %v409, %v1535
      %v1537 = vpop.f32.mrf.mxu0
      %1538 = vmatprep.mubr.bf16.mxu0 %v941
      %1539 = vmatmul.mubr.bf16.gmra.mxu0 %v940
      %v1540 = vpop.f32.mrf.mxu0
      %v1541 = vadd.f32 %v409, %v1540
      %v1542 = vpop.f32.mrf.mxu0
      %v1543 = vpop.f32.mrf.mxu0
      %v1544 = vadd.f32 %v409, %v1543
      %v1545 = vpop.f32.mrf.mxu0
      %1546 = vmatprep.mubr.bf16.mxu0 %v944
      %1547 = vmatmul.mubr.bf16.gmra.mxu0 %v943
      %v1548 = vpop.f32.mrf.mxu0
      %v1549 = vadd.f32 %v409, %v1548
      %v1550 = vpop.f32.mrf.mxu0
      %v1551 = vpop.f32.mrf.mxu0
      %v1552 = vadd.f32 %v409, %v1551
      %v1553 = vpop.f32.mrf.mxu0
      %1554 = vmatprep.mubr.bf16.mxu0 %v947
      %1555 = vmatmul.mubr.bf16.gmra.mxu0 %v946
      %v1556 = vpop.f32.mrf.mxu0
      %v1557 = vadd.f32 %v409, %v1556
      %v1558 = vpop.f32.mrf.mxu0
      %v1559 = vpop.f32.mrf.mxu0
      %v1560 = vadd.f32 %v409, %v1559
      %v1561 = vpop.f32.mrf.mxu0
      %1562 = vmatprep.mubr.bf16.mxu0 %v950
      %1563 = vmatmul.mubr.bf16.gmra.mxu0 %v949
      %v1564 = vpop.f32.mrf.mxu0
      %v1565 = vadd.f32 %v409, %v1564
      %v1566 = vpop.f32.mrf.mxu0
      %v1567 = vpop.f32.mrf.mxu0
      %v1568 = vadd.f32 %v409, %v1567
      %v1569 = vpop.f32.mrf.mxu0
      %1570 = vmatprep.mubr.bf16.mxu0 %v953
      %1571 = vmatmul.mubr.bf16.gmra.mxu0 %v952
      %v1572 = vpop.f32.mrf.mxu0
      %v1573 = vadd.f32 %v409, %v1572
      %v1574 = vpop.f32.mrf.mxu0
      %v1575 = vpop.f32.mrf.mxu0
      %v1576 = vadd.f32 %v409, %v1575
      %v1577 = vpop.f32.mrf.mxu0
      %1578 = vmatprep.mubr.bf16.mxu0 %v956
      %1579 = vmatmul.mubr.bf16.gmra.mxu0 %v955
      %v1580 = vpop.f32.mrf.mxu0
      %v1581 = vadd.f32 %v409, %v1580
      %v1582 = vpop.f32.mrf.mxu0
      %v1583 = vpop.f32.mrf.mxu0
      %v1584 = vadd.f32 %v409, %v1583
      %v1585 = vpop.f32.mrf.mxu0
      %1586 = vmatprep.mubr.bf16.mxu0 %v959
      %1587 = vmatmul.mubr.bf16.gmra.mxu0 %v958
      %v1588 = vpop.f32.mrf.mxu0
      %v1589 = vadd.f32 %v409, %v1588
      %v1590 = vpop.f32.mrf.mxu0
      %v1591 = vpop.f32.mrf.mxu0
      %v1592 = vadd.f32 %v409, %v1591
      %v1593 = vpop.f32.mrf.mxu0
      %1594 = vmatprep.mubr.bf16.mxu0 %v962
      %1595 = vmatmul.mubr.bf16.gmra.mxu0 %v961
      %v1596 = vpop.f32.mrf.mxu0
      %v1597 = vadd.f32 %v409, %v1596
      %v1598 = vpop.f32.mrf.mxu0
      %v1599 = vpop.f32.mrf.mxu0
      %v1600 = vadd.f32 %v409, %v1599
      %v1601 = vpop.f32.mrf.mxu0
      %1602 = vmatprep.mubr.bf16.mxu0 %v965
      %1603 = vmatmul.mubr.bf16.gmra.mxu0 %v964
      %v1604 = vpop.f32.mrf.mxu0
      %v1605 = vadd.f32 %v409, %v1604
      %v1606 = vpop.f32.mrf.mxu0
      %v1607 = vpop.f32.mrf.mxu0
      %v1608 = vadd.f32 %v409, %v1607
      %v1609 = vpop.f32.mrf.mxu0
      %1610 = vmatprep.mubr.bf16.mxu0 %v968
      %1611 = vmatmul.mubr.bf16.gmra.mxu0 %v967
      %v1612 = vpop.f32.mrf.mxu0
      %v1613 = vadd.f32 %v409, %v1612
      %v1614 = vpop.f32.mrf.mxu0
      %v1615 = vpop.f32.mrf.mxu0
      %v1616 = vadd.f32 %v409, %v1615
      %v1617 = vpop.f32.mrf.mxu0
      %1618 = vmatprep.mubr.bf16.mxu0 %v971
      %1619 = vmatmul.mubr.bf16.gmra.mxu0 %v970
      %v1620 = vpop.f32.mrf.mxu0
      %v1621 = vadd.f32 %v409, %v1620
      %v1622 = vpop.f32.mrf.mxu0
      %v1623 = vpop.f32.mrf.mxu0
      %v1624 = vadd.f32 %v409, %v1623
      %v1625 = vpop.f32.mrf.mxu0
      %1626 = vmatprep.mubr.bf16.mxu0 %v974
      %1627 = vmatmul.mubr.bf16.gmra.mxu0 %v973
      %v1628 = vpop.f32.mrf.mxu0
      %v1629 = vadd.f32 %v409, %v1628
      %v1630 = vpop.f32.mrf.mxu0
      %v1631 = vpop.f32.mrf.mxu0
      %v1632 = vadd.f32 %v409, %v1631
      %v1633 = vpop.f32.mrf.mxu0
      %1634 = vmatprep.mubr.bf16.mxu0 %v977
      %1635 = vmatmul.mubr.bf16.gmra.mxu0 %v976
      %v1636 = vpop.f32.mrf.mxu0
      %v1637 = vadd.f32 %v409, %v1636
      %v1638 = vpop.f32.mrf.mxu0
      %v1639 = vpop.f32.mrf.mxu0
      %v1640 = vadd.f32 %v409, %v1639
      %v1641 = vpop.f32.mrf.mxu0
      %1642 = vmatprep.mubr.bf16.mxu0 %v980
      %1643 = vmatmul.mubr.bf16.gmra.mxu0 %v979
      %v1644 = vpop.f32.mrf.mxu0
      %v1645 = vadd.f32 %v409, %v1644
      %v1646 = vpop.f32.mrf.mxu0
      %v1647 = vpop.f32.mrf.mxu0
      %v1648 = vadd.f32 %v409, %v1647
      %v1649 = vpop.f32.mrf.mxu0
      %1650 = vmatprep.mubr.bf16.mxu0 %v983
      %1651 = vmatmul.mubr.bf16.gmra.mxu0 %v982
      %v1652 = vpop.f32.mrf.mxu0
      %v1653 = vadd.f32 %v409, %v1652
      %v1654 = vpop.f32.mrf.mxu0
      %v1655 = vpop.f32.mrf.mxu0
      %v1656 = vadd.f32 %v409, %v1655
      %v1657 = vpop.f32.mrf.mxu0
      %1658 = vmatprep.mubr.bf16.mxu0 %v986
      %1659 = vmatmul.mubr.bf16.gmra.mxu0 %v985
      %v1660 = vpop.f32.mrf.mxu0
      %v1661 = vadd.f32 %v409, %v1660
      %v1662 = vpop.f32.mrf.mxu0
      %v1663 = vpop.f32.mrf.mxu0
      %v1664 = vadd.f32 %v409, %v1663
      %v1665 = vpop.f32.mrf.mxu0
      %1666 = vmatprep.mubr.bf16.mxu0 %v989
      %1667 = vmatmul.mubr.bf16.gmra.mxu0 %v988
      %v1668 = vpop.f32.mrf.mxu0
      %v1669 = vadd.f32 %v409, %v1668
      %v1670 = vpop.f32.mrf.mxu0
      %v1671 = vpop.f32.mrf.mxu0
      %v1672 = vadd.f32 %v409, %v1671
      %v1673 = vpop.f32.mrf.mxu0
      %1674 = vmatprep.mubr.bf16.mxu0 %v992
      %1675 = vmatmul.mubr.bf16.gmra.mxu0 %v991
      %v1676 = vpop.f32.mrf.mxu0
      %v1677 = vadd.f32 %v409, %v1676
      %v1678 = vpop.f32.mrf.mxu0
      %v1679 = vpop.f32.mrf.mxu0
      %v1680 = vadd.f32 %v409, %v1679
      %v1681 = vpop.f32.mrf.mxu0
      %1682 = vmatprep.mubr.bf16.mxu0 %v995
      %1683 = vmatmul.mubr.bf16.gmra.mxu0 %v994
      %v1684 = vpop.f32.mrf.mxu0
      %v1685 = vadd.f32 %v409, %v1684
      %v1686 = vpop.f32.mrf.mxu0
      %v1687 = vpop.f32.mrf.mxu0
      %v1688 = vadd.f32 %v409, %v1687
      %v1689 = vpop.f32.mrf.mxu0
      %1690 = vmatprep.mubr.bf16.mxu0 %v998
      %1691 = vmatmul.mubr.bf16.gmra.mxu0 %v997
      %v1692 = vpop.f32.mrf.mxu0
      %v1693 = vadd.f32 %v409, %v1692
      %v1694 = vpop.f32.mrf.mxu0
      %v1695 = vpop.f32.mrf.mxu0
      %v1696 = vadd.f32 %v409, %v1695
      %v1697 = vpop.f32.mrf.mxu0
      %1698 = vmatprep.mubr.bf16.mxu0 %v1001
      %1699 = vmatmul.mubr.bf16.gmra.mxu0 %v1000
      %v1700 = vpop.f32.mrf.mxu0
      %v1701 = vadd.f32 %v409, %v1700
      %v1702 = vpop.f32.mrf.mxu0
      %v1703 = vpop.f32.mrf.mxu0
      %v1704 = vadd.f32 %v409, %v1703
      %v1705 = vpop.f32.mrf.mxu0
      %1706 = vmatprep.mubr.bf16.mxu0 %v1004
      %1707 = vmatmul.mubr.bf16.gmra.mxu0 %v1003
      %v1708 = vpop.f32.mrf.mxu0
      %v1709 = vadd.f32 %v409, %v1708
      %v1710 = vpop.f32.mrf.mxu0
      %v1711 = vpop.f32.mrf.mxu0
      %v1712 = vadd.f32 %v409, %v1711
      %v1713 = vpop.f32.mrf.mxu0
      %1714 = vmatprep.mubr.bf16.mxu0 %v1007
      %1715 = vmatmul.mubr.bf16.gmra.mxu0 %v1006
      %v1716 = vpop.f32.mrf.mxu0
      %v1717 = vadd.f32 %v409, %v1716
      %v1718 = vpop.f32.mrf.mxu0
      %v1719 = vpop.f32.mrf.mxu0
      %v1720 = vadd.f32 %v409, %v1719
      %v1721 = vpop.f32.mrf.mxu0
      %1722 = vmatprep.mubr.bf16.mxu0 %v1010
      %1723 = vmatmul.mubr.bf16.gmra.mxu0 %v1009
      %v1724 = vpop.f32.mrf.mxu0
      %v1725 = vadd.f32 %v409, %v1724
      %v1726 = vpop.f32.mrf.mxu0
      %v1727 = vpop.f32.mrf.mxu0
      %v1728 = vadd.f32 %v409, %v1727
      %v1729 = vpop.f32.mrf.mxu0
      %1730 = vmatprep.mubr.bf16.mxu0 %v1013
      %1731 = vmatmul.mubr.bf16.gmra.mxu0 %v1012
      %v1732 = vpop.f32.mrf.mxu0
      %v1733 = vadd.f32 %v409, %v1732
      %v1734 = vpop.f32.mrf.mxu0
      %v1735 = vpop.f32.mrf.mxu0
      %v1736 = vadd.f32 %v409, %v1735
      %v1737 = vpop.f32.mrf.mxu0
      %1738 = vmatprep.mubr.bf16.mxu0 %v1016
      %1739 = vmatmul.mubr.bf16.gmra.mxu0 %v1015
      %v1740 = vpop.f32.mrf.mxu0
      %v1741 = vadd.f32 %v409, %v1740
      %v1742 = vpop.f32.mrf.mxu0
      %v1743 = vpop.f32.mrf.mxu0
      %v1744 = vadd.f32 %v409, %v1743
      %v1745 = vpop.f32.mrf.mxu0
      %1746 = vmatprep.mubr.bf16.mxu0 %v1019
      %1747 = vmatmul.mubr.bf16.gmra.mxu0 %v1018
      %v1748 = vpop.f32.mrf.mxu0
      %v1749 = vadd.f32 %v409, %v1748
      %v1750 = vpop.f32.mrf.mxu0
      %v1751 = vpop.f32.mrf.mxu0
      %v1752 = vadd.f32 %v409, %v1751
      %v1753 = vpop.f32.mrf.mxu0
      %1754 = vmatprep.mubr.bf16.mxu0 %v1022
      %1755 = vmatmul.mubr.bf16.gmra.mxu0 %v1021
      %v1756 = vpop.f32.mrf.mxu0
      %v1757 = vadd.f32 %v409, %v1756
      %v1758 = vpop.f32.mrf.mxu0
      %v1759 = vpop.f32.mrf.mxu0
      %v1760 = vadd.f32 %v409, %v1759
      %v1761 = vpop.f32.mrf.mxu0
      %1762 = vmatprep.mubr.bf16.mxu0 %v1025
      %1763 = vmatmul.mubr.bf16.gmra.mxu0 %v1024
      %v1764 = vpop.f32.mrf.mxu0
      %v1765 = vadd.f32 %v409, %v1764
      %v1766 = vpop.f32.mrf.mxu0
      %v1767 = vpop.f32.mrf.mxu0
      %v1768 = vadd.f32 %v409, %v1767
      %v1769 = vpop.f32.mrf.mxu0
      %1770 = vmatprep.mubr.bf16.mxu0 %v1028
      %1771 = vmatmul.mubr.bf16.gmra.mxu0 %v1027
      %v1772 = vpop.f32.mrf.mxu0
      %v1773 = vadd.f32 %v409, %v1772
      %v1774 = vpop.f32.mrf.mxu0
      %v1775 = vpop.f32.mrf.mxu0
      %v1776 = vadd.f32 %v409, %v1775
      %v1777 = vpop.f32.mrf.mxu0
      %1778 = vmatprep.mubr.bf16.mxu0 %v1031
      %1779 = vmatmul.mubr.bf16.gmra.mxu0 %v1030
      %v1780 = vpop.f32.mrf.mxu0
      %v1781 = vadd.f32 %v409, %v1780
      %v1782 = vpop.f32.mrf.mxu0
      %v1783 = vpop.f32.mrf.mxu0
      %v1784 = vadd.f32 %v409, %v1783
      %v1785 = vpop.f32.mrf.mxu0
      %1786 = vmatprep.mubr.bf16.mxu0 %v1034
      %1787 = vmatmul.mubr.bf16.gmra.mxu0 %v1033
      %v1788 = vpop.f32.mrf.mxu0
      %v1789 = vadd.f32 %v409, %v1788
      %v1790 = vpop.f32.mrf.mxu0
      %v1791 = vpop.f32.mrf.mxu0
      %v1792 = vadd.f32 %v409, %v1791
      %v1793 = vpop.f32.mrf.mxu0
      %1794 = vmatprep.mubr.bf16.mxu0 %v1037
      %1795 = vmatmul.mubr.bf16.gmra.mxu0 %v1036
      %v1796 = vpop.f32.mrf.mxu0
      %v1797 = vadd.f32 %v409, %v1796
      %v1798 = vpop.f32.mrf.mxu0
      %v1799 = vpop.f32.mrf.mxu0
      %v1800 = vadd.f32 %v409, %v1799
      %v1801 = vpop.f32.mrf.mxu0
      %1802 = vmatprep.mubr.bf16.mxu0 %v1040
      %1803 = vmatmul.mubr.bf16.gmra.mxu0 %v1039
      %v1804 = vpop.f32.mrf.mxu0
      %v1805 = vadd.f32 %v409, %v1804
      %v1806 = vpop.f32.mrf.mxu0
      %v1807 = vpop.f32.mrf.mxu0
      %v1808 = vadd.f32 %v409, %v1807
      %v1809 = vpop.f32.mrf.mxu0
      %1810 = vmatprep.mubr.bf16.mxu0 %v1043
      %1811 = vmatmul.mubr.bf16.gmra.mxu0 %v1042
      %v1812 = vpop.f32.mrf.mxu0
      %v1813 = vadd.f32 %v409, %v1812
      %v1814 = vpop.f32.mrf.mxu0
      %v1815 = vpop.f32.mrf.mxu0
      %v1816 = vadd.f32 %v409, %v1815
      %v1817 = vpop.f32.mrf.mxu0
      %1818 = vmatprep.mubr.bf16.mxu0 %v1046
      %1819 = vmatmul.mubr.bf16.gmra.mxu0 %v1045
      %v1820 = vpop.f32.mrf.mxu0
      %v1821 = vadd.f32 %v409, %v1820
      %v1822 = vpop.f32.mrf.mxu0
      %v1823 = vpop.f32.mrf.mxu0
      %v1824 = vadd.f32 %v409, %v1823
      %v1825 = vpop.f32.mrf.mxu0
      %1826 = vdwg.mxu0
      %1827 = vmatprep.subr.bf16.mxu0 0
      %1828 = vmatpush1.bf16.msra.mxu0 0
      %1829 = vmatprep.subr.bf16.mxu0 0
      %1830 = vmatpush1.bf16.msra.mxu0 0
      %1831 = vmatprep.subr.bf16.mxu0 0
      %1832 = vmatpush1.bf16.msra.mxu0 0
      %1833 = vmatprep.subr.bf16.mxu0 0
      %1834 = vmatpush1.bf16.msra.mxu0 0
      %1835 = vmatprep.subr.bf16.mxu0 0
      %1836 = vmatpush1.bf16.msra.mxu0 0
      %1837 = vmatprep.subr.bf16.mxu0 0
      %1838 = vmatpush1.bf16.msra.mxu0 0
      %1839 = vmatprep.subr.bf16.mxu0 0
      %1840 = vmatpush1.bf16.msra.mxu0 %v1235
      %1841 = vmatprep.subr.bf16.mxu0 0
      %1842 = vmatpush1.bf16.msra.mxu0 %v1234
      %1843 = vmatprep.subr.bf16.mxu0 0
      %1844 = vmatpush2.bf16.msra.mxu0 0
      %1845 = vmatprep.subr.bf16.mxu0 0
      %1846 = vmatpush2.bf16.msra.mxu0 0
      %1847 = vmatprep.subr.bf16.mxu0 0
      %1848 = vmatpush2.bf16.msra.mxu0 0
      %1849 = vmatprep.subr.bf16.mxu0 0
      %1850 = vmatpush2.bf16.msra.mxu0 0
      %1851 = vmatprep.subr.bf16.mxu0 0
      %1852 = vmatpush2.bf16.msra.mxu0 0
      %1853 = vmatprep.subr.bf16.mxu0 0
      %1854 = vmatpush2.bf16.msra.mxu0 0
      %1855 = vmatprep.subr.bf16.mxu0 0
      %1856 = vmatpush2.bf16.msra.mxu0 0
      %1857 = vmatprep.subr.bf16.mxu0 0
      %1858 = vmatpush2.bf16.msra.mxu0 0
      %1859 = vmatprep.mubr.bf16.mxu0 0
      %1860 = vmatmul.mubr.bf16.gmra.mxu0 %v1256
      %v1861 = vpop.f32.mrf.mxu0
      %v1862 = vadd.f32 %v1437, %v1861
      %v1863 = vpop.f32.mrf.mxu0
      %v1864 = vpop.f32.mrf.mxu0
      %v1865 = vadd.f32 %v1440, %v1864
      %v1866 = vpop.f32.mrf.mxu0
      %1867 = vmatprep.mubr.bf16.mxu0 0
      %1868 = vmatmul.mubr.bf16.gmra.mxu0 %v1259
      %v1869 = vpop.f32.mrf.mxu0
      %v1870 = vadd.f32 %v1445, %v1869
      %v1871 = vpop.f32.mrf.mxu0
      %v1872 = vpop.f32.mrf.mxu0
      %v1873 = vadd.f32 %v1448, %v1872
      %v1874 = vpop.f32.mrf.mxu0
      %1875 = vmatprep.mubr.bf16.mxu0 0
      %1876 = vmatmul.mubr.bf16.gmra.mxu0 %v1262
      %v1877 = vpop.f32.mrf.mxu0
      %v1878 = vadd.f32 %v1453, %v1877
      %v1879 = vpop.f32.mrf.mxu0
      %v1880 = vpop.f32.mrf.mxu0
      %v1881 = vadd.f32 %v1456, %v1880
      %v1882 = vpop.f32.mrf.mxu0
      %1883 = vmatprep.mubr.bf16.mxu0 0
      %1884 = vmatmul.mubr.bf16.gmra.mxu0 %v1265
      %v1885 = vpop.f32.mrf.mxu0
      %v1886 = vadd.f32 %v1461, %v1885
      %v1887 = vpop.f32.mrf.mxu0
      %v1888 = vpop.f32.mrf.mxu0
      %v1889 = vadd.f32 %v1464, %v1888
      %v1890 = vpop.f32.mrf.mxu0
      %1891 = vmatprep.mubr.bf16.mxu0 0
      %1892 = vmatmul.mubr.bf16.gmra.mxu0 %v1268
      %v1893 = vpop.f32.mrf.mxu0
      %v1894 = vadd.f32 %v1469, %v1893
      %v1895 = vpop.f32.mrf.mxu0
      %v1896 = vpop.f32.mrf.mxu0
      %v1897 = vadd.f32 %v1472, %v1896
      %v1898 = vpop.f32.mrf.mxu0
      %1899 = vmatprep.mubr.bf16.mxu0 0
      %1900 = vmatmul.mubr.bf16.gmra.mxu0 %v1271
      %v1901 = vpop.f32.mrf.mxu0
      %v1902 = vadd.f32 %v1477, %v1901
      %v1903 = vpop.f32.mrf.mxu0
      %v1904 = vpop.f32.mrf.mxu0
      %v1905 = vadd.f32 %v1480, %v1904
      %v1906 = vpop.f32.mrf.mxu0
      %1907 = vmatprep.mubr.bf16.mxu0 0
      %1908 = vmatmul.mubr.bf16.gmra.mxu0 %v1274
      %v1909 = vpop.f32.mrf.mxu0
      %v1910 = vadd.f32 %v1485, %v1909
      %v1911 = vpop.f32.mrf.mxu0
      %v1912 = vpop.f32.mrf.mxu0
      %v1913 = vadd.f32 %v1488, %v1912
      %v1914 = vpop.f32.mrf.mxu0
      %1915 = vmatprep.mubr.bf16.mxu0 0
      %1916 = vmatmul.mubr.bf16.gmra.mxu0 %v1277
      %v1917 = vpop.f32.mrf.mxu0
      %v1918 = vadd.f32 %v1493, %v1917
      %v1919 = vpop.f32.mrf.mxu0
      %v1920 = vpop.f32.mrf.mxu0
      %v1921 = vadd.f32 %v1496, %v1920
      %v1922 = vpop.f32.mrf.mxu0
      %1923 = vmatprep.mubr.bf16.mxu0 0
      %1924 = vmatmul.mubr.bf16.gmra.mxu0 %v1280
      %v1925 = vpop.f32.mrf.mxu0
      %v1926 = vadd.f32 %v1501, %v1925
      %v1927 = vpop.f32.mrf.mxu0
      %v1928 = vpop.f32.mrf.mxu0
      %v1929 = vadd.f32 %v1504, %v1928
      %v1930 = vpop.f32.mrf.mxu0
      %1931 = vmatprep.mubr.bf16.mxu0 0
      %1932 = vmatmul.mubr.bf16.gmra.mxu0 %v1283
      %v1933 = vpop.f32.mrf.mxu0
      %v1934 = vadd.f32 %v1509, %v1933
      %v1935 = vpop.f32.mrf.mxu0
      %v1936 = vpop.f32.mrf.mxu0
      %v1937 = vadd.f32 %v1512, %v1936
      %v1938 = vpop.f32.mrf.mxu0
      %1939 = vmatprep.mubr.bf16.mxu0 0
      %1940 = vmatmul.mubr.bf16.gmra.mxu0 %v1286
      %v1941 = vpop.f32.mrf.mxu0
      %v1942 = vadd.f32 %v1517, %v1941
      %v1943 = vpop.f32.mrf.mxu0
      %v1944 = vpop.f32.mrf.mxu0
      %v1945 = vadd.f32 %v1520, %v1944
      %v1946 = vpop.f32.mrf.mxu0
      %1947 = vmatprep.mubr.bf16.mxu0 0
      %1948 = vmatmul.mubr.bf16.gmra.mxu0 %v1289
      %v1949 = vpop.f32.mrf.mxu0
      %v1950 = vadd.f32 %v1525, %v1949
      %v1951 = vpop.f32.mrf.mxu0
      %v1952 = vpop.f32.mrf.mxu0
      %v1953 = vadd.f32 %v1528, %v1952
      %v1954 = vpop.f32.mrf.mxu0
      %1955 = vmatprep.mubr.bf16.mxu0 0
      %1956 = vmatmul.mubr.bf16.gmra.mxu0 %v1292
      %v1957 = vpop.f32.mrf.mxu0
      %v1958 = vadd.f32 %v1533, %v1957
      %v1959 = vpop.f32.mrf.mxu0
      %v1960 = vpop.f32.mrf.mxu0
      %v1961 = vadd.f32 %v1536, %v1960
      %v1962 = vpop.f32.mrf.mxu0
      %1963 = vmatprep.mubr.bf16.mxu0 0
      %1964 = vmatmul.mubr.bf16.gmra.mxu0 %v1295
      %v1965 = vpop.f32.mrf.mxu0
      %v1966 = vadd.f32 %v1541, %v1965
      %v1967 = vpop.f32.mrf.mxu0
      %v1968 = vpop.f32.mrf.mxu0
      %v1969 = vadd.f32 %v1544, %v1968
      %v1970 = vpop.f32.mrf.mxu0
      %1971 = vmatprep.mubr.bf16.mxu0 0
      %1972 = vmatmul.mubr.bf16.gmra.mxu0 %v1298
      %v1973 = vpop.f32.mrf.mxu0
      %v1974 = vadd.f32 %v1549, %v1973
      %v1975 = vpop.f32.mrf.mxu0
      %v1976 = vpop.f32.mrf.mxu0
      %v1977 = vadd.f32 %v1552, %v1976
      %v1978 = vpop.f32.mrf.mxu0
      %1979 = vmatprep.mubr.bf16.mxu0 0
      %1980 = vmatmul.mubr.bf16.gmra.mxu0 %v1301
      %v1981 = vpop.f32.mrf.mxu0
      %v1982 = vadd.f32 %v1557, %v1981
      %v1983 = vpop.f32.mrf.mxu0
      %v1984 = vpop.f32.mrf.mxu0
      %v1985 = vadd.f32 %v1560, %v1984
      %v1986 = vpop.f32.mrf.mxu0
      %1987 = vmatprep.mubr.bf16.mxu0 0
      %1988 = vmatmul.mubr.bf16.gmra.mxu0 %v1304
      %v1989 = vpop.f32.mrf.mxu0
      %v1990 = vadd.f32 %v1565, %v1989
      %v1991 = vpop.f32.mrf.mxu0
      %v1992 = vpop.f32.mrf.mxu0
      %v1993 = vadd.f32 %v1568, %v1992
      %v1994 = vpop.f32.mrf.mxu0
      %1995 = vmatprep.mubr.bf16.mxu0 0
      %1996 = vmatmul.mubr.bf16.gmra.mxu0 %v1307
      %v1997 = vpop.f32.mrf.mxu0
      %v1998 = vadd.f32 %v1573, %v1997
      %v1999 = vpop.f32.mrf.mxu0
      %v2000 = vpop.f32.mrf.mxu0
      %v2001 = vadd.f32 %v1576, %v2000
      %v2002 = vpop.f32.mrf.mxu0
      %2003 = vmatprep.mubr.bf16.mxu0 0
      %2004 = vmatmul.mubr.bf16.gmra.mxu0 %v1310
      %v2005 = vpop.f32.mrf.mxu0
      %v2006 = vadd.f32 %v1581, %v2005
      %v2007 = vpop.f32.mrf.mxu0
      %v2008 = vpop.f32.mrf.mxu0
      %v2009 = vadd.f32 %v1584, %v2008
      %v2010 = vpop.f32.mrf.mxu0
      %2011 = vmatprep.mubr.bf16.mxu0 0
      %2012 = vmatmul.mubr.bf16.gmra.mxu0 %v1313
      %v2013 = vpop.f32.mrf.mxu0
      %v2014 = vadd.f32 %v1589, %v2013
      %v2015 = vpop.f32.mrf.mxu0
      %v2016 = vpop.f32.mrf.mxu0
      %v2017 = vadd.f32 %v1592, %v2016
      %v2018 = vpop.f32.mrf.mxu0
      %2019 = vmatprep.mubr.bf16.mxu0 0
      %2020 = vmatmul.mubr.bf16.gmra.mxu0 %v1316
      %v2021 = vpop.f32.mrf.mxu0
      %v2022 = vadd.f32 %v1597, %v2021
      %v2023 = vpop.f32.mrf.mxu0
      %v2024 = vpop.f32.mrf.mxu0
      %v2025 = vadd.f32 %v1600, %v2024
      %v2026 = vpop.f32.mrf.mxu0
      %2027 = vmatprep.mubr.bf16.mxu0 0
      %2028 = vmatmul.mubr.bf16.gmra.mxu0 %v1319
      %v2029 = vpop.f32.mrf.mxu0
      %v2030 = vadd.f32 %v1605, %v2029
      %v2031 = vpop.f32.mrf.mxu0
      %v2032 = vpop.f32.mrf.mxu0
      %v2033 = vadd.f32 %v1608, %v2032
      %v2034 = vpop.f32.mrf.mxu0
      %2035 = vmatprep.mubr.bf16.mxu0 0
      %2036 = vmatmul.mubr.bf16.gmra.mxu0 %v1322
      %v2037 = vpop.f32.mrf.mxu0
      %v2038 = vadd.f32 %v1613, %v2037
      %v2039 = vpop.f32.mrf.mxu0
      %v2040 = vpop.f32.mrf.mxu0
      %v2041 = vadd.f32 %v1616, %v2040
      %v2042 = vpop.f32.mrf.mxu0
      %2043 = vmatprep.mubr.bf16.mxu0 0
      %2044 = vmatmul.mubr.bf16.gmra.mxu0 %v1325
      %v2045 = vpop.f32.mrf.mxu0
      %v2046 = vadd.f32 %v1621, %v2045
      %v2047 = vpop.f32.mrf.mxu0
      %v2048 = vpop.f32.mrf.mxu0
      %v2049 = vadd.f32 %v1624, %v2048
      %v2050 = vpop.f32.mrf.mxu0
      %2051 = vmatprep.mubr.bf16.mxu0 0
      %2052 = vmatmul.mubr.bf16.gmra.mxu0 %v1328
      %v2053 = vpop.f32.mrf.mxu0
      %v2054 = vadd.f32 %v1629, %v2053
      %v2055 = vpop.f32.mrf.mxu0
      %v2056 = vpop.f32.mrf.mxu0
      %v2057 = vadd.f32 %v1632, %v2056
      %v2058 = vpop.f32.mrf.mxu0
      %2059 = vmatprep.mubr.bf16.mxu0 0
      %2060 = vmatmul.mubr.bf16.gmra.mxu0 %v1331
      %v2061 = vpop.f32.mrf.mxu0
      %v2062 = vadd.f32 %v1637, %v2061
      %v2063 = vpop.f32.mrf.mxu0
      %v2064 = vpop.f32.mrf.mxu0
      %v2065 = vadd.f32 %v1640, %v2064
      %v2066 = vpop.f32.mrf.mxu0
      %2067 = vmatprep.mubr.bf16.mxu0 0
      %2068 = vmatmul.mubr.bf16.gmra.mxu0 %v1334
      %v2069 = vpop.f32.mrf.mxu0
      %v2070 = vadd.f32 %v1645, %v2069
      %v2071 = vpop.f32.mrf.mxu0
      %v2072 = vpop.f32.mrf.mxu0
      %v2073 = vadd.f32 %v1648, %v2072
      %v2074 = vpop.f32.mrf.mxu0
      %2075 = vmatprep.mubr.bf16.mxu0 0
      %2076 = vmatmul.mubr.bf16.gmra.mxu0 %v1337
      %v2077 = vpop.f32.mrf.mxu0
      %v2078 = vadd.f32 %v1653, %v2077
      %v2079 = vpop.f32.mrf.mxu0
      %v2080 = vpop.f32.mrf.mxu0
      %v2081 = vadd.f32 %v1656, %v2080
      %v2082 = vpop.f32.mrf.mxu0
      %2083 = vmatprep.mubr.bf16.mxu0 0
      %2084 = vmatmul.mubr.bf16.gmra.mxu0 %v1340
      %v2085 = vpop.f32.mrf.mxu0
      %v2086 = vadd.f32 %v1661, %v2085
      %v2087 = vpop.f32.mrf.mxu0
      %v2088 = vpop.f32.mrf.mxu0
      %v2089 = vadd.f32 %v1664, %v2088
      %v2090 = vpop.f32.mrf.mxu0
      %2091 = vmatprep.mubr.bf16.mxu0 0
      %2092 = vmatmul.mubr.bf16.gmra.mxu0 %v1343
      %v2093 = vpop.f32.mrf.mxu0
      %v2094 = vadd.f32 %v1669, %v2093
      %v2095 = vpop.f32.mrf.mxu0
      %v2096 = vpop.f32.mrf.mxu0
      %v2097 = vadd.f32 %v1672, %v2096
      %v2098 = vpop.f32.mrf.mxu0
      %2099 = vmatprep.mubr.bf16.mxu0 0
      %2100 = vmatmul.mubr.bf16.gmra.mxu0 %v1346
      %v2101 = vpop.f32.mrf.mxu0
      %v2102 = vadd.f32 %v1677, %v2101
      %v2103 = vpop.f32.mrf.mxu0
      %v2104 = vpop.f32.mrf.mxu0
      %v2105 = vadd.f32 %v1680, %v2104
      %v2106 = vpop.f32.mrf.mxu0
      %2107 = vmatprep.mubr.bf16.mxu0 0
      %2108 = vmatmul.mubr.bf16.gmra.mxu0 %v1349
      %v2109 = vpop.f32.mrf.mxu0
      %v2110 = vadd.f32 %v1685, %v2109
      %v2111 = vpop.f32.mrf.mxu0
      %v2112 = vpop.f32.mrf.mxu0
      %v2113 = vadd.f32 %v1688, %v2112
      %v2114 = vpop.f32.mrf.mxu0
      %2115 = vmatprep.mubr.bf16.mxu0 0
      %2116 = vmatmul.mubr.bf16.gmra.mxu0 %v1352
      %v2117 = vpop.f32.mrf.mxu0
      %v2118 = vadd.f32 %v1693, %v2117
      %v2119 = vpop.f32.mrf.mxu0
      %v2120 = vpop.f32.mrf.mxu0
      %v2121 = vadd.f32 %v1696, %v2120
      %v2122 = vpop.f32.mrf.mxu0
      %2123 = vmatprep.mubr.bf16.mxu0 0
      %2124 = vmatmul.mubr.bf16.gmra.mxu0 %v1355
      %v2125 = vpop.f32.mrf.mxu0
      %v2126 = vadd.f32 %v1701, %v2125
      %v2127 = vpop.f32.mrf.mxu0
      %v2128 = vpop.f32.mrf.mxu0
      %v2129 = vadd.f32 %v1704, %v2128
      %v2130 = vpop.f32.mrf.mxu0
      %2131 = vmatprep.mubr.bf16.mxu0 0
      %2132 = vmatmul.mubr.bf16.gmra.mxu0 %v1358
      %v2133 = vpop.f32.mrf.mxu0
      %v2134 = vadd.f32 %v1709, %v2133
      %v2135 = vpop.f32.mrf.mxu0
      %v2136 = vpop.f32.mrf.mxu0
      %v2137 = vadd.f32 %v1712, %v2136
      %v2138 = vpop.f32.mrf.mxu0
      %2139 = vmatprep.mubr.bf16.mxu0 0
      %2140 = vmatmul.mubr.bf16.gmra.mxu0 %v1361
      %v2141 = vpop.f32.mrf.mxu0
      %v2142 = vadd.f32 %v1717, %v2141
      %v2143 = vpop.f32.mrf.mxu0
      %v2144 = vpop.f32.mrf.mxu0
      %v2145 = vadd.f32 %v1720, %v2144
      %v2146 = vpop.f32.mrf.mxu0
      %2147 = vmatprep.mubr.bf16.mxu0 0
      %2148 = vmatmul.mubr.bf16.gmra.mxu0 %v1364
      %v2149 = vpop.f32.mrf.mxu0
      %v2150 = vadd.f32 %v1725, %v2149
      %v2151 = vpop.f32.mrf.mxu0
      %v2152 = vpop.f32.mrf.mxu0
      %v2153 = vadd.f32 %v1728, %v2152
      %v2154 = vpop.f32.mrf.mxu0
      %2155 = vmatprep.mubr.bf16.mxu0 0
      %2156 = vmatmul.mubr.bf16.gmra.mxu0 %v1367
      %v2157 = vpop.f32.mrf.mxu0
      %v2158 = vadd.f32 %v1733, %v2157
      %v2159 = vpop.f32.mrf.mxu0
      %v2160 = vpop.f32.mrf.mxu0
      %v2161 = vadd.f32 %v1736, %v2160
      %v2162 = vpop.f32.mrf.mxu0
      %2163 = vmatprep.mubr.bf16.mxu0 0
      %2164 = vmatmul.mubr.bf16.gmra.mxu0 %v1370
      %v2165 = vpop.f32.mrf.mxu0
      %v2166 = vadd.f32 %v1741, %v2165
      %v2167 = vpop.f32.mrf.mxu0
      %v2168 = vpop.f32.mrf.mxu0
      %v2169 = vadd.f32 %v1744, %v2168
      %v2170 = vpop.f32.mrf.mxu0
      %2171 = vmatprep.mubr.bf16.mxu0 0
      %2172 = vmatmul.mubr.bf16.gmra.mxu0 %v1373
      %v2173 = vpop.f32.mrf.mxu0
      %v2174 = vadd.f32 %v1749, %v2173
      %v2175 = vpop.f32.mrf.mxu0
      %v2176 = vpop.f32.mrf.mxu0
      %v2177 = vadd.f32 %v1752, %v2176
      %v2178 = vpop.f32.mrf.mxu0
      %2179 = vmatprep.mubr.bf16.mxu0 0
      %2180 = vmatmul.mubr.bf16.gmra.mxu0 %v1376
      %v2181 = vpop.f32.mrf.mxu0
      %v2182 = vadd.f32 %v1757, %v2181
      %v2183 = vpop.f32.mrf.mxu0
      %v2184 = vpop.f32.mrf.mxu0
      %v2185 = vadd.f32 %v1760, %v2184
      %v2186 = vpop.f32.mrf.mxu0
      %2187 = vmatprep.mubr.bf16.mxu0 0
      %2188 = vmatmul.mubr.bf16.gmra.mxu0 %v1379
      %v2189 = vpop.f32.mrf.mxu0
      %v2190 = vadd.f32 %v1765, %v2189
      %v2191 = vpop.f32.mrf.mxu0
      %v2192 = vpop.f32.mrf.mxu0
      %v2193 = vadd.f32 %v1768, %v2192
      %v2194 = vpop.f32.mrf.mxu0
      %2195 = vmatprep.mubr.bf16.mxu0 0
      %2196 = vmatmul.mubr.bf16.gmra.mxu0 %v1382
      %v2197 = vpop.f32.mrf.mxu0
      %v2198 = vadd.f32 %v1773, %v2197
      %v2199 = vpop.f32.mrf.mxu0
      %v2200 = vpop.f32.mrf.mxu0
      %v2201 = vadd.f32 %v1776, %v2200
      %v2202 = vpop.f32.mrf.mxu0
      %2203 = vmatprep.mubr.bf16.mxu0 0
      %2204 = vmatmul.mubr.bf16.gmra.mxu0 %v1385
      %v2205 = vpop.f32.mrf.mxu0
      %v2206 = vadd.f32 %v1781, %v2205
      %v2207 = vpop.f32.mrf.mxu0
      %v2208 = vpop.f32.mrf.mxu0
      %v2209 = vadd.f32 %v1784, %v2208
      %v2210 = vpop.f32.mrf.mxu0
      %2211 = vmatprep.mubr.bf16.mxu0 0
      %2212 = vmatmul.mubr.bf16.gmra.mxu0 %v1388
      %v2213 = vpop.f32.mrf.mxu0
      %v2214 = vadd.f32 %v1789, %v2213
      %v2215 = vpop.f32.mrf.mxu0
      %v2216 = vpop.f32.mrf.mxu0
      %v2217 = vadd.f32 %v1792, %v2216
      %v2218 = vpop.f32.mrf.mxu0
      %2219 = vmatprep.mubr.bf16.mxu0 0
      %2220 = vmatmul.mubr.bf16.gmra.mxu0 %v1391
      %v2221 = vpop.f32.mrf.mxu0
      %v2222 = vadd.f32 %v1797, %v2221
      %v2223 = vpop.f32.mrf.mxu0
      %v2224 = vpop.f32.mrf.mxu0
      %v2225 = vadd.f32 %v1800, %v2224
      %v2226 = vpop.f32.mrf.mxu0
      %2227 = vmatprep.mubr.bf16.mxu0 0
      %2228 = vmatmul.mubr.bf16.gmra.mxu0 %v1394
      %v2229 = vpop.f32.mrf.mxu0
      %v2230 = vadd.f32 %v1805, %v2229
      %v2231 = vpop.f32.mrf.mxu0
      %v2232 = vpop.f32.mrf.mxu0
      %v2233 = vadd.f32 %v1808, %v2232
      %v2234 = vpop.f32.mrf.mxu0
      %2235 = vmatprep.mubr.bf16.mxu0 0
      %2236 = vmatmul.mubr.bf16.gmra.mxu0 %v1397
      %v2237 = vpop.f32.mrf.mxu0
      %v2238 = vadd.f32 %v1813, %v2237
      %v2239 = vpop.f32.mrf.mxu0
      %v2240 = vpop.f32.mrf.mxu0
      %v2241 = vadd.f32 %v1816, %v2240
      %v2242 = vpop.f32.mrf.mxu0
      %2243 = vmatprep.mubr.bf16.mxu0 0
      %2244 = vmatmul.mubr.bf16.gmra.mxu0 %v1400
      %v2245 = vpop.f32.mrf.mxu0
      %v2246 = vadd.f32 %v1821, %v2245
      %v2247 = vpop.f32.mrf.mxu0
      %v2248 = vpop.f32.mrf.mxu0
      %v2249 = vadd.f32 %v1824, %v2248
      %v2250 = vpop.f32.mrf.mxu0
      %2251 = vdwg.mxu0
      %v2252 = vmax.f32 %v1862, %v2057
      %v2253 = vmax.f32 %v1865, %v2062
      %v2254 = vmax.f32 %v1870, %v2065
      %v2255 = vmax.f32 %v1873, %v2070
      %v2256 = vmax.f32 %v1878, %v2073
      %v2257 = vmax.f32 %v1881, %v2078
      %v2258 = vmax.f32 %v1886, %v2081
      %v2259 = vmax.f32 %v1889, %v2086
      %v2260 = vmax.f32 %v1894, %v2089
      %v2261 = vmax.f32 %v1897, %v2094
      %v2262 = vmax.f32 %v1902, %v2097
      %v2263 = vmax.f32 %v1905, %v2102
      %v2264 = vmax.f32 %v1910, %v2105
      %v2265 = vmax.f32 %v1913, %v2110
      %v2266 = vmax.f32 %v1918, %v2113
      %v2267 = vmax.f32 %v1921, %v2118
      %v2268 = vmax.f32 %v1926, %v2121
      %v2269 = vmax.f32 %v1929, %v2126
      %v2270 = vmax.f32 %v1934, %v2129
      %v2271 = vmax.f32 %v1937, %v2134
      %v2272 = vmax.f32 %v1942, %v2137
      %v2273 = vmax.f32 %v1945, %v2142
      %v2274 = vmax.f32 %v1950, %v2145
      %v2275 = vmax.f32 %v1953, %v2150
      %v2276 = vmax.f32 %v1958, %v2153
      %v2277 = vmax.f32 %v1961, %v2158
      %v2278 = vmax.f32 %v1966, %v2161
      %v2279 = vmax.f32 %v1969, %v2166
      %v2280 = vmax.f32 %v1974, %v2169
      %v2281 = vmax.f32 %v1977, %v2174
      %v2282 = vmax.f32 %v1982, %v2177
      %v2283 = vmax.f32 %v1985, %v2182
      %v2284 = vmax.f32 %v1990, %v2185
      %v2285 = vmax.f32 %v1993, %v2190
      %v2286 = vmax.f32 %v1998, %v2193
      %v2287 = vmax.f32 %v2001, %v2198
      %v2288 = vmax.f32 %v2006, %v2201
      %v2289 = vmax.f32 %v2009, %v2206
      %v2290 = vmax.f32 %v2014, %v2209
      %v2291 = vmax.f32 %v2017, %v2214
      %v2292 = vmax.f32 %v2022, %v2217
      %v2293 = vmax.f32 %v2025, %v2222
      %v2294 = vmax.f32 %v2030, %v2225
      %v2295 = vmax.f32 %v2033, %v2230
      %v2296 = vmax.f32 %v2038, %v2233
      %v2297 = vmax.f32 %v2041, %v2238
      %v2298 = vmax.f32 %v2046, %v2241
      %v2299 = vmax.f32 %v2049, %v2246
      %v2300 = vmax.f32 %v2054, %v2249
      %vm2301 = vcmask 523264
      %2302 = vst.msk [vmem:[#allocation2] sm:$0xff] %vm2301, %v2252
      %2303 = vst.msk [vmem:[#allocation2 + $0x8] sm:$0xff] %vm2301, %v2253
      %2304 = vst.msk [vmem:[#allocation2 + $0x10] sm:$0xff] %vm2301, %v2254
      %2305 = vst.msk [vmem:[#allocation2 + $0x18] sm:$0xff] %vm2301, %v2255
      %2306 = vst.msk [vmem:[#allocation2 + $0x20] sm:$0xff] %vm2301, %v2256
      %2307 = vst.msk [vmem:[#allocation2 + $0x28] sm:$0xff] %vm2301, %v2257
      %2308 = vst.msk [vmem:[#allocation2 + $0x30] sm:$0xff] %vm2301, %v2258
      %2309 = vst.msk [vmem:[#allocation2 + $0x38] sm:$0xff] %vm2301, %v2259
      %2310 = vst.msk [vmem:[#allocation2 + $0x40] sm:$0xff] %vm2301, %v2260
      %2311 = vst.msk [vmem:[#allocation2 + $0x48] sm:$0xff] %vm2301, %v2261
      %2312 = vst.msk [vmem:[#allocation2 + $0x50] sm:$0xff] %vm2301, %v2262
      %2313 = vst.msk [vmem:[#allocation2 + $0x58] sm:$0xff] %vm2301, %v2263
      %2314 = vst.msk [vmem:[#allocation2 + $0x60] sm:$0xff] %vm2301, %v2264
      %2315 = vst.msk [vmem:[#allocation2 + $0x68] sm:$0xff] %vm2301, %v2265
      %2316 = vst.msk [vmem:[#allocation2 + $0x70] sm:$0xff] %vm2301, %v2266
      %2317 = vst.msk [vmem:[#allocation2 + $0x78] sm:$0xff] %vm2301, %v2267
      %2318 = vst.msk [vmem:[#allocation2 + $0x80] sm:$0xff] %vm2301, %v2268
      %2319 = vst.msk [vmem:[#allocation2 + $0x88] sm:$0xff] %vm2301, %v2269
      %2320 = vst.msk [vmem:[#allocation2 + $0x90] sm:$0xff] %vm2301, %v2270
      %2321 = vst.msk [vmem:[#allocation2 + $0x98] sm:$0xff] %vm2301, %v2271
      %2322 = vst.msk [vmem:[#allocation2 + $0xa0] sm:$0xff] %vm2301, %v2272
      %2323 = vst.msk [vmem:[#allocation2 + $0xa8] sm:$0xff] %vm2301, %v2273
      %2324 = vst.msk [vmem:[#allocation2 + $0xb0] sm:$0xff] %vm2301, %v2274
      %2325 = vst.msk [vmem:[#allocation2 + $0xb8] sm:$0xff] %vm2301, %v2275
      %2326 = vst.msk [vmem:[#allocation2 + $0xc0] sm:$0xff] %vm2301, %v2276
      %2327 = vst.msk [vmem:[#allocation2 + $0xc8] sm:$0xff] %vm2301, %v2277
      %2328 = vst.msk [vmem:[#allocation2 + $0xd0] sm:$0xff] %vm2301, %v2278
      %2329 = vst.msk [vmem:[#allocation2 + $0xd8] sm:$0xff] %vm2301, %v2279
      %2330 = vst.msk [vmem:[#allocation2 + $0xe0] sm:$0xff] %vm2301, %v2280
      %2331 = vst.msk [vmem:[#allocation2 + $0xe8] sm:$0xff] %vm2301, %v2281
      %2332 = vst.msk [vmem:[#allocation2 + $0xf0] sm:$0xff] %vm2301, %v2282
      %2333 = vst.msk [vmem:[#allocation2 + $0xf8] sm:$0xff] %vm2301, %v2283
      %2334 = vst.msk [vmem:[#allocation2 + $0x100] sm:$0xff] %vm2301, %v2284
      %2335 = vst.msk [vmem:[#allocation2 + $0x108] sm:$0xff] %vm2301, %v2285
      %2336 = vst.msk [vmem:[#allocation2 + $0x110] sm:$0xff] %vm2301, %v2286
      %2337 = vst.msk [vmem:[#allocation2 + $0x118] sm:$0xff] %vm2301, %v2287
      %2338 = vst.msk [vmem:[#allocation2 + $0x120] sm:$0xff] %vm2301, %v2288
      %2339 = vst.msk [vmem:[#allocation2 + $0x128] sm:$0xff] %vm2301, %v2289
      %2340 = vst.msk [vmem:[#allocation2 + $0x130] sm:$0xff] %vm2301, %v2290
      %2341 = vst.msk [vmem:[#allocation2 + $0x138] sm:$0xff] %vm2301, %v2291
      %2342 = vst.msk [vmem:[#allocation2 + $0x140] sm:$0xff] %vm2301, %v2292
      %2343 = vst.msk [vmem:[#allocation2 + $0x148] sm:$0xff] %vm2301, %v2293
      %2344 = vst.msk [vmem:[#allocation2 + $0x150] sm:$0xff] %vm2301, %v2294
      %2345 = vst.msk [vmem:[#allocation2 + $0x158] sm:$0xff] %vm2301, %v2295
      %2346 = vst.msk [vmem:[#allocation2 + $0x160] sm:$0xff] %vm2301, %v2296
      %2347 = vst.msk [vmem:[#allocation2 + $0x168] sm:$0xff] %vm2301, %v2297
      %2348 = vst.msk [vmem:[#allocation2 + $0x170] sm:$0xff] %vm2301, %v2298
      %2349 = vst.msk [vmem:[#allocation2 + $0x178] sm:$0xff] %vm2301, %v2299
      %2350 = vst.msk [vmem:[#allocation2 + $0x180] sm:$0xff] %vm2301, %v2300
      %v2351 = vld [vmem:[#allocation2] ss:$2 sm:$0xff]
      %s2352 = scalar_lea.vmem [#allocation2], 16
      %v2353 = vld [vmem:[%s2352] ss:$2 sm:$0xff]
      %s2354 = scalar_lea.vmem [#allocation2], 32
      %v2355 = vld [vmem:[%s2354] ss:$2 sm:$0xff]
      %s2356 = scalar_lea.vmem [#allocation2], 48
      %v2357 = vld [vmem:[%s2356] ss:$2 sm:$0xff]
      %s2358 = scalar_lea.vmem [#allocation2], 64
      %v2359 = vld [vmem:[%s2358] ss:$2 sm:$0xff]
      %s2360 = scalar_lea.vmem [#allocation2], 80
      %v2361 = vld [vmem:[%s2360] ss:$2 sm:$0xff]
      %s2362 = scalar_lea.vmem [#allocation2], 96
      %v2363 = vld [vmem:[%s2362] ss:$2 sm:$0xff]
      %s2364 = scalar_lea.vmem [#allocation2], 112
      %v2365 = vld [vmem:[%s2364] ss:$2 sm:$0xff]
      %s2366 = scalar_lea.vmem [#allocation2], 128
      %v2367 = vld [vmem:[%s2366] ss:$2 sm:$0xff]
      %s2368 = scalar_lea.vmem [#allocation2], 144
      %v2369 = vld [vmem:[%s2368] ss:$2 sm:$0xff]
      %s2370 = scalar_lea.vmem [#allocation2], 160
      %v2371 = vld [vmem:[%s2370] ss:$2 sm:$0xff]
      %s2372 = scalar_lea.vmem [#allocation2], 176
      %v2373 = vld [vmem:[%s2372] ss:$2 sm:$0xff]
      %s2374 = scalar_lea.vmem [#allocation2], 192
      %v2375 = vld [vmem:[%s2374] ss:$2 sm:$0xff]
      %s2376 = scalar_lea.vmem [#allocation2], 208
      %v2377 = vld [vmem:[%s2376] ss:$2 sm:$0xff]
      %s2378 = scalar_lea.vmem [#allocation2], 224
      %v2379 = vld [vmem:[%s2378] ss:$2 sm:$0xff]
      %s2380 = scalar_lea.vmem [#allocation2], 240
      %v2381 = vld [vmem:[%s2380] ss:$2 sm:$0xff]
      %s2382 = scalar_lea.vmem [#allocation2], 256
      %v2383 = vld [vmem:[%s2382] ss:$2 sm:$0xff]
      %s2384 = scalar_lea.vmem [#allocation2], 272
      %v2385 = vld [vmem:[%s2384] ss:$2 sm:$0xff]
      %s2386 = scalar_lea.vmem [#allocation2], 288
      %v2387 = vld [vmem:[%s2386] ss:$2 sm:$0xff]
      %s2388 = scalar_lea.vmem [#allocation2], 304
      %v2389 = vld [vmem:[%s2388] ss:$2 sm:$0xff]
      %s2390 = scalar_lea.vmem [#allocation2], 320
      %v2391 = vld [vmem:[%s2390] ss:$2 sm:$0xff]
      %s2392 = scalar_lea.vmem [#allocation2], 336
      %v2393 = vld [vmem:[%s2392] ss:$2 sm:$0xff]
      %s2394 = scalar_lea.vmem [#allocation2], 352
      %v2395 = vld [vmem:[%s2394] ss:$2 sm:$0xff]
      %s2396 = scalar_lea.vmem [#allocation2], 368
      %v2397 = vld [vmem:[%s2396] ss:$2 sm:$0xff]
      %s2398 = scalar_lea.vmem [#allocation2], 384
      %v2399 = vld [vmem:[%s2398] ss:$2 sm:$0xf]
      %s2400 = scalar_lea.vmem [#allocation2], 1
      %v2401 = vld [vmem:[%s2400] ss:$2 sm:$0xff]
      %s2402 = scalar_lea.vmem [#allocation2], 17
      %v2403 = vld [vmem:[%s2402] ss:$2 sm:$0xff]
      %s2404 = scalar_lea.vmem [#allocation2], 33
      %v2405 = vld [vmem:[%s2404] ss:$2 sm:$0xff]
      %s2406 = scalar_lea.vmem [#allocation2], 49
      %v2407 = vld [vmem:[%s2406] ss:$2 sm:$0xff]
      %s2408 = scalar_lea.vmem [#allocation2], 65
      %v2409 = vld [vmem:[%s2408] ss:$2 sm:$0xff]
      %s2410 = scalar_lea.vmem [#allocation2], 81
      %v2411 = vld [vmem:[%s2410] ss:$2 sm:$0xff]
      %s2412 = scalar_lea.vmem [#allocation2], 97
      %v2413 = vld [vmem:[%s2412] ss:$2 sm:$0xff]
      %s2414 = scalar_lea.vmem [#allocation2], 113
      %v2415 = vld [vmem:[%s2414] ss:$2 sm:$0xff]
      %s2416 = scalar_lea.vmem [#allocation2], 129
      %v2417 = vld [vmem:[%s2416] ss:$2 sm:$0xff]
      %s2418 = scalar_lea.vmem [#allocation2], 145
      %v2419 = vld [vmem:[%s2418] ss:$2 sm:$0xff]
      %s2420 = scalar_lea.vmem [#allocation2], 161
      %v2421 = vld [vmem:[%s2420] ss:$2 sm:$0xff]
      %s2422 = scalar_lea.vmem [#allocation2], 177
      %v2423 = vld [vmem:[%s2422] ss:$2 sm:$0xff]
      %s2424 = scalar_lea.vmem [#allocation2], 193
      %v2425 = vld [vmem:[%s2424] ss:$2 sm:$0xff]
      %s2426 = scalar_lea.vmem [#allocation2], 209
      %v2427 = vld [vmem:[%s2426] ss:$2 sm:$0xff]
      %s2428 = scalar_lea.vmem [#allocation2], 225
      %v2429 = vld [vmem:[%s2428] ss:$2 sm:$0xff]
      %s2430 = scalar_lea.vmem [#allocation2], 241
      %v2431 = vld [vmem:[%s2430] ss:$2 sm:$0xff]
      %s2432 = scalar_lea.vmem [#allocation2], 257
      %v2433 = vld [vmem:[%s2432] ss:$2 sm:$0xff]
      %s2434 = scalar_lea.vmem [#allocation2], 273
      %v2435 = vld [vmem:[%s2434] ss:$2 sm:$0xff]
      %s2436 = scalar_lea.vmem [#allocation2], 289
      %v2437 = vld [vmem:[%s2436] ss:$2 sm:$0xff]
      %s2438 = scalar_lea.vmem [#allocation2], 305
      %v2439 = vld [vmem:[%s2438] ss:$2 sm:$0xff]
      %s2440 = scalar_lea.vmem [#allocation2], 321
      %v2441 = vld [vmem:[%s2440] ss:$2 sm:$0xff]
      %s2442 = scalar_lea.vmem [#allocation2], 337
      %v2443 = vld [vmem:[%s2442] ss:$2 sm:$0xff]
      %s2444 = scalar_lea.vmem [#allocation2], 353
      %v2445 = vld [vmem:[%s2444] ss:$2 sm:$0xff]
      %s2446 = scalar_lea.vmem [#allocation2], 369
      %v2447 = vld [vmem:[%s2446] ss:$2 sm:$0xff]
      %s2448 = scalar_lea.vmem [#allocation2], 385
      %v2449 = vld [vmem:[%s2448] ss:$2 sm:$0xf]
      %v2450 = vmax.f32 %v2351, %v2401
      %v2451 = vmax.f32 %v2353, %v2403
      %v2452 = vmax.f32 %v2355, %v2405
      %v2453 = vmax.f32 %v2357, %v2407
      %v2454 = vmax.f32 %v2359, %v2409
      %v2455 = vmax.f32 %v2361, %v2411
      %v2456 = vmax.f32 %v2363, %v2413
      %v2457 = vmax.f32 %v2365, %v2415
      %v2458 = vmax.f32 %v2367, %v2417
      %v2459 = vmax.f32 %v2369, %v2419
      %v2460 = vmax.f32 %v2371, %v2421
      %v2461 = vmax.f32 %v2373, %v2423
      %v2462 = vmax.f32 %v2375, %v2425
      %v2463 = vmax.f32 %v2377, %v2427
      %v2464 = vmax.f32 %v2379, %v2429
      %v2465 = vmax.f32 %v2381, %v2431
      %v2466 = vmax.f32 %v2383, %v2433
      %v2467 = vmax.f32 %v2385, %v2435
      %v2468 = vmax.f32 %v2387, %v2437
      %v2469 = vmax.f32 %v2389, %v2439
      %v2470 = vmax.f32 %v2391, %v2441
      %v2471 = vmax.f32 %v2393, %v2443
      %v2472 = vmax.f32 %v2395, %v2445
      %v2473 = vmax.f32 %v2397, %v2447
      %v2474 = vmax.f32 %v2399, %v2449
      %v2475 = vpack.c.bf16 %v2451, %v2450
      %v2476 = vpack.c.bf16 %v2453, %v2452
      %v2477 = vpack.c.bf16 %v2455, %v2454
      %v2478 = vpack.c.bf16 %v2457, %v2456
      %v2479 = vpack.c.bf16 %v2459, %v2458
      %v2480 = vpack.c.bf16 %v2461, %v2460
      %v2481 = vpack.c.bf16 %v2463, %v2462
      %v2482 = vpack.c.bf16 %v2465, %v2464
      %v2483 = vpack.c.bf16 %v2467, %v2466
      %v2484 = vpack.c.bf16 %v2469, %v2468
      %v2485 = vpack.c.bf16 %v2471, %v2470
      %v2486 = vpack.c.bf16 %v2473, %v2472
      %v2487 = vpack.c.bf16 %v2474, %v2474
      %v2501 = vunpack.c.l.b16 %v2475
      %v2502 = vunpack.c.h.b16 %v2475
      %v2503 = vunpack.c.l.b16 %v2476
      %v2504 = vunpack.c.h.b16 %v2476
      %v2505 = vunpack.c.l.b16 %v2477
      %v2506 = vunpack.c.h.b16 %v2477
      %v2507 = vunpack.c.l.b16 %v2478
      %v2508 = vunpack.c.h.b16 %v2478
      %v2509 = vunpack.c.l.b16 %v2479
      %v2510 = vunpack.c.h.b16 %v2479
      %v2511 = vunpack.c.l.b16 %v2480
      %v2512 = vunpack.c.h.b16 %v2480
      %v2513 = vunpack.c.l.b16 %v2481
      %v2514 = vunpack.c.h.b16 %v2481
      %v2515 = vunpack.c.l.b16 %v2482
      %v2516 = vunpack.c.h.b16 %v2482
      %v2517 = vunpack.c.l.b16 %v2483
      %v2518 = vunpack.c.h.b16 %v2483
      %v2519 = vunpack.c.l.b16 %v2484
      %v2520 = vunpack.c.h.b16 %v2484
      %v2521 = vunpack.c.l.b16 %v2485
      %v2522 = vunpack.c.h.b16 %v2485
      %v2523 = vunpack.c.l.b16 %v2486
      %v2524 = vunpack.c.h.b16 %v2486
      %v2525 = vunpack.c.l.b16 %v2487
      %v2526 = vpack.c.b16 %v2501, %v2501
      %v2527 = vpack.c.b16 %v2502, %v2502
      %v2528 = vpack.c.b16 %v2503, %v2503
      %v2529 = vpack.c.b16 %v2504, %v2504
      %v2530 = vpack.c.b16 %v2505, %v2505
      %v2531 = vpack.c.b16 %v2506, %v2506
      %v2532 = vpack.c.b16 %v2507, %v2507
      %v2533 = vpack.c.b16 %v2508, %v2508
      %v2534 = vpack.c.b16 %v2509, %v2509
      %v2535 = vpack.c.b16 %v2510, %v2510
      %v2536 = vpack.c.b16 %v2511, %v2511
      %v2537 = vpack.c.b16 %v2512, %v2512
      %v2538 = vpack.c.b16 %v2513, %v2513
      %v2539 = vpack.c.b16 %v2514, %v2514
      %v2540 = vpack.c.b16 %v2515, %v2515
      %v2541 = vpack.c.b16 %v2516, %v2516
      %v2542 = vpack.c.b16 %v2517, %v2517
      %v2543 = vpack.c.b16 %v2518, %v2518
      %v2544 = vpack.c.b16 %v2519, %v2519
      %v2545 = vpack.c.b16 %v2520, %v2520
      %v2546 = vpack.c.b16 %v2521, %v2521
      %v2547 = vpack.c.b16 %v2522, %v2522
      %v2548 = vpack.c.b16 %v2523, %v2523
      %v2549 = vpack.c.b16 %v2524, %v2524
      %v2550 = vpack.c.b16 %v2525, %v2525
      %vm2576 = vcmask 519168
      %2577 = vst.msk [vmem:[%s170] sm:$0xf] %vm2576, %v2526
      %2578 = vst.msk [vmem:[%s170 + $0x4] sm:$0xf] %vm2576, %v2527
      %2579 = vst.msk [vmem:[%s170 + $0x8] sm:$0xf] %vm2576, %v2528
      %2580 = vst.msk [vmem:[%s170 + $0xc] sm:$0xf] %vm2576, %v2529
      %2581 = vst.msk [vmem:[%s170 + $0x10] sm:$0xf] %vm2576, %v2530
      %2582 = vst.msk [vmem:[%s170 + $0x14] sm:$0xf] %vm2576, %v2531
      %2583 = vst.msk [vmem:[%s170 + $0x18] sm:$0xf] %vm2576, %v2532
      %2584 = vst.msk [vmem:[%s170 + $0x1c] sm:$0xf] %vm2576, %v2533
      %2585 = vst.msk [vmem:[%s170 + $0x20] sm:$0xf] %vm2576, %v2534
      %2586 = vst.msk [vmem:[%s170 + $0x24] sm:$0xf] %vm2576, %v2535
      %2587 = vst.msk [vmem:[%s170 + $0x28] sm:$0xf] %vm2576, %v2536
      %2588 = vst.msk [vmem:[%s170 + $0x2c] sm:$0xf] %vm2576, %v2537
      %2589 = vst.msk [vmem:[%s170 + $0x30] sm:$0xf] %vm2576, %v2538
      %2590 = vst.msk [vmem:[%s170 + $0x34] sm:$0xf] %vm2576, %v2539
      %2591 = vst.msk [vmem:[%s170 + $0x38] sm:$0xf] %vm2576, %v2540
      %2592 = vst.msk [vmem:[%s170 + $0x3c] sm:$0xf] %vm2576, %v2541
      %2593 = vst.msk [vmem:[%s170 + $0x40] sm:$0xf] %vm2576, %v2542
      %2594 = vst.msk [vmem:[%s170 + $0x44] sm:$0xf] %vm2576, %v2543
      %2595 = vst.msk [vmem:[%s170 + $0x48] sm:$0xf] %vm2576, %v2544
      %2596 = vst.msk [vmem:[%s170 + $0x4c] sm:$0xf] %vm2576, %v2545
      %2597 = vst.msk [vmem:[%s170 + $0x50] sm:$0xf] %vm2576, %v2546
      %2598 = vst.msk [vmem:[%s170 + $0x54] sm:$0xf] %vm2576, %v2547
      %2599 = vst.msk [vmem:[%s170 + $0x58] sm:$0xf] %vm2576, %v2548
      %2600 = vst.msk [vmem:[%s170 + $0x5c] sm:$0xf] %vm2576, %v2549
      %vm2601 = vcmask 517120
      %2602 = vst.msk [vmem:[%s170 + $0x60] sm:$0x3] %vm2601, %v2550
      %p2603 = scmp.lt.s32.totalorder %s14, 1
      %s2604 = scalar_select %p2603, %s14, 1
      %s2605 = smul.addr %s2604, 25
      %s2606 = smul.addr %s2605, 4
      %s2607 = scalar_lea.vmem %s3, %s2606
      // Predicated region
      $region33: #{net_forward.5} parent=31 // pred_check
        %p2608 = pneg %p100
      $region34: #{net_forward.5} parent=31 // pred_check_branch
        %2610 = sbr.rel (%p2608) target = $region36
      $region35: #{net_forward.5} parent=31 // pred_region
        _
      $region36: #{net_forward.5} parent=31 // pred_fallthru
        _
    $region32: #{net_forward.5} parent=5 // pred_fallthru
      _
    %p2611 = scmp.le.s32.totalorder 2, %s9
    // Predicated region
    $region37: #{net_forward.5} parent=5 // pred_check
      %p2612 = pneg %p2611
    $region38: #{net_forward.5} parent=5 // pred_check_branch
      %2614 = sbr.rel (%p2612) target = $region40
    $region39: #{net_forward.5} parent=5 // pred_region
      %s2615 = ssub.s32 %s9, 2
      // Predicated region
      $region41: #{net_forward.5} parent=39 // pred_check
        %p2616 = pneg %p106
      $region42: #{net_forward.5} parent=39 // pred_check_branch
        %2618 = sbr.rel (%p2616) target = $region44
      $region43: #{net_forward.5} parent=39 // pred_region
        %p2619 = scmp.lt.s32.totalorder %s15, 1
        %s2620 = scalar_select %p2619, %s15, 1
        %s2621 = smul.addr %s2620, 25
        %s2622 = smul.addr %s2621, 4
        %s2623 = scalar_lea.vmem %s3, %s2622
      $region44: #{net_forward.5} parent=39 // pred_fallthru
        _
    $region40: #{net_forward.5} parent=5 // pred_fallthru
      _
  $region6: #{net_forward.5} parent=0 // loop_footer
    %s13 = sadd.s32 1, %s9
  $region7: #{net_forward.5} parent=0 // loop_footer_branch
    %8 = sbr.rel target = $region3
  $region8: #{net_forward.5} parent=0 // loop_exit
    _

// kernel: net_forward.7
$region0: #{net_forward.7}
  #allocation0 [shape = 'u32[]', space=smem, size = 0x4, offset = 0x4, fixed_abs, tag = 'smem constant byte address 0x4 - core index']
  #allocation1 [shape = 'u32[144,128]{1,0:T(1,128)}', space=vmem, size = 0x12000, scoped, tag = 'internal scratch']
  %s0 = inlined_call_operand.vmem [shape: bf16[8,128], index: 0, kind: input, shape index: {}]
  %s1 = inlined_call_operand.vmem [shape: bf16[128,128], index: 1, kind: input, shape index: {}]
  %s2 = inlined_call_operand.vmem [shape: f32[1,128], index: 2, kind: input, shape index: {}]
  %s3 = inlined_call_operand.vmem [shape: f32[8,128], index: 3, kind: output, shape index: {}]
  %s4 = sld [smem:[#allocation0]]
  $region22: #{net_forward.7} parent=0
    _
  %s6 = ssub.s32 1, %s4
  %s7 = scalar_select 0, %s6, %s4
  // Predicated region
  $region2: #{net_forward.7} parent=0 // pred_check
    _
  $region3: #{net_forward.7} parent=0 // pred_check_branch
    %9 = sbr.rel (0) target = $region5
  $region4: #{net_forward.7} parent=0 // pred_region
    _
  $region5: #{net_forward.7} parent=0 // pred_fallthru
    _
  // Predicated region
  $region6: #{net_forward.7} parent=0 // pred_check
    _
  $region7: #{net_forward.7} parent=0 // pred_check_branch
    %11 = sbr.rel (0) target = $region9
  $region8: #{net_forward.7} parent=0 // pred_region
    _
  $region9: #{net_forward.7} parent=0 // pred_fallthru
    _
  // Predicated region
  $region10: #{net_forward.7} parent=0 // pred_check
    _
  $region11: #{net_forward.7} parent=0 // pred_check_branch
    %13 = sbr.rel (0) target = $region13
  $region12: #{net_forward.7} parent=0 // pred_region
    _
  $region13: #{net_forward.7} parent=0 // pred_fallthru
    _
  %v15 = vld [vmem:[%s0] sm:$0xf]
  %v16 = vld [vmem:[%s1] sm:$0xf]
  %v17 = vld [vmem:[%s1 + $0x4] sm:$0xf]
  %v18 = vld [vmem:[%s1 + $0x8] sm:$0xf]
  %v19 = vld [vmem:[%s1 + $0xc] sm:$0xf]
  %v20 = vld [vmem:[%s1 + $0x10] sm:$0xf]
  %v21 = vld [vmem:[%s1 + $0x14] sm:$0xf]
  %v22 = vld [vmem:[%s1 + $0x18] sm:$0xf]
  %v23 = vld [vmem:[%s1 + $0x1c] sm:$0xf]
  %v24 = vld [vmem:[%s1 + $0x20] sm:$0xf]
  %v25 = vld [vmem:[%s1 + $0x24] sm:$0xf]
  %v26 = vld [vmem:[%s1 + $0x28] sm:$0xf]
  %v27 = vld [vmem:[%s1 + $0x2c] sm:$0xf]
  %v28 = vld [vmem:[%s1 + $0x30] sm:$0xf]
  %v29 = vld [vmem:[%s1 + $0x34] sm:$0xf]
  %v30 = vld [vmem:[%s1 + $0x38] sm:$0xf]
  %v31 = vld [vmem:[%s1 + $0x3c] sm:$0xf]
  %v32 = vld [vmem:[%s2] sm:$0x1]
  %v34 = vlaneseq
  %v35 = vshrl.u32 %v34, 7
  %v36 = vsub.s32 0, %v35
  %v37 = vrot.slane %v32, %v36
  %v55 = vunpack.c.l.b16 %v16
  %v56 = vunpack.c.l.b16 %v17
  %v57 = vunpack.c.l.b16 %v18
  %v58 = vunpack.c.l.b16 %v19
  %v59 = vunpack.c.l.b16 %v20
  %v60 = vunpack.c.l.b16 %v21
  %v61 = vunpack.c.l.b16 %v22
  %v62 = vunpack.c.l.b16 %v23
  %v63 = vunpack.c.l.b16 %v24
  %v64 = vunpack.c.l.b16 %v25
  %v65 = vunpack.c.l.b16 %v26
  %v66 = vunpack.c.l.b16 %v27
  %v67 = vunpack.c.l.b16 %v28
  %v68 = vunpack.c.l.b16 %v29
  %v69 = vunpack.c.l.b16 %v30
  %v70 = vunpack.c.l.b16 %v31
  %v71 = vpack.c.b16 %v56, %v55
  %v72 = vpack.c.b16 %v58, %v57
  %v73 = vpack.c.b16 %v60, %v59
  %v74 = vpack.c.b16 %v62, %v61
  %v75 = vpack.c.b16 %v64, %v63
  %v76 = vpack.c.b16 %v66, %v65
  %v77 = vpack.c.b16 %v68, %v67
  %v78 = vpack.c.b16 %v70, %v69
  %87 = vmatprep.subr.bf16.mxu0 0
  %88 = vmatpush1.bf16.msra.mxu0 %v78
  %89 = vmatprep.subr.bf16.mxu0 0
  %90 = vmatpush1.bf16.msra.mxu0 %v77
  %91 = vmatprep.subr.bf16.mxu0 0
  %92 = vmatpush1.bf16.msra.mxu0 %v76
  %93 = vmatprep.subr.bf16.mxu0 0
  %94 = vmatpush1.bf16.msra.mxu0 %v75
  %95 = vmatprep.subr.bf16.mxu0 0
  %96 = vmatpush1.bf16.msra.mxu0 %v74
  %97 = vmatprep.subr.bf16.mxu0 0
  %98 = vmatpush1.bf16.msra.mxu0 %v73
  %99 = vmatprep.subr.bf16.mxu0 0
  %100 = vmatpush1.bf16.msra.mxu0 %v72
  %101 = vmatprep.subr.bf16.mxu0 0
  %102 = vmatpush1.bf16.msra.mxu0 %v71
  %103 = vmatprep.subr.bf16.mxu0 0
  %104 = vmatpush2.bf16.msra.mxu0 0
  %105 = vmatprep.subr.bf16.mxu0 0
  %106 = vmatpush2.bf16.msra.mxu0 0
  %107 = vmatprep.subr.bf16.mxu0 0
  %108 = vmatpush2.bf16.msra.mxu0 0
  %109 = vmatprep.subr.bf16.mxu0 0
  %110 = vmatpush2.bf16.msra.mxu0 0
  %111 = vmatprep.subr.bf16.mxu0 0
  %112 = vmatpush2.bf16.msra.mxu0 0
  %113 = vmatprep.subr.bf16.mxu0 0
  %114 = vmatpush2.bf16.msra.mxu0 0
  %115 = vmatprep.subr.bf16.mxu0 0
  %116 = vmatpush2.bf16.msra.mxu0 0
  %117 = vmatprep.subr.bf16.mxu0 0
  %118 = vmatpush2.bf16.msra.mxu0 0
  %119 = vmatprep.mubr.bf16.mxu0 0
  %120 = vmatmul.mubr.bf16.gmra.mxu0 %v15
  %v121 = vpop.f32.mrf.mxu0
  %v122 = vadd.f32 %v37, %v121
  %v123 = vpop.f32.mrf.mxu0
  %v124 = vpop.f32.mrf.mxu0
  %v125 = vpop.f32.mrf.mxu0
  %126 = vdwg.mxu0
  %v127 = vlaneseq
  %v128 = vand.u32 %v127, 127
  %vm129 = vcmp.lt.s32.totalorder %v128, 100
  %v130 = vsel %vm129, %v122, -1e+30
  %131 = vmax.xlane.f32.xlu0 %v130
  %v132 = vpop.xlane.xlu0 %131
  %v133 = vsub.f32 %v130, %v132
  %v134 = vmul.f32 %v133, 1.442695
  %v135 = vpow.pop %v134
  %136 = vadd.xlane.f32.xlu0 %v135
  %v137 = vpop.xlane.xlu0 %136
  %v138 = vlog2.pop %v137
  %v139 = vmul.f32 %v138, 0.6931472
  %v140 = vsub.f32 %v133, %v139
  %141 = vst [vmem:[%s3] sm:$0xff] %v140
  // Predicated region
  $region14: #{net_forward.7} parent=0 // pred_check
    _
  $region15: #{net_forward.7} parent=0 // pred_check_branch
    %143 = sbr.rel (0) target = $region17
  $region16: #{net_forward.7} parent=0 // pred_region
    _
  $region17: #{net_forward.7} parent=0 // pred_fallthru
    _
  // Predicated region
  $region18: #{net_forward.7} parent=0 // pred_check
    _
  $region19: #{net_forward.7} parent=0 // pred_check_branch
    %145 = sbr.rel (0) target = $region21
  $region20: #{net_forward.7} parent=0 // pred_region
    _
  $region21: #{net_forward.7} parent=0 // pred_fallthru
    _

// kernel: net_forward.6
$region0: #{net_forward.6}
  #allocation0 [shape = 'u32[]', space=smem, size = 0x4, offset = 0x4, fixed_abs, tag = 'smem constant byte address 0x4 - core index']
  #allocation1 [shape = 'u32[144,128]{1,0:T(1,128)}', space=vmem, size = 0x12000, scoped, tag = 'internal scratch']
  #allocation2 [shape = 'f32[8,128]{1,0:T(8,128)}', space=vmem, size = 0x1000, scoped, tag = 'scratch operand']
  %s0 = inlined_call_operand.vmem [shape: bf16[8,12544], index: 0, kind: input, shape index: {}]
  %s1 = inlined_call_operand.vmem [shape: bf16[12544,128], index: 1, kind: input, shape index: {}]
  %s2 = inlined_call_operand.vmem [shape: f32[1,128], index: 2, kind: input, shape index: {}]
  %s3 = inlined_call_operand.vmem [shape: bf16[8,128], index: 3, kind: output, shape index: {}]
  %s4 = sld [smem:[#allocation0]]
  $region53: #{net_forward.6} parent=0
    _
  %s6 = ssub.s32 1, %s4
  %s7 = scalar_select 0, %s6, %s4
  loop: start=0, step=1, limit=9
  $region2: #{net_forward.6} parent=0 // loop_pre_header
    _
  $region3: #{net_forward.6} parent=0 // loop_header
    %s9 = sphi 0, %s13
    %p10 = scmp.ge.s32.totalorder %s9, 9
    %s16 = sphi 0, %s28
    %s17 = sphi 0, %s24
    %s18 = sphi 0, %s16
    %s19 = sphi 0, %s17
    %s20 = sphi 0, %s18
    %s21 = sphi 0, %s19
    %s33 = sphi 0, %s35
    %s36 = sphi 0, %s33
    %s37 = sphi 0, %s36
    %s53 = sphi 0, %s37
    %s59 = sphi 0, %s61
    %s62 = sphi 0, %s59
    %s63 = sphi 0, %s62
    %s79 = sphi 0, %s63
    %s83 = sphi 0, %s83
    %s85 = sphi 0, %s83
    %s86 = sphi 0, %s85
    %s100 = sphi 0, %s86
    %s106 = sphi 0, %s108
    %s109 = sphi 0, %s106
    %s110 = sphi 0, %s109
    %s126 = sphi 0, %s110
  $region4: #{net_forward.6} parent=0 // loop_header_branch
    %12 = sbr.rel (%p10) target = $region8
  $region5: #{net_forward.6} parent=0 // loop_body
    %s14 = ssub.s32 %s9, 1
    %s15 = ssub.s32 %s9, 2
    %s22 = sadd.s32 1, %s17
    %p23 = scmp.ge.s32.totalorder %s22, 7
    %s24 = scalar_select %p23, 0, %s22
    %s25 = sadd.s32 1, %s16
    %s26 = scalar_select %p23, %s25, %s16
    %p27 = scmp.ge.s32.totalorder %s26, 1
    %s28 = scalar_select %p27, 0, %s26
    %s29 = ssub.s32 %s16, %s28
    %s30 = ssub.s32 %s17, %s24
    %s31 = sor.u32 %s29, %s30
    %p32 = scmp.eq.s32.totalorder %s31, 0
    %s34 = sadd.s32 %s33, 1
    %s35 = scalar_select %p32, %s33, %s34
    %p38 = pneg %p32
    %p39 = scmp.eq.s32.totalorder %s9, 6
    %p40 = por %p38, %p39
    %p41 = scmp.ne.s32.totalorder %s33, %s36
    %p42 = scmp.eq.s32.totalorder %s9, 0
    %p43 = por %p41, %p42
    %p44 = scmp.ne.s32.totalorder %s33, %s36
    %p45 = scmp.eq.s32.totalorder %s14, 6
    %p46 = por %p44, %p45
    %p47 = scmp.ne.s32.totalorder %s36, %s37
    %p48 = scmp.eq.s32.totalorder %s14, 0
    %p49 = por %p47, %p48
    %p50 = scmp.ne.s32.totalorder %s36, %s37
    %p51 = scmp.eq.s32.totalorder %s15, 6
    %p52 = por %p50, %p51
    %p54 = scmp.ne.s32.totalorder %s37, %s53
    %p55 = scmp.eq.s32.totalorder %s15, 0
    %p56 = por %p54, %p55
    %s57 = ssub.s32 %s17, %s24
    %p58 = scmp.eq.s32.totalorder %s57, 0
    %s60 = sadd.s32 %s59, 1
    %s61 = scalar_select %p58, %s59, %s60
    %p64 = pneg %p58
    %p65 = scmp.eq.s32.totalorder %s9, 6
    %p66 = por %p64, %p65
    %p67 = scmp.ne.s32.totalorder %s59, %s62
    %p68 = scmp.eq.s32.totalorder %s9, 0
    %p69 = por %p67, %p68
    %p70 = scmp.ne.s32.totalorder %s59, %s62
    %p71 = scmp.eq.s32.totalorder %s14, 6
    %p72 = por %p70, %p71
    %p73 = scmp.ne.s32.totalorder %s62, %s63
    %p74 = scmp.eq.s32.totalorder %s14, 0
    %p75 = por %p73, %p74
    %p76 = scmp.ne.s32.totalorder %s62, %s63
    %p77 = scmp.eq.s32.totalorder %s15, 6
    %p78 = por %p76, %p77
    %p80 = scmp.ne.s32.totalorder %s63, %s79
    %p81 = scmp.eq.s32.totalorder %s15, 0
    %p82 = por %p80, %p81
    %s84 = sadd.s32 %s83, 1
    %p87 = scmp.eq.s32.totalorder %s9, 6
    %p88 = scmp.ne.s32.totalorder %s83, %s85
    %p89 = scmp.eq.s32.totalorder %s9, 0
    %p90 = por %p88, %p89
    %p91 = scmp.ne.s32.totalorder %s83, %s85
    %p92 = scmp.eq.s32.totalorder %s14, 6
    %p93 = por %p91, %p92
    %p94 = scmp.ne.s32.totalorder %s85, %s86
    %p95 = scmp.eq.s32.totalorder %s14, 0
    %p96 = por %p94, %p95
    %p97 = scmp.ne.s32.totalorder %s85, %s86
    %p98 = scmp.eq.s32.totalorder %s15, 6
    %p99 = por %p97, %p98
    %p101 = scmp.ne.s32.totalorder %s86, %s100
    %p102 = scmp.eq.s32.totalorder %s15, 0
    %p103 = por %p101, %p102
    %s104 = ssub.s32 %s16, %s28
    %p105 = scmp.eq.s32.totalorder %s104, 0
    %s107 = sadd.s32 %s106, 1
    %s108 = scalar_select %p105, %s106, %s107
    %p111 = pneg %p105
    %p112 = scmp.eq.s32.totalorder %s9, 6
    %p113 = por %p111, %p112
    %p114 = scmp.ne.s32.totalorder %s106, %s109
    %p115 = scmp.eq.s32.totalorder %s9, 0
    %p116 = por %p114, %p115
    %p117 = scmp.ne.s32.totalorder %s106, %s109
    %p118 = scmp.eq.s32.totalorder %s14, 6
    %p119 = por %p117, %p118
    %p120 = scmp.ne.s32.totalorder %s109, %s110
    %p121 = scmp.eq.s32.totalorder %s14, 0
    %p122 = por %p120, %p121
    %p123 = scmp.ne.s32.totalorder %s109, %s110
    %p124 = scmp.eq.s32.totalorder %s15, 6
    %p125 = por %p123, %p124
    %p127 = scmp.ne.s32.totalorder %s110, %s126
    %p128 = scmp.eq.s32.totalorder %s15, 0
    %p129 = por %p127, %p128
    %p130 = scmp.le.s32.totalorder 1, %s9
    %p131 = scmp.lt.s32.totalorder %s9, 8
    %p132 = pnand %p130, %p131
    %p133 = pneg %p132
    // Predicated region
    $region9: #{net_forward.6} parent=5 // pred_check
      _
    $region10: #{net_forward.6} parent=5 // pred_check_branch
      %135 = sbr.rel (%p132) target = $region12
    $region11: #{net_forward.6} parent=5 // pred_region
      %s136 = ssub.s32 %s9, 1
      // Predicated region
      $region13: #{net_forward.6} parent=11 // pred_check
        %p137 = pneg %p96
      $region14: #{net_forward.6} parent=11 // pred_check_branch
        %139 = sbr.rel (%p137) target = $region16
      $region15: #{net_forward.6} parent=11 // pred_region
        _
      $region16: #{net_forward.6} parent=11 // pred_fallthru
        _
    $region12: #{net_forward.6} parent=5 // pred_fallthru
      _
    %p140 = scmp.lt.s32.totalorder %s9, 7
    // Predicated region
    $region17: #{net_forward.6} parent=5 // pred_check
      %p141 = pneg %p140
    $region18: #{net_forward.6} parent=5 // pred_check_branch
      %143 = sbr.rel (%p141) target = $region20
    $region19: #{net_forward.6} parent=5 // pred_region
      // Predicated region
      $region21: #{net_forward.6} parent=19 // pred_check
        %p144 = pneg %p43
      $region22: #{net_forward.6} parent=19 // pred_check_branch
        %146 = sbr.rel (%p144) target = $region24
      $region23: #{net_forward.6} parent=19 // pred_region
        %s147 = smul.u32 14, %s17
        %p148 = scmp.lt.s32.totalorder %s16, 0
        %s149 = scalar_select %p148, %s16, 0
        %p150 = scmp.lt.s32.totalorder %s147, 97
        %s151 = scalar_select %p150, %s147, 97
        %s152 = smul.addr %s149, 98
        %s153 = sadd.s32 %s151, %s152
        %s154 = smul.addr %s153, 4
        %s155 = scalar_lea.vmem %s0, %s154
        %s156 = smul.u32 14, %s17
      $region24: #{net_forward.6} parent=19 // pred_fallthru
        _
      // Predicated region
      $region25: #{net_forward.6} parent=19 // pred_check
        %p157 = pneg %p69
      $region26: #{net_forward.6} parent=19 // pred_check_branch
        %159 = sbr.rel (%p157) target = $region28
      $region27: #{net_forward.6} parent=19 // pred_region
        %s160 = smul.u32 224, %s17
        %p161 = scmp.lt.s32.totalorder %s160, 1567
        %s162 = scalar_select %p161, %s160, 1567
        %s163 = smul.addr %s162, 4
        %s164 = scalar_lea.vmem %s1, %s163
        %s165 = smul.u32 224, %s17
      $region28: #{net_forward.6} parent=19 // pred_fallthru
        _
    $region20: #{net_forward.6} parent=5 // pred_fallthru
      _
    %p166 = scmp.le.s32.totalorder 1, %s9
    %p167 = scmp.lt.s32.totalorder %s9, 8
    %p168 = pnand %p166, %p167
    %p169 = pneg %p168
    // Predicated region
    $region29: #{net_forward.6} parent=5 // pred_check
      _
    $region30: #{net_forward.6} parent=5 // pred_check_branch
      %171 = sbr.rel (%p168) target = $region32
    $region31: #{net_forward.6} parent=5 // pred_region
      %s172 = ssub.s32 %s9, 1
      %s173 = smul.u32 14, %s19
      %p174 = scmp.lt.s32.totalorder %s18, 0
      %s175 = scalar_select %p174, %s18, 0
      %p176 = scmp.lt.s32.totalorder %s173, 97
      %s177 = scalar_select %p176, %s173, 97
      %s178 = smul.addr %s175, 98
      %s179 = sadd.s32 %s177, %s178
      %s180 = smul.addr %s179, 4
      %s181 = scalar_lea.vmem %s0, %s180
      %p182 = pneg %p49
      %p183 = pneg %p46
      %s184 = smul.u32 224, %s19
      %p185 = scmp.lt.s32.totalorder %s184, 1567
      %s186 = scalar_select %p185, %s184, 1567
      %s187 = smul.addr %s186, 4
      %s188 = scalar_lea.vmem %s1, %s187
      %p189 = pneg %p75
      %p190 = pneg %p72
      %p191 = pneg %p96
      %p192 = pneg %p93
      %p193 = pneg %p122
      %p194 = pneg %p119
      %p195 = scmp.lt.s32.totalorder %s18, 0
      %s196 = scalar_select %p195, %s18, 0
      %s197 = smul.addr %s196, 4
      %s198 = scalar_lea.vmem %s3, %s197
      %s199 = smul.u32 14, %s19
      %p200 = scmp.lt.s32.totalorder %s18, 0
      %s201 = scalar_select %p200, %s18, 0
      %p202 = scmp.lt.s32.totalorder %s199, 97
      %s203 = scalar_select %p202, %s199, 97
      %s204 = smul.addr %s201, 98
      %s205 = sadd.s32 %s203, %s204
      %s206 = smul.addr %s205, 4
      %s207 = scalar_lea.vmem %s0, %s206
      %s208 = smul.u32 14, %s19
      %s209 = smul.u32 224, %s19
      %p210 = scmp.lt.s32.totalorder %s209, 1567
      %s211 = scalar_select %p210, %s209, 1567
      %s212 = smul.addr %s211, 4
      %s213 = scalar_lea.vmem %s1, %s212
      %s214 = smul.u32 224, %s19
      %p215 = scmp.lt.s32.totalorder %s18, 0
      %s216 = scalar_select %p215, %s18, 0
      %s217 = smul.addr %s216, 4
      %s218 = scalar_lea.vmem %s3, %s217
      %p220 = scmp.eq.s32.totalorder %s19, 0
      // Predicated region
      $region33: #{net_forward.6} parent=31 // pred_check
        %p221 = pneg %p220
      $region34: #{net_forward.6} parent=31 // pred_check_branch
        %223 = sbr.rel (%p221) target = $region36
      $region35: #{net_forward.6} parent=31 // pred_region
        %224 = vst [vmem:[#allocation2] sm:$0xff] 0.0
      $region36: #{net_forward.6} parent=31 // pred_fallthru
        _
      %v225 = vld [vmem:[#allocation2] sm:$0xff]
      %v226 = vld [vmem:[%s207] sm:$0xff]
      %v227 = vld [vmem:[%s207 + $0x8] sm:$0xff]
      %v228 = vld [vmem:[%s207 + $0x10] sm:$0xff]
      %v229 = vld [vmem:[%s207 + $0x18] sm:$0xff]
      %v230 = vld [vmem:[%s207 + $0x20] sm:$0xff]
      %v231 = vld [vmem:[%s207 + $0x28] sm:$0xff]
      %v232 = vld [vmem:[%s207 + $0x30] sm:$0xff]
      %v233 = vld [vmem:[%s213] sm:$0xf]
      %v234 = vld [vmem:[%s213 + $0x4] sm:$0xf]
      %v235 = vld [vmem:[%s213 + $0x8] sm:$0xf]
      %v236 = vld [vmem:[%s213 + $0xc] sm:$0xf]
      %v237 = vld [vmem:[%s213 + $0x10] sm:$0xf]
      %v238 = vld [vmem:[%s213 + $0x14] sm:$0xf]
      %v239 = vld [vmem:[%s213 + $0x18] sm:$0xf]
      %v240 = vld [vmem:[%s213 + $0x1c] sm:$0xf]
      %v241 = vld [vmem:[%s213 + $0x20] sm:$0xf]
      %v242 = vld [vmem:[%s213 + $0x24] sm:$0xf]
      %v243 = vld [vmem:[%s213 + $0x28] sm:$0xf]
      %v244 = vld [vmem:[%s213 + $0x2c] sm:$0xf]
      %v245 = vld [vmem:[%s213 + $0x30] sm:$0xf]
      %v246 = vld [vmem:[%s213 + $0x34] sm:$0xf]
      %v247 = vld [vmem:[%s213 + $0x38] sm:$0xf]
      %v248 = vld [vmem:[%s213 + $0x3c] sm:$0xf]
      %v249 = vld [vmem:[%s213 + $0x40] sm:$0xf]
      %v250 = vld [vmem:[%s213 + $0x44] sm:$0xf]
      %v251 = vld [vmem:[%s213 + $0x48] sm:$0xf]
      %v252 = vld [vmem:[%s213 + $0x4c] sm:$0xf]
      %v253 = vld [vmem:[%s213 + $0x50] sm:$0xf]
      %v254 = vld [vmem:[%s213 + $0x54] sm:$0xf]
      %v255 = vld [vmem:[%s213 + $0x58] sm:$0xf]
      %v256 = vld [vmem:[%s213 + $0x5c] sm:$0xf]
      %v257 = vld [vmem:[%s213 + $0x60] sm:$0xf]
      %v258 = vld [vmem:[%s213 + $0x64] sm:$0xf]
      %v259 = vld [vmem:[%s213 + $0x68] sm:$0xf]
      %v260 = vld [vmem:[%s213 + $0x6c] sm:$0xf]
      %v261 = vld [vmem:[%s213 + $0x70] sm:$0xf]
      %v262 = vld [vmem:[%s213 + $0x74] sm:$0xf]
      %v263 = vld [vmem:[%s213 + $0x78] sm:$0xf]
      %v264 = vld [vmem:[%s213 + $0x7c] sm:$0xf]
      %v265 = vld [vmem:[%s213 + $0x80] sm:$0xf]
      %v266 = vld [vmem:[%s213 + $0x84] sm:$0xf]
      %v267 = vld [vmem:[%s213 + $0x88] sm:$0xf]
      %v268 = vld [vmem:[%s213 + $0x8c] sm:$0xf]
      %v269 = vld [vmem:[%s213 + $0x90] sm:$0xf]
      %v270 = vld [vmem:[%s213 + $0x94] sm:$0xf]
      %v271 = vld [vmem:[%s213 + $0x98] sm:$0xf]
      %v272 = vld [vmem:[%s213 + $0x9c] sm:$0xf]
      %v273 = vld [vmem:[%s213 + $0xa0] sm:$0xf]
      %v274 = vld [vmem:[%s213 + $0xa4] sm:$0xf]
      %v275 = vld [vmem:[%s213 + $0xa8] sm:$0xf]
      %v276 = vld [vmem:[%s213 + $0xac] sm:$0xf]
      %v277 = vld [vmem:[%s213 + $0xb0] sm:$0xf]
      %v278 = vld [vmem:[%s213 + $0xb4] sm:$0xf]
      %v279 = vld [vmem:[%s213 + $0xb8] sm:$0xf]
      %v280 = vld [vmem:[%s213 + $0xbc] sm:$0xf]
      %v281 = vld [vmem:[%s213 + $0xc0] sm:$0xf]
      %v282 = vld [vmem:[%s213 + $0xc4] sm:$0xf]
      %v283 = vld [vmem:[%s213 + $0xc8] sm:$0xf]
      %v284 = vld [vmem:[%s213 + $0xcc] sm:$0xf]
      %v285 = vld [vmem:[%s213 + $0xd0] sm:$0xf]
      %v286 = vld [vmem:[%s213 + $0xd4] sm:$0xf]
      %v287 = vld [vmem:[%s213 + $0xd8] sm:$0xf]
      %v288 = vld [vmem:[%s213 + $0xdc] sm:$0xf]
      %v289 = vld [vmem:[%s213 + $0xe0] sm:$0xf]
      %v290 = vld [vmem:[%s213 + $0xe4] sm:$0xf]
      %v291 = vld [vmem:[%s213 + $0xe8] sm:$0xf]
      %v292 = vld [vmem:[%s213 + $0xec] sm:$0xf]
      %v293 = vld [vmem:[%s213 + $0xf0] sm:$0xf]
      %v294 = vld [vmem:[%s213 + $0xf4] sm:$0xf]
      %v295 = vld [vmem:[%s213 + $0xf8] sm:$0xf]
      %v296 = vld [vmem:[%s213 + $0xfc] sm:$0xf]
      %v297 = vld [vmem:[%s213 + $0x100] sm:$0xf]
      %v298 = vld [vmem:[%s213 + $0x104] sm:$0xf]
      %v299 = vld [vmem:[%s213 + $0x108] sm:$0xf]
      %v300 = vld [vmem:[%s213 + $0x10c] sm:$0xf]
      %v301 = vld [vmem:[%s213 + $0x110] sm:$0xf]
      %v302 = vld [vmem:[%s213 + $0x114] sm:$0xf]
      %v303 = vld [vmem:[%s213 + $0x118] sm:$0xf]
      %v304 = vld [vmem:[%s213 + $0x11c] sm:$0xf]
      %v305 = vld [vmem:[%s213 + $0x120] sm:$0xf]
      %v306 = vld [vmem:[%s213 + $0x124] sm:$0xf]
      %v307 = vld [vmem:[%s213 + $0x128] sm:$0xf]
      %v308 = vld [vmem:[%s213 + $0x12c] sm:$0xf]
      %v309 = vld [vmem:[%s213 + $0x130] sm:$0xf]
      %v310 = vld [vmem:[%s213 + $0x134] sm:$0xf]
      %v311 = vld [vmem:[%s213 + $0x138] sm:$0xf]
      %v312 = vld [vmem:[%s213 + $0x13c] sm:$0xf]
      %v313 = vld [vmem:[%s213 + $0x140] sm:$0xf]
      %v314 = vld [vmem:[%s213 + $0x144] sm:$0xf]
      %v315 = vld [vmem:[%s213 + $0x148] sm:$0xf]
      %v316 = vld [vmem:[%s213 + $0x14c] sm:$0xf]
      %v317 = vld [vmem:[%s213 + $0x150] sm:$0xf]
      %v318 = vld [vmem:[%s213 + $0x154] sm:$0xf]
      %v319 = vld [vmem:[%s213 + $0x158] sm:$0xf]
      %v320 = vld [vmem:[%s213 + $0x15c] sm:$0xf]
      %v321 = vld [vmem:[%s213 + $0x160] sm:$0xf]
      %v322 = vld [vmem:[%s213 + $0x164] sm:$0xf]
      %v323 = vld [vmem:[%s213 + $0x168] sm:$0xf]
      %v324 = vld [vmem:[%s213 + $0x16c] sm:$0xf]
      %v325 = vld [vmem:[%s213 + $0x170] sm:$0xf]
      %v326 = vld [vmem:[%s213 + $0x174] sm:$0xf]
      %v327 = vld [vmem:[%s213 + $0x178] sm:$0xf]
      %v328 = vld [vmem:[%s213 + $0x17c] sm:$0xf]
      %v329 = vld [vmem:[%s213 + $0x180] sm:$0xf]
      %v330 = vld [vmem:[%s213 + $0x184] sm:$0xf]
      %v331 = vld [vmem:[%s213 + $0x188] sm:$0xf]
      %v332 = vld [vmem:[%s213 + $0x18c] sm:$0xf]
      %v333 = vld [vmem:[%s213 + $0x190] sm:$0xf]
      %v334 = vld [vmem:[%s213 + $0x194] sm:$0xf]
      %v335 = vld [vmem:[%s213 + $0x198] sm:$0xf]
      %v336 = vld [vmem:[%s213 + $0x19c] sm:$0xf]
      %v337 = vld [vmem:[%s213 + $0x1a0] sm:$0xf]
      %v338 = vld [vmem:[%s213 + $0x1a4] sm:$0xf]
      %v339 = vld [vmem:[%s213 + $0x1a8] sm:$0xf]
      %v340 = vld [vmem:[%s213 + $0x1ac] sm:$0xf]
      %v341 = vld [vmem:[%s213 + $0x1b0] sm:$0xf]
      %v342 = vld [vmem:[%s213 + $0x1b4] sm:$0xf]
      %v343 = vld [vmem:[%s213 + $0x1b8] sm:$0xf]
      %v344 = vld [vmem:[%s213 + $0x1bc] sm:$0xf]
      %v345 = vld [vmem:[%s213 + $0x1c0] sm:$0xf]
      %v346 = vld [vmem:[%s213 + $0x1c4] sm:$0xf]
      %v347 = vld [vmem:[%s213 + $0x1c8] sm:$0xf]
      %v348 = vld [vmem:[%s213 + $0x1cc] sm:$0xf]
      %v349 = vld [vmem:[%s213 + $0x1d0] sm:$0xf]
      %v350 = vld [vmem:[%s213 + $0x1d4] sm:$0xf]
      %v351 = vld [vmem:[%s213 + $0x1d8] sm:$0xf]
      %v352 = vld [vmem:[%s213 + $0x1dc] sm:$0xf]
      %v353 = vld [vmem:[%s213 + $0x1e0] sm:$0xf]
      %v354 = vld [vmem:[%s213 + $0x1e4] sm:$0xf]
      %v355 = vld [vmem:[%s213 + $0x1e8] sm:$0xf]
      %v356 = vld [vmem:[%s213 + $0x1ec] sm:$0xf]
      %v357 = vld [vmem:[%s213 + $0x1f0] sm:$0xf]
      %v358 = vld [vmem:[%s213 + $0x1f4] sm:$0xf]
      %v359 = vld [vmem:[%s213 + $0x1f8] sm:$0xf]
      %v360 = vld [vmem:[%s213 + $0x1fc] sm:$0xf]
      %v361 = vld [vmem:[%s213 + $0x200] sm:$0xf]
      %v362 = vld [vmem:[%s213 + $0x204] sm:$0xf]
      %v363 = vld [vmem:[%s213 + $0x208] sm:$0xf]
      %v364 = vld [vmem:[%s213 + $0x20c] sm:$0xf]
      %v365 = vld [vmem:[%s213 + $0x210] sm:$0xf]
      %v366 = vld [vmem:[%s213 + $0x214] sm:$0xf]
      %v367 = vld [vmem:[%s213 + $0x218] sm:$0xf]
      %v368 = vld [vmem:[%s213 + $0x21c] sm:$0xf]
      %v369 = vld [vmem:[%s213 + $0x220] sm:$0xf]
      %v370 = vld [vmem:[%s213 + $0x224] sm:$0xf]
      %v371 = vld [vmem:[%s213 + $0x228] sm:$0xf]
      %v372 = vld [vmem:[%s213 + $0x22c] sm:$0xf]
      %v373 = vld [vmem:[%s213 + $0x230] sm:$0xf]
      %v374 = vld [vmem:[%s213 + $0x234] sm:$0xf]
      %v375 = vld [vmem:[%s213 + $0x238] sm:$0xf]
      %v376 = vld [vmem:[%s213 + $0x23c] sm:$0xf]
      %v377 = vld [vmem:[%s213 + $0x240] sm:$0xf]
      %v378 = vld [vmem:[%s213 + $0x244] sm:$0xf]
      %v379 = vld [vmem:[%s213 + $0x248] sm:$0xf]
      %v380 = vld [vmem:[%s213 + $0x24c] sm:$0xf]
      %v381 = vld [vmem:[%s213 + $0x250] sm:$0xf]
      %v382 = vld [vmem:[%s213 + $0x254] sm:$0xf]
      %v383 = vld [vmem:[%s213 + $0x258] sm:$0xf]
      %v384 = vld [vmem:[%s213 + $0x25c] sm:$0xf]
      %v385 = vld [vmem:[%s213 + $0x260] sm:$0xf]
      %v386 = vld [vmem:[%s213 + $0x264] sm:$0xf]
      %v387 = vld [vmem:[%s213 + $0x268] sm:$0xf]
      %v388 = vld [vmem:[%s213 + $0x26c] sm:$0xf]
      %v389 = vld [vmem:[%s213 + $0x270] sm:$0xf]
      %v390 = vld [vmem:[%s213 + $0x274] sm:$0xf]
      %v391 = vld [vmem:[%s213 + $0x278] sm:$0xf]
      %v392 = vld [vmem:[%s213 + $0x27c] sm:$0xf]
      %v393 = vld [vmem:[%s213 + $0x280] sm:$0xf]
      %v394 = vld [vmem:[%s213 + $0x284] sm:$0xf]
      %v395 = vld [vmem:[%s213 + $0x288] sm:$0xf]
      %v396 = vld [vmem:[%s213 + $0x28c] sm:$0xf]
      %v397 = vld [vmem:[%s213 + $0x290] sm:$0xf]
      %v398 = vld [vmem:[%s213 + $0x294] sm:$0xf]
      %v399 = vld [vmem:[%s213 + $0x298] sm:$0xf]
      %v400 = vld [vmem:[%s213 + $0x29c] sm:$0xf]
      %v401 = vld [vmem:[%s213 + $0x2a0] sm:$0xf]
      %v402 = vld [vmem:[%s213 + $0x2a4] sm:$0xf]
      %v403 = vld [vmem:[%s213 + $0x2a8] sm:$0xf]
      %v404 = vld [vmem:[%s213 + $0x2ac] sm:$0xf]
      %v405 = vld [vmem:[%s213 + $0x2b0] sm:$0xf]
      %v406 = vld [vmem:[%s213 + $0x2b4] sm:$0xf]
      %v407 = vld [vmem:[%s213 + $0x2b8] sm:$0xf]
      %v408 = vld [vmem:[%s213 + $0x2bc] sm:$0xf]
      %v409 = vld [vmem:[%s213 + $0x2c0] sm:$0xf]
      %v410 = vld [vmem:[%s213 + $0x2c4] sm:$0xf]
      %v411 = vld [vmem:[%s213 + $0x2c8] sm:$0xf]
      %v412 = vld [vmem:[%s213 + $0x2cc] sm:$0xf]
      %v413 = vld [vmem:[%s213 + $0x2d0] sm:$0xf]
      %v414 = vld [vmem:[%s213 + $0x2d4] sm:$0xf]
      %v415 = vld [vmem:[%s213 + $0x2d8] sm:$0xf]
      %v416 = vld [vmem:[%s213 + $0x2dc] sm:$0xf]
      %v417 = vld [vmem:[%s213 + $0x2e0] sm:$0xf]
      %v418 = vld [vmem:[%s213 + $0x2e4] sm:$0xf]
      %v419 = vld [vmem:[%s213 + $0x2e8] sm:$0xf]
      %v420 = vld [vmem:[%s213 + $0x2ec] sm:$0xf]
      %v421 = vld [vmem:[%s213 + $0x2f0] sm:$0xf]
      %v422 = vld [vmem:[%s213 + $0x2f4] sm:$0xf]
      %v423 = vld [vmem:[%s213 + $0x2f8] sm:$0xf]
      %v424 = vld [vmem:[%s213 + $0x2fc] sm:$0xf]
      %v425 = vld [vmem:[%s213 + $0x300] sm:$0xf]
      %v426 = vld [vmem:[%s213 + $0x304] sm:$0xf]
      %v427 = vld [vmem:[%s213 + $0x308] sm:$0xf]
      %v428 = vld [vmem:[%s213 + $0x30c] sm:$0xf]
      %v429 = vld [vmem:[%s213 + $0x310] sm:$0xf]
      %v430 = vld [vmem:[%s213 + $0x314] sm:$0xf]
      %v431 = vld [vmem:[%s213 + $0x318] sm:$0xf]
      %v432 = vld [vmem:[%s213 + $0x31c] sm:$0xf]
      %v433 = vld [vmem:[%s213 + $0x320] sm:$0xf]
      %v434 = vld [vmem:[%s213 + $0x324] sm:$0xf]
      %v435 = vld [vmem:[%s213 + $0x328] sm:$0xf]
      %v436 = vld [vmem:[%s213 + $0x32c] sm:$0xf]
      %v437 = vld [vmem:[%s213 + $0x330] sm:$0xf]
      %v438 = vld [vmem:[%s213 + $0x334] sm:$0xf]
      %v439 = vld [vmem:[%s213 + $0x338] sm:$0xf]
      %v440 = vld [vmem:[%s213 + $0x33c] sm:$0xf]
      %v441 = vld [vmem:[%s213 + $0x340] sm:$0xf]
      %v442 = vld [vmem:[%s213 + $0x344] sm:$0xf]
      %v443 = vld [vmem:[%s213 + $0x348] sm:$0xf]
      %v444 = vld [vmem:[%s213 + $0x34c] sm:$0xf]
      %v445 = vld [vmem:[%s213 + $0x350] sm:$0xf]
      %v446 = vld [vmem:[%s213 + $0x354] sm:$0xf]
      %v447 = vld [vmem:[%s213 + $0x358] sm:$0xf]
      %v448 = vld [vmem:[%s213 + $0x35c] sm:$0xf]
      %v449 = vld [vmem:[%s213 + $0x360] sm:$0xf]
      %v450 = vld [vmem:[%s213 + $0x364] sm:$0xf]
      %v451 = vld [vmem:[%s213 + $0x368] sm:$0xf]
      %v452 = vld [vmem:[%s213 + $0x36c] sm:$0xf]
      %v453 = vld [vmem:[%s213 + $0x370] sm:$0xf]
      %v454 = vld [vmem:[%s213 + $0x374] sm:$0xf]
      %v455 = vld [vmem:[%s213 + $0x378] sm:$0xf]
      %v456 = vld [vmem:[%s213 + $0x37c] sm:$0xf]
      %v464 = vunpack.c.l.b16 %v226
      %v465 = vunpack.c.h.b16 %v226
      %v466 = vunpack.c.l.b16 %v227
      %v467 = vunpack.c.h.b16 %v227
      %v468 = vunpack.c.l.b16 %v228
      %v469 = vunpack.c.h.b16 %v228
      %v470 = vunpack.c.l.b16 %v229
      %v471 = vunpack.c.h.b16 %v229
      %v472 = vunpack.c.l.b16 %v230
      %v473 = vunpack.c.h.b16 %v230
      %v474 = vunpack.c.l.b16 %v231
      %v475 = vunpack.c.h.b16 %v231
      %v476 = vunpack.c.l.b16 %v232
      %v477 = vunpack.c.h.b16 %v232
      %v478 = vpack.c.b16 %v464, %v464
      %v479 = vpack.c.b16 %v465, %v465
      %v480 = vpack.c.b16 %v466, %v466
      %v481 = vpack.c.b16 %v467, %v467
      %v482 = vpack.c.b16 %v468, %v468
      %v483 = vpack.c.b16 %v469, %v469
      %v484 = vpack.c.b16 %v470, %v470
      %v485 = vpack.c.b16 %v471, %v471
      %v486 = vpack.c.b16 %v472, %v472
      %v487 = vpack.c.b16 %v473, %v473
      %v488 = vpack.c.b16 %v474, %v474
      %v489 = vpack.c.b16 %v475, %v475
      %v490 = vpack.c.b16 %v476, %v476
      %v491 = vpack.c.b16 %v477, %v477
      %v730 = vunpack.c.l.b16 %v233
      %v731 = vunpack.c.l.b16 %v234
      %v732 = vunpack.c.l.b16 %v235
      %v733 = vunpack.c.l.b16 %v236
      %v734 = vunpack.c.l.b16 %v237
      %v735 = vunpack.c.l.b16 %v238
      %v736 = vunpack.c.l.b16 %v239
      %v737 = vunpack.c.l.b16 %v240
      %v738 = vunpack.c.l.b16 %v241
      %v739 = vunpack.c.l.b16 %v242
      %v740 = vunpack.c.l.b16 %v243
      %v741 = vunpack.c.l.b16 %v244
      %v742 = vunpack.c.l.b16 %v245
      %v743 = vunpack.c.l.b16 %v246
      %v744 = vunpack.c.l.b16 %v247
      %v745 = vunpack.c.l.b16 %v248
      %v746 = vunpack.c.l.b16 %v249
      %v747 = vunpack.c.l.b16 %v250
      %v748 = vunpack.c.l.b16 %v251
      %v749 = vunpack.c.l.b16 %v252
      %v750 = vunpack.c.l.b16 %v253
      %v751 = vunpack.c.l.b16 %v254
      %v752 = vunpack.c.l.b16 %v255
      %v753 = vunpack.c.l.b16 %v256
      %v754 = vunpack.c.l.b16 %v257
      %v755 = vunpack.c.l.b16 %v258
      %v756 = vunpack.c.l.b16 %v259
      %v757 = vunpack.c.l.b16 %v260
      %v758 = vunpack.c.l.b16 %v261
      %v759 = vunpack.c.l.b16 %v262
      %v760 = vunpack.c.l.b16 %v263
      %v761 = vunpack.c.l.b16 %v264
      %v762 = vunpack.c.l.b16 %v265
      %v763 = vunpack.c.l.b16 %v266
      %v764 = vunpack.c.l.b16 %v267
      %v765 = vunpack.c.l.b16 %v268
      %v766 = vunpack.c.l.b16 %v269
      %v767 = vunpack.c.l.b16 %v270
      %v768 = vunpack.c.l.b16 %v271
      %v769 = vunpack.c.l.b16 %v272
      %v770 = vunpack.c.l.b16 %v273
      %v771 = vunpack.c.l.b16 %v274
      %v772 = vunpack.c.l.b16 %v275
      %v773 = vunpack.c.l.b16 %v276
      %v774 = vunpack.c.l.b16 %v277
      %v775 = vunpack.c.l.b16 %v278
      %v776 = vunpack.c.l.b16 %v279
      %v777 = vunpack.c.l.b16 %v280
      %v778 = vunpack.c.l.b16 %v281
      %v779 = vunpack.c.l.b16 %v282
      %v780 = vunpack.c.l.b16 %v283
      %v781 = vunpack.c.l.b16 %v284
      %v782 = vunpack.c.l.b16 %v285
      %v783 = vunpack.c.l.b16 %v286
      %v784 = vunpack.c.l.b16 %v287
      %v785 = vunpack.c.l.b16 %v288
      %v786 = vunpack.c.l.b16 %v289
      %v787 = vunpack.c.l.b16 %v290
      %v788 = vunpack.c.l.b16 %v291
      %v789 = vunpack.c.l.b16 %v292
      %v790 = vunpack.c.l.b16 %v293
      %v791 = vunpack.c.l.b16 %v294
      %v792 = vunpack.c.l.b16 %v295
      %v793 = vunpack.c.l.b16 %v296
      %v794 = vunpack.c.l.b16 %v297
      %v795 = vunpack.c.l.b16 %v298
      %v796 = vunpack.c.l.b16 %v299
      %v797 = vunpack.c.l.b16 %v300
      %v798 = vunpack.c.l.b16 %v301
      %v799 = vunpack.c.l.b16 %v302
      %v800 = vunpack.c.l.b16 %v303
      %v801 = vunpack.c.l.b16 %v304
      %v802 = vunpack.c.l.b16 %v305
      %v803 = vunpack.c.l.b16 %v306
      %v804 = vunpack.c.l.b16 %v307
      %v805 = vunpack.c.l.b16 %v308
      %v806 = vunpack.c.l.b16 %v309
      %v807 = vunpack.c.l.b16 %v310
      %v808 = vunpack.c.l.b16 %v311
      %v809 = vunpack.c.l.b16 %v312
      %v810 = vunpack.c.l.b16 %v313
      %v811 = vunpack.c.l.b16 %v314
      %v812 = vunpack.c.l.b16 %v315
      %v813 = vunpack.c.l.b16 %v316
      %v814 = vunpack.c.l.b16 %v317
      %v815 = vunpack.c.l.b16 %v318
      %v816 = vunpack.c.l.b16 %v319
      %v817 = vunpack.c.l.b16 %v320
      %v818 = vunpack.c.l.b16 %v321
      %v819 = vunpack.c.l.b16 %v322
      %v820 = vunpack.c.l.b16 %v323
      %v821 = vunpack.c.l.b16 %v324
      %v822 = vunpack.c.l.b16 %v325
      %v823 = vunpack.c.l.b16 %v326
      %v824 = vunpack.c.l.b16 %v327
      %v825 = vunpack.c.l.b16 %v328
      %v826 = vunpack.c.l.b16 %v329
      %v827 = vunpack.c.l.b16 %v330
      %v828 = vunpack.c.l.b16 %v331
      %v829 = vunpack.c.l.b16 %v332
      %v830 = vunpack.c.l.b16 %v333
      %v831 = vunpack.c.l.b16 %v334
      %v832 = vunpack.c.l.b16 %v335
      %v833 = vunpack.c.l.b16 %v336
      %v834 = vunpack.c.l.b16 %v337
      %v835 = vunpack.c.l.b16 %v338
      %v836 = vunpack.c.l.b16 %v339
      %v837 = vunpack.c.l.b16 %v340
      %v838 = vunpack.c.l.b16 %v341
      %v839 = vunpack.c.l.b16 %v342
      %v840 = vunpack.c.l.b16 %v343
      %v841 = vunpack.c.l.b16 %v344
      %v842 = vunpack.c.l.b16 %v345
      %v843 = vunpack.c.l.b16 %v346
      %v844 = vunpack.c.l.b16 %v347
      %v845 = vunpack.c.l.b16 %v348
      %v846 = vunpack.c.l.b16 %v349
      %v847 = vunpack.c.l.b16 %v350
      %v848 = vunpack.c.l.b16 %v351
      %v849 = vunpack.c.l.b16 %v352
      %v850 = vunpack.c.l.b16 %v353
      %v851 = vunpack.c.l.b16 %v354
      %v852 = vunpack.c.l.b16 %v355
      %v853 = vunpack.c.l.b16 %v356
      %v854 = vunpack.c.l.b16 %v357
      %v855 = vunpack.c.l.b16 %v358
      %v856 = vunpack.c.l.b16 %v359
      %v857 = vunpack.c.l.b16 %v360
      %v858 = vunpack.c.l.b16 %v361
      %v859 = vunpack.c.l.b16 %v362
      %v860 = vunpack.c.l.b16 %v363
      %v861 = vunpack.c.l.b16 %v364
      %v862 = vunpack.c.l.b16 %v365
      %v863 = vunpack.c.l.b16 %v366
      %v864 = vunpack.c.l.b16 %v367
      %v865 = vunpack.c.l.b16 %v368
      %v866 = vunpack.c.l.b16 %v369
      %v867 = vunpack.c.l.b16 %v370
      %v868 = vunpack.c.l.b16 %v371
      %v869 = vunpack.c.l.b16 %v372
      %v870 = vunpack.c.l.b16 %v373
      %v871 = vunpack.c.l.b16 %v374
      %v872 = vunpack.c.l.b16 %v375
      %v873 = vunpack.c.l.b16 %v376
      %v874 = vunpack.c.l.b16 %v377
      %v875 = vunpack.c.l.b16 %v378
      %v876 = vunpack.c.l.b16 %v379
      %v877 = vunpack.c.l.b16 %v380
      %v878 = vunpack.c.l.b16 %v381
      %v879 = vunpack.c.l.b16 %v382
      %v880 = vunpack.c.l.b16 %v383
      %v881 = vunpack.c.l.b16 %v384
      %v882 = vunpack.c.l.b16 %v385
      %v883 = vunpack.c.l.b16 %v386
      %v884 = vunpack.c.l.b16 %v387
      %v885 = vunpack.c.l.b16 %v388
      %v886 = vunpack.c.l.b16 %v389
      %v887 = vunpack.c.l.b16 %v390
      %v888 = vunpack.c.l.b16 %v391
      %v889 = vunpack.c.l.b16 %v392
      %v890 = vunpack.c.l.b16 %v393
      %v891 = vunpack.c.l.b16 %v394
      %v892 = vunpack.c.l.b16 %v395
      %v893 = vunpack.c.l.b16 %v396
      %v894 = vunpack.c.l.b16 %v397
      %v895 = vunpack.c.l.b16 %v398
      %v896 = vunpack.c.l.b16 %v399
      %v897 = vunpack.c.l.b16 %v400
      %v898 = vunpack.c.l.b16 %v401
      %v899 = vunpack.c.l.b16 %v402
      %v900 = vunpack.c.l.b16 %v403
      %v901 = vunpack.c.l.b16 %v404
      %v902 = vunpack.c.l.b16 %v405
      %v903 = vunpack.c.l.b16 %v406
      %v904 = vunpack.c.l.b16 %v407
      %v905 = vunpack.c.l.b16 %v408
      %v906 = vunpack.c.l.b16 %v409
      %v907 = vunpack.c.l.b16 %v410
      %v908 = vunpack.c.l.b16 %v411
      %v909 = vunpack.c.l.b16 %v412
      %v910 = vunpack.c.l.b16 %v413
      %v911 = vunpack.c.l.b16 %v414
      %v912 = vunpack.c.l.b16 %v415
      %v913 = vunpack.c.l.b16 %v416
      %v914 = vunpack.c.l.b16 %v417
      %v915 = vunpack.c.l.b16 %v418
      %v916 = vunpack.c.l.b16 %v419
      %v917 = vunpack.c.l.b16 %v420
      %v918 = vunpack.c.l.b16 %v421
      %v919 = vunpack.c.l.b16 %v422
      %v920 = vunpack.c.l.b16 %v423
      %v921 = vunpack.c.l.b16 %v424
      %v922 = vunpack.c.l.b16 %v425
      %v923 = vunpack.c.l.b16 %v426
      %v924 = vunpack.c.l.b16 %v427
      %v925 = vunpack.c.l.b16 %v428
      %v926 = vunpack.c.l.b16 %v429
      %v927 = vunpack.c.l.b16 %v430
      %v928 = vunpack.c.l.b16 %v431
      %v929 = vunpack.c.l.b16 %v432
      %v930 = vunpack.c.l.b16 %v433
      %v931 = vunpack.c.l.b16 %v434
      %v932 = vunpack.c.l.b16 %v435
      %v933 = vunpack.c.l.b16 %v436
      %v934 = vunpack.c.l.b16 %v437
      %v935 = vunpack.c.l.b16 %v438
      %v936 = vunpack.c.l.b16 %v439
      %v937 = vunpack.c.l.b16 %v440
      %v938 = vunpack.c.l.b16 %v441
      %v939 = vunpack.c.l.b16 %v442
      %v940 = vunpack.c.l.b16 %v443
      %v941 = vunpack.c.l.b16 %v444
      %v942 = vunpack.c.l.b16 %v445
      %v943 = vunpack.c.l.b16 %v446
      %v944 = vunpack.c.l.b16 %v447
      %v945 = vunpack.c.l.b16 %v448
      %v946 = vunpack.c.l.b16 %v449
      %v947 = vunpack.c.l.b16 %v450
      %v948 = vunpack.c.l.b16 %v451
      %v949 = vunpack.c.l.b16 %v452
      %v950 = vunpack.c.l.b16 %v453
      %v951 = vunpack.c.l.b16 %v454
      %v952 = vunpack.c.l.b16 %v455
      %v953 = vunpack.c.l.b16 %v456
      %v954 = vpack.c.b16 %v731, %v730
      %v955 = vpack.c.b16 %v733, %v732
      %v956 = vpack.c.b16 %v735, %v734
      %v957 = vpack.c.b16 %v737, %v736
      %v958 = vpack.c.b16 %v739, %v738
      %v959 = vpack.c.b16 %v741, %v740
      %v960 = vpack.c.b16 %v743, %v742
      %v961 = vpack.c.b16 %v745, %v744
      %v962 = vpack.c.b16 %v747, %v746
      %v963 = vpack.c.b16 %v749, %v748
      %v964 = vpack.c.b16 %v751, %v750
      %v965 = vpack.c.b16 %v753, %v752
      %v966 = vpack.c.b16 %v755, %v754
      %v967 = vpack.c.b16 %v757, %v756
      %v968 = vpack.c.b16 %v759, %v758
      %v969 = vpack.c.b16 %v761, %v760
      %v970 = vpack.c.b16 %v763, %v762
      %v971 = vpack.c.b16 %v765, %v764
      %v972 = vpack.c.b16 %v767, %v766
      %v973 = vpack.c.b16 %v769, %v768
      %v974 = vpack.c.b16 %v771, %v770
      %v975 = vpack.c.b16 %v773, %v772
      %v976 = vpack.c.b16 %v775, %v774
      %v977 = vpack.c.b16 %v777, %v776
      %v978 = vpack.c.b16 %v779, %v778
      %v979 = vpack.c.b16 %v781, %v780
      %v980 = vpack.c.b16 %v783, %v782
      %v981 = vpack.c.b16 %v785, %v784
      %v982 = vpack.c.b16 %v787, %v786
      %v983 = vpack.c.b16 %v789, %v788
      %v984 = vpack.c.b16 %v791, %v790
      %v985 = vpack.c.b16 %v793, %v792
      %v986 = vpack.c.b16 %v795, %v794
      %v987 = vpack.c.b16 %v797, %v796
      %v988 = vpack.c.b16 %v799, %v798
      %v989 = vpack.c.b16 %v801, %v800
      %v990 = vpack.c.b16 %v803, %v802
      %v991 = vpack.c.b16 %v805, %v804
      %v992 = vpack.c.b16 %v807, %v806
      %v993 = vpack.c.b16 %v809, %v808
      %v994 = vpack.c.b16 %v811, %v810
      %v995 = vpack.c.b16 %v813, %v812
      %v996 = vpack.c.b16 %v815, %v814
      %v997 = vpack.c.b16 %v817, %v816
      %v998 = vpack.c.b16 %v819, %v818
      %v999 = vpack.c.b16 %v821, %v820
      %v1000 = vpack.c.b16 %v823, %v822
      %v1001 = vpack.c.b16 %v825, %v824
      %v1002 = vpack.c.b16 %v827, %v826
      %v1003 = vpack.c.b16 %v829, %v828
      %v1004 = vpack.c.b16 %v831, %v830
      %v1005 = vpack.c.b16 %v833, %v832
      %v1006 = vpack.c.b16 %v835, %v834
      %v1007 = vpack.c.b16 %v837, %v836
      %v1008 = vpack.c.b16 %v839, %v838
      %v1009 = vpack.c.b16 %v841, %v840
      %v1010 = vpack.c.b16 %v843, %v842
      %v1011 = vpack.c.b16 %v845, %v844
      %v1012 = vpack.c.b16 %v847, %v846
      %v1013 = vpack.c.b16 %v849, %v848
      %v1014 = vpack.c.b16 %v851, %v850
      %v1015 = vpack.c.b16 %v853, %v852
      %v1016 = vpack.c.b16 %v855, %v854
      %v1017 = vpack.c.b16 %v857, %v856
      %v1018 = vpack.c.b16 %v859, %v858
      %v1019 = vpack.c.b16 %v861, %v860
      %v1020 = vpack.c.b16 %v863, %v862
      %v1021 = vpack.c.b16 %v865, %v864
      %v1022 = vpack.c.b16 %v867, %v866
      %v1023 = vpack.c.b16 %v869, %v868
      %v1024 = vpack.c.b16 %v871, %v870
      %v1025 = vpack.c.b16 %v873, %v872
      %v1026 = vpack.c.b16 %v875, %v874
      %v1027 = vpack.c.b16 %v877, %v876
      %v1028 = vpack.c.b16 %v879, %v878
      %v1029 = vpack.c.b16 %v881, %v880
      %v1030 = vpack.c.b16 %v883, %v882
      %v1031 = vpack.c.b16 %v885, %v884
      %v1032 = vpack.c.b16 %v887, %v886
      %v1033 = vpack.c.b16 %v889, %v888
      %v1034 = vpack.c.b16 %v891, %v890
      %v1035 = vpack.c.b16 %v893, %v892
      %v1036 = vpack.c.b16 %v895, %v894
      %v1037 = vpack.c.b16 %v897, %v896
      %v1038 = vpack.c.b16 %v899, %v898
      %v1039 = vpack.c.b16 %v901, %v900
      %v1040 = vpack.c.b16 %v903, %v902
      %v1041 = vpack.c.b16 %v905, %v904
      %v1042 = vpack.c.b16 %v907, %v906
      %v1043 = vpack.c.b16 %v909, %v908
      %v1044 = vpack.c.b16 %v911, %v910
      %v1045 = vpack.c.b16 %v913, %v912
      %v1046 = vpack.c.b16 %v915, %v914
      %v1047 = vpack.c.b16 %v917, %v916
      %v1048 = vpack.c.b16 %v919, %v918
      %v1049 = vpack.c.b16 %v921, %v920
      %v1050 = vpack.c.b16 %v923, %v922
      %v1051 = vpack.c.b16 %v925, %v924
      %v1052 = vpack.c.b16 %v927, %v926
      %v1053 = vpack.c.b16 %v929, %v928
      %v1054 = vpack.c.b16 %v931, %v930
      %v1055 = vpack.c.b16 %v933, %v932
      %v1056 = vpack.c.b16 %v935, %v934
      %v1057 = vpack.c.b16 %v937, %v936
      %v1058 = vpack.c.b16 %v939, %v938
      %v1059 = vpack.c.b16 %v941, %v940
      %v1060 = vpack.c.b16 %v943, %v942
      %v1061 = vpack.c.b16 %v945, %v944
      %v1062 = vpack.c.b16 %v947, %v946
      %v1063 = vpack.c.b16 %v949, %v948
      %v1064 = vpack.c.b16 %v951, %v950
      %v1065 = vpack.c.b16 %v953, %v952
      %1178 = vmatprep.subr.bf16.mxu0 0
      %1179 = vmatpush1.bf16.msra.mxu0 %v961
      %1180 = vmatprep.subr.bf16.mxu0 0
      %1181 = vmatpush1.bf16.msra.mxu0 %v960
      %1182 = vmatprep.subr.bf16.mxu0 0
      %1183 = vmatpush1.bf16.msra.mxu0 %v959
      %1184 = vmatprep.subr.bf16.mxu0 0
      %1185 = vmatpush1.bf16.msra.mxu0 %v958
      %1186 = vmatprep.subr.bf16.mxu0 0
      %1187 = vmatpush1.bf16.msra.mxu0 %v957
      %1188 = vmatprep.subr.bf16.mxu0 0
      %1189 = vmatpush1.bf16.msra.mxu0 %v956
      %1190 = vmatprep.subr.bf16.mxu0 0
      %1191 = vmatpush1.bf16.msra.mxu0 %v955
      %1192 = vmatprep.subr.bf16.mxu0 0
      %1193 = vmatpush1.bf16.msra.mxu0 %v954
      %1194 = vmatprep.subr.bf16.mxu0 0
      %1195 = vmatpush2.bf16.msra.mxu0 %v969
      %1196 = vmatprep.subr.bf16.mxu0 0
      %1197 = vmatpush2.bf16.msra.mxu0 %v968
      %1198 = vmatprep.subr.bf16.mxu0 0
      %1199 = vmatpush2.bf16.msra.mxu0 %v967
      %1200 = vmatprep.subr.bf16.mxu0 0
      %1201 = vmatpush2.bf16.msra.mxu0 %v966
      %1202 = vmatprep.subr.bf16.mxu0 0
      %1203 = vmatpush2.bf16.msra.mxu0 %v965
      %1204 = vmatprep.subr.bf16.mxu0 0
      %1205 = vmatpush2.bf16.msra.mxu0 %v964
      %1206 = vmatprep.subr.bf16.mxu0 0
      %1207 = vmatpush2.bf16.msra.mxu0 %v963
      %1208 = vmatprep.subr.bf16.mxu0 0
      %1209 = vmatpush2.bf16.msra.mxu0 %v962
      %1210 = vmatprep.mubr.bf16.mxu0 %v479
      %1211 = vmatmul.mubr.bf16.gmra.mxu0 %v478
      %v1212 = vpop.f32.mrf.mxu0
      %v1213 = vadd.f32 0.0, %v1212
      %v1214 = vpop.f32.mrf.mxu0
      %v1215 = vpop.f32.mrf.mxu0
      %v1216 = vpop.f32.mrf.mxu0
      %1217 = vdwg.mxu0
      %1218 = vmatprep.subr.bf16.mxu0 0
      %1219 = vmatpush1.bf16.msra.mxu0 %v977
      %1220 = vmatprep.subr.bf16.mxu0 0
      %1221 = vmatpush1.bf16.msra.mxu0 %v976
      %1222 = vmatprep.subr.bf16.mxu0 0
      %1223 = vmatpush1.bf16.msra.mxu0 %v975
      %1224 = vmatprep.subr.bf16.mxu0 0
      %1225 = vmatpush1.bf16.msra.mxu0 %v974
      %1226 = vmatprep.subr.bf16.mxu0 0
      %1227 = vmatpush1.bf16.msra.mxu0 %v973
      %1228 = vmatprep.subr.bf16.mxu0 0
      %1229 = vmatpush1.bf16.msra.mxu0 %v972
      %1230 = vmatprep.subr.bf16.mxu0 0
      %1231 = vmatpush1.bf16.msra.mxu0 %v971
      %1232 = vmatprep.subr.bf16.mxu0 0
      %1233 = vmatpush1.bf16.msra.mxu0 %v970
      %1234 = vmatprep.subr.bf16.mxu0 0
      %1235 = vmatpush2.bf16.msra.mxu0 %v985
      %1236 = vmatprep.subr.bf16.mxu0 0
      %1237 = vmatpush2.bf16.msra.mxu0 %v984
      %1238 = vmatprep.subr.bf16.mxu0 0
      %1239 = vmatpush2.bf16.msra.mxu0 %v983
      %1240 = vmatprep.subr.bf16.mxu0 0
      %1241 = vmatpush2.bf16.msra.mxu0 %v982
      %1242 = vmatprep.subr.bf16.mxu0 0
      %1243 = vmatpush2.bf16.msra.mxu0 %v981
      %1244 = vmatprep.subr.bf16.mxu0 0
      %1245 = vmatpush2.bf16.msra.mxu0 %v980
      %1246 = vmatprep.subr.bf16.mxu0 0
      %1247 = vmatpush2.bf16.msra.mxu0 %v979
      %1248 = vmatprep.subr.bf16.mxu0 0
      %1249 = vmatpush2.bf16.msra.mxu0 %v978
      %1250 = vmatprep.mubr.bf16.mxu0 %v481
      %1251 = vmatmul.mubr.bf16.gmra.mxu0 %v480
      %v1252 = vpop.f32.mrf.mxu0
      %v1253 = vadd.f32 %v1213, %v1252
      %v1254 = vpop.f32.mrf.mxu0
      %v1255 = vpop.f32.mrf.mxu0
      %v1256 = vpop.f32.mrf.mxu0
      %1257 = vdwg.mxu0
      %1258 = vmatprep.subr.bf16.mxu0 0
      %1259 = vmatpush1.bf16.msra.mxu0 %v993
      %1260 = vmatprep.subr.bf16.mxu0 0
      %1261 = vmatpush1.bf16.msra.mxu0 %v992
      %1262 = vmatprep.subr.bf16.mxu0 0
      %1263 = vmatpush1.bf16.msra.mxu0 %v991
      %1264 = vmatprep.subr.bf16.mxu0 0
      %1265 = vmatpush1.bf16.msra.mxu0 %v990
      %1266 = vmatprep.subr.bf16.mxu0 0
      %1267 = vmatpush1.bf16.msra.mxu0 %v989
      %1268 = vmatprep.subr.bf16.mxu0 0
      %1269 = vmatpush1.bf16.msra.mxu0 %v988
      %1270 = vmatprep.subr.bf16.mxu0 0
      %1271 = vmatpush1.bf16.msra.mxu0 %v987
      %1272 = vmatprep.subr.bf16.mxu0 0
      %1273 = vmatpush1.bf16.msra.mxu0 %v986
      %1274 = vmatprep.subr.bf16.mxu0 0
      %1275 = vmatpush2.bf16.msra.mxu0 %v1001
      %1276 = vmatprep.subr.bf16.mxu0 0
      %1277 = vmatpush2.bf16.msra.mxu0 %v1000
      %1278 = vmatprep.subr.bf16.mxu0 0
      %1279 = vmatpush2.bf16.msra.mxu0 %v999
      %1280 = vmatprep.subr.bf16.mxu0 0
      %1281 = vmatpush2.bf16.msra.mxu0 %v998
      %1282 = vmatprep.subr.bf16.mxu0 0
      %1283 = vmatpush2.bf16.msra.mxu0 %v997
      %1284 = vmatprep.subr.bf16.mxu0 0
      %1285 = vmatpush2.bf16.msra.mxu0 %v996
      %1286 = vmatprep.subr.bf16.mxu0 0
      %1287 = vmatpush2.bf16.msra.mxu0 %v995
      %1288 = vmatprep.subr.bf16.mxu0 0
      %1289 = vmatpush2.bf16.msra.mxu0 %v994
      %1290 = vmatprep.mubr.bf16.mxu0 %v483
      %1291 = vmatmul.mubr.bf16.gmra.mxu0 %v482
      %v1292 = vpop.f32.mrf.mxu0
      %v1293 = vadd.f32 %v1253, %v1292
      %v1294 = vpop.f32.mrf.mxu0
      %v1295 = vpop.f32.mrf.mxu0
      %v1296 = vpop.f32.mrf.mxu0
      %1297 = vdwg.mxu0
      %1298 = vmatprep.subr.bf16.mxu0 0
      %1299 = vmatpush1.bf16.msra.mxu0 %v1009
      %1300 = vmatprep.subr.bf16.mxu0 0
      %1301 = vmatpush1.bf16.msra.mxu0 %v1008
      %1302 = vmatprep.subr.bf16.mxu0 0
      %1303 = vmatpush1.bf16.msra.mxu0 %v1007
      %1304 = vmatprep.subr.bf16.mxu0 0
      %1305 = vmatpush1.bf16.msra.mxu0 %v1006
      %1306 = vmatprep.subr.bf16.mxu0 0
      %1307 = vmatpush1.bf16.msra.mxu0 %v1005
      %1308 = vmatprep.subr.bf16.mxu0 0
      %1309 = vmatpush1.bf16.msra.mxu0 %v1004
      %1310 = vmatprep.subr.bf16.mxu0 0
      %1311 = vmatpush1.bf16.msra.mxu0 %v1003
      %1312 = vmatprep.subr.bf16.mxu0 0
      %1313 = vmatpush1.bf16.msra.mxu0 %v1002
      %1314 = vmatprep.subr.bf16.mxu0 0
      %1315 = vmatpush2.bf16.msra.mxu0 %v1017
      %1316 = vmatprep.subr.bf16.mxu0 0
      %1317 = vmatpush2.bf16.msra.mxu0 %v1016
      %1318 = vmatprep.subr.bf16.mxu0 0
      %1319 = vmatpush2.bf16.msra.mxu0 %v1015
      %1320 = vmatprep.subr.bf16.mxu0 0
      %1321 = vmatpush2.bf16.msra.mxu0 %v1014
      %1322 = vmatprep.subr.bf16.mxu0 0
      %1323 = vmatpush2.bf16.msra.mxu0 %v1013
      %1324 = vmatprep.subr.bf16.mxu0 0
      %1325 = vmatpush2.bf16.msra.mxu0 %v1012
      %1326 = vmatprep.subr.bf16.mxu0 0
      %1327 = vmatpush2.bf16.msra.mxu0 %v1011
      %1328 = vmatprep.subr.bf16.mxu0 0
      %1329 = vmatpush2.bf16.msra.mxu0 %v1010
      %1330 = vmatprep.mubr.bf16.mxu0 %v485
      %1331 = vmatmul.mubr.bf16.gmra.mxu0 %v484
      %v1332 = vpop.f32.mrf.mxu0
      %v1333 = vadd.f32 %v1293, %v1332
      %v1334 = vpop.f32.mrf.mxu0
      %v1335 = vpop.f32.mrf.mxu0
      %v1336 = vpop.f32.mrf.mxu0
      %1337 = vdwg.mxu0
      %1338 = vmatprep.subr.bf16.mxu0 0
      %1339 = vmatpush1.bf16.msra.mxu0 %v1025
      %1340 = vmatprep.subr.bf16.mxu0 0
      %1341 = vmatpush1.bf16.msra.mxu0 %v1024
      %1342 = vmatprep.subr.bf16.mxu0 0
      %1343 = vmatpush1.bf16.msra.mxu0 %v1023
      %1344 = vmatprep.subr.bf16.mxu0 0
      %1345 = vmatpush1.bf16.msra.mxu0 %v1022
      %1346 = vmatprep.subr.bf16.mxu0 0
      %1347 = vmatpush1.bf16.msra.mxu0 %v1021
      %1348 = vmatprep.subr.bf16.mxu0 0
      %1349 = vmatpush1.bf16.msra.mxu0 %v1020
      %1350 = vmatprep.subr.bf16.mxu0 0
      %1351 = vmatpush1.bf16.msra.mxu0 %v1019
      %1352 = vmatprep.subr.bf16.mxu0 0
      %1353 = vmatpush1.bf16.msra.mxu0 %v1018
      %1354 = vmatprep.subr.bf16.mxu0 0
      %1355 = vmatpush2.bf16.msra.mxu0 %v1033
      %1356 = vmatprep.subr.bf16.mxu0 0
      %1357 = vmatpush2.bf16.msra.mxu0 %v1032
      %1358 = vmatprep.subr.bf16.mxu0 0
      %1359 = vmatpush2.bf16.msra.mxu0 %v1031
      %1360 = vmatprep.subr.bf16.mxu0 0
      %1361 = vmatpush2.bf16.msra.mxu0 %v1030
      %1362 = vmatprep.subr.bf16.mxu0 0
      %1363 = vmatpush2.bf16.msra.mxu0 %v1029
      %1364 = vmatprep.subr.bf16.mxu0 0
      %1365 = vmatpush2.bf16.msra.mxu0 %v1028
      %1366 = vmatprep.subr.bf16.mxu0 0
      %1367 = vmatpush2.bf16.msra.mxu0 %v1027
      %1368 = vmatprep.subr.bf16.mxu0 0
      %1369 = vmatpush2.bf16.msra.mxu0 %v1026
      %1370 = vmatprep.mubr.bf16.mxu0 %v487
      %1371 = vmatmul.mubr.bf16.gmra.mxu0 %v486
      %v1372 = vpop.f32.mrf.mxu0
      %v1373 = vadd.f32 %v1333, %v1372
      %v1374 = vpop.f32.mrf.mxu0
      %v1375 = vpop.f32.mrf.mxu0
      %v1376 = vpop.f32.mrf.mxu0
      %1377 = vdwg.mxu0
      %1378 = vmatprep.subr.bf16.mxu0 0
      %1379 = vmatpush1.bf16.msra.mxu0 %v1041
      %1380 = vmatprep.subr.bf16.mxu0 0
      %1381 = vmatpush1.bf16.msra.mxu0 %v1040
      %1382 = vmatprep.subr.bf16.mxu0 0
      %1383 = vmatpush1.bf16.msra.mxu0 %v1039
      %1384 = vmatprep.subr.bf16.mxu0 0
      %1385 = vmatpush1.bf16.msra.mxu0 %v1038
      %1386 = vmatprep.subr.bf16.mxu0 0
      %1387 = vmatpush1.bf16.msra.mxu0 %v1037
      %1388 = vmatprep.subr.bf16.mxu0 0
      %1389 = vmatpush1.bf16.msra.mxu0 %v1036
      %1390 = vmatprep.subr.bf16.mxu0 0
      %1391 = vmatpush1.bf16.msra.mxu0 %v1035
      %1392 = vmatprep.subr.bf16.mxu0 0
      %1393 = vmatpush1.bf16.msra.mxu0 %v1034
      %1394 = vmatprep.subr.bf16.mxu0 0
      %1395 = vmatpush2.bf16.msra.mxu0 %v1049
      %1396 = vmatprep.subr.bf16.mxu0 0
      %1397 = vmatpush2.bf16.msra.mxu0 %v1048
      %1398 = vmatprep.subr.bf16.mxu0 0
      %1399 = vmatpush2.bf16.msra.mxu0 %v1047
      %1400 = vmatprep.subr.bf16.mxu0 0
      %1401 = vmatpush2.bf16.msra.mxu0 %v1046
      %1402 = vmatprep.subr.bf16.mxu0 0
      %1403 = vmatpush2.bf16.msra.mxu0 %v1045
      %1404 = vmatprep.subr.bf16.mxu0 0
      %1405 = vmatpush2.bf16.msra.mxu0 %v1044
      %1406 = vmatprep.subr.bf16.mxu0 0
      %1407 = vmatpush2.bf16.msra.mxu0 %v1043
      %1408 = vmatprep.subr.bf16.mxu0 0
      %1409 = vmatpush2.bf16.msra.mxu0 %v1042
      %1410 = vmatprep.mubr.bf16.mxu0 %v489
      %1411 = vmatmul.mubr.bf16.gmra.mxu0 %v488
      %v1412 = vpop.f32.mrf.mxu0
      %v1413 = vadd.f32 %v1373, %v1412
      %v1414 = vpop.f32.mrf.mxu0
      %v1415 = vpop.f32.mrf.mxu0
      %v1416 = vpop.f32.mrf.mxu0
      %1417 = vdwg.mxu0
      %1418 = vmatprep.subr.bf16.mxu0 0
      %1419 = vmatpush1.bf16.msra.mxu0 %v1057
      %1420 = vmatprep.subr.bf16.mxu0 0
      %1421 = vmatpush1.bf16.msra.mxu0 %v1056
      %1422 = vmatprep.subr.bf16.mxu0 0
      %1423 = vmatpush1.bf16.msra.mxu0 %v1055
      %1424 = vmatprep.subr.bf16.mxu0 0
      %1425 = vmatpush1.bf16.msra.mxu0 %v1054
      %1426 = vmatprep.subr.bf16.mxu0 0
      %1427 = vmatpush1.bf16.msra.mxu0 %v1053
      %1428 = vmatprep.subr.bf16.mxu0 0
      %1429 = vmatpush1.bf16.msra.mxu0 %v1052
      %1430 = vmatprep.subr.bf16.mxu0 0
      %1431 = vmatpush1.bf16.msra.mxu0 %v1051
      %1432 = vmatprep.subr.bf16.mxu0 0
      %1433 = vmatpush1.bf16.msra.mxu0 %v1050
      %1434 = vmatprep.subr.bf16.mxu0 0
      %1435 = vmatpush2.bf16.msra.mxu0 %v1065
      %1436 = vmatprep.subr.bf16.mxu0 0
      %1437 = vmatpush2.bf16.msra.mxu0 %v1064
      %1438 = vmatprep.subr.bf16.mxu0 0
      %1439 = vmatpush2.bf16.msra.mxu0 %v1063
      %1440 = vmatprep.subr.bf16.mxu0 0
      %1441 = vmatpush2.bf16.msra.mxu0 %v1062
      %1442 = vmatprep.subr.bf16.mxu0 0
      %1443 = vmatpush2.bf16.msra.mxu0 %v1061
      %1444 = vmatprep.subr.bf16.mxu0 0
      %1445 = vmatpush2.bf16.msra.mxu0 %v1060
      %1446 = vmatprep.subr.bf16.mxu0 0
      %1447 = vmatpush2.bf16.msra.mxu0 %v1059
      %1448 = vmatprep.subr.bf16.mxu0 0
      %1449 = vmatpush2.bf16.msra.mxu0 %v1058
      %1450 = vmatprep.mubr.bf16.mxu0 %v491
      %1451 = vmatmul.mubr.bf16.gmra.mxu0 %v490
      %v1452 = vpop.f32.mrf.mxu0
      %v1453 = vadd.f32 %v1413, %v1452
      %v1454 = vpop.f32.mrf.mxu0
      %v1455 = vpop.f32.mrf.mxu0
      %v1456 = vpop.f32.mrf.mxu0
      %1457 = vdwg.mxu0
      %v1458 = vadd.f32 %v225, %v1453
      %1459 = vst [vmem:[#allocation2] sm:$0xff] %v1458
      %p1460 = scmp.eq.s32.totalorder %s19, 6
      // Predicated region
      $region37: #{net_forward.6} parent=31 // pred_check
        %p1461 = pneg %p1460
      $region38: #{net_forward.6} parent=31 // pred_check_branch
        %1463 = sbr.rel (%p1461) target = $region40
      $region39: #{net_forward.6} parent=31 // pred_region
        %v1464 = vld [vmem:[#allocation2] sm:$0xff]
        %v1465 = vld [vmem:[%s2] sm:$0x1]
        %v1467 = vlaneseq
        %v1468 = vshrl.u32 %v1467, 7
        %v1469 = vsub.s32 0, %v1468
        %v1470 = vrot.slane %v1465, %v1469
        %v1472 = vadd.f32 %v1464, %v1470
        %v1473 = vmax.f32 %v1472, 0.0
        %v1474 = vpack.c.bf16 %v1473, %v1473
        %1475 = vst [vmem:[%s218] sm:$0xf] %v1474
      $region40: #{net_forward.6} parent=31 // pred_fallthru
        _
      %p1476 = scmp.lt.s32.totalorder %s18, 0
      %s1477 = scalar_select %p1476, %s18, 0
      %s1478 = smul.addr %s1477, 4
      %s1479 = scalar_lea.vmem %s3, %s1478
      // Predicated region
      $region41: #{net_forward.6} parent=31 // pred_check
        %p1480 = pneg %p119
      $region42: #{net_forward.6} parent=31 // pred_check_branch
        %1482 = sbr.rel (%p1480) target = $region44
      $region43: #{net_forward.6} parent=31 // pred_region
        _
      $region44: #{net_forward.6} parent=31 // pred_fallthru
        _
      // Predicated region
      $region45: #{net_forward.6} parent=31 // pred_check
        %p1483 = pneg %p119
      $region46: #{net_forward.6} parent=31 // pred_check_branch
        %1485 = sbr.rel (%p1483) target = $region48
      $region47: #{net_forward.6} parent=31 // pred_region
        %p1486 = scmp.lt.s32.totalorder %s18, 0
        %s1487 = scalar_select %p1486, %s18, 0
        %s1488 = smul.addr %s1487, 4
        %s1489 = scalar_lea.vmem %s3, %s1488
      $region48: #{net_forward.6} parent=31 // pred_fallthru
        _
    $region32: #{net_forward.6} parent=5 // pred_fallthru
      _
    %p1490 = scmp.le.s32.totalorder 2, %s9
    // Predicated region
    $region49: #{net_forward.6} parent=5 // pred_check
      %p1491 = pneg %p1490
    $region50: #{net_forward.6} parent=5 // pred_check_branch
      %1493 = sbr.rel (%p1491) target = $region52
    $region51: #{net_forward.6} parent=5 // pred_region
      %s1494 = ssub.s32 %s9, 2
    $region52: #{net_forward.6} parent=5 // pred_fallthru
      _
  $region6: #{net_forward.6} parent=0 // loop_footer
    %s13 = sadd.s32 1, %s9
  $region7: #{net_forward.6} parent=0 // loop_footer_branch
    %8 = sbr.rel target = $region3
  $region8: #{net_forward.6} parent=0 // loop_exit
    _

</llo_original>
